<compile_context>
chip_gen: v7x
topology: tpu7x:2x2x1
jax: 0.10.0
libtpu: 0.0.40
codegen_flags: <defaults>
</compile_context>

<pallas_src>
import jax
import jax.numpy as jnp
from jax import lax
from jax.experimental import pallas as pl
from jax.experimental.pallas import tpu as pltpu


# head name -> (hidden0, hidden1, hidden2, out)   (matches the PyTorch module)
HEAD_DIMS = {
    "head1": (512, 256, 256, 65),
    "head2": (256, 128, 64, 3),
    "head3": (256, 128, 64, 4),
    "head4": (512, 256, 256, 27),
}

# Two grid "groups": heads with identical layer shapes are fused together.
GROUPS = (("head1", "head4"), ("head2", "head3"))
OUT_BLOCK = 128          # lane-dense output block per group
TB_MAX = 512             # max batch tile (review: >=512 rows to reach roofline)


def _round_up(n, m):
    return ((n + m - 1) // m) * m


def _out_columns():
    """Static map: head name -> (column start in packed output, real width)."""
    col = {}
    for gi, (a, b) in enumerate(GROUPS):
        na, nb = HEAD_DIMS[a][-1], HEAD_DIMS[b][-1]
        assert na + nb <= OUT_BLOCK
        col[a] = (gi * OUT_BLOCK, na)
        col[b] = (gi * OUT_BLOCK + na, nb)
    return col


OUT_COLS = _out_columns()


# ---------------- Pallas kernel ----------------

def _group_forward(xb, w0, b0, w1a, b1a, w1b, b1b,
                   w2a, b2a, w2b, b2b, w3a, w3b, b3):
    """Fused forward of one 2-head group, entirely in VMEM/registers.

    xb : (tb, F) bf16
    w0 : (F, 2*H0) bf16  -- layer-0 weights of both heads concatenated on N
    w1*, w2* : per-head hidden layers (128-multiple padded), bf16
    w3* : per-head final layers, zero-padded to a shared 128-wide column block
    b*  : (1, N) f32
    returns (tb, OUT_BLOCK) f32 packed logits of both heads.
    """
    h0 = jnp.dot(xb, w0[...], preferred_element_type=jnp.float32) + b0[...]
    h0 = jnp.maximum(h0, 0.0).astype(jnp.bfloat16)
    s = w0.shape[1] // 2          # 128-aligned per-head split (512 or 256)

    def _sub(h, w1, b1, w2, b2, w3):
        h = jnp.dot(h, w1[...], preferred_element_type=jnp.float32) + b1[...]
        h = jnp.maximum(h, 0.0).astype(jnp.bfloat16)
        h = jnp.dot(h, w2[...], preferred_element_type=jnp.float32) + b2[...]
        h = jnp.maximum(h, 0.0).astype(jnp.bfloat16)
        return jnp.dot(h, w3[...], preferred_element_type=jnp.float32)

    return (_sub(h0[:, :s], w1a, b1a, w2a, b2a, w3a)
            + _sub(h0[:, s:], w1b, b1b, w2b, b2b, w3b)
            + b3[...])


def _classifier_kernel(x_ref, *refs):
    """grid = (group g, batch tile i).  26 resident param refs + 1 output."""
    o_ref = refs[-1]
    g0 = refs[:13]
    g1 = refs[13:26]

    xb = x_ref[...].astype(jnp.bfloat16)
    g = pl.program_id(0)

    @pl.when(g == 0)
    def _():
        o_ref[...] = _group_forward(xb, *g0)

    @pl.when(g == 1)
    def _():
        o_ref[...] = _group_forward(xb, *g1)


# ---------------- wrapper ----------------

def classifier_forward(x, packed):
    """Forward of the PyTorch Classifier: returns (y1, y2, y3, y4)."""
    B, F = x.shape

    # Adaptive batch tiling: largest tile <= TB_MAX that avoids worst-case
    # padding (e.g. B=260 -> one 264-row tile, not two 256-row tiles).
    nt = -(-B // TB_MAX)
    tb = _round_up(-(-B // nt), 8)
    Bp = nt * tb
    xp = jnp.pad(x, ((0, Bp - B), (0, 0))) if Bp != B else x

    n_groups = len(GROUPS)
    out_w = n_groups * OUT_BLOCK

    # Advisory cost estimate: x read once per group sweep, weights read once.
    flops = 0
    bytes_acc = n_groups * Bp * F * 4 + Bp * out_w * 4
    for p in packed:
        bytes_acc += p.size * p.dtype.itemsize
        if p.shape[0] > 1:                       # weight panel (biases are (1,N))
            flops += 2 * Bp * p.shape[0] * p.shape[1]

    param_specs = [pl.BlockSpec(p.shape, lambda g, i: (0, 0)) for p in packed]

    out = pl.pallas_call(
        _classifier_kernel,
        out_shape=jax.ShapeDtypeStruct((Bp, out_w), jnp.float32),
        grid=(n_groups, Bp // tb),
        in_specs=[pl.BlockSpec((tb, F), lambda g, i: (i, 0))] + param_specs,
        out_specs=pl.BlockSpec((tb, OUT_BLOCK), lambda g, i: (i, g)),
        compiler_params=pltpu.CompilerParams(
            dimension_semantics=("parallel", "parallel"),
            vmem_limit_bytes=32 * 1024 * 1024),
        cost_estimate=pl.CostEstimate(
            flops=flops, transcendentals=0, bytes_accessed=bytes_acc),
    )(xp, *packed)

    outs = []
    for name in HEAD_DIMS:
        s, w = OUT_COLS[name]
        outs.append(out[:B, s:s + w])
    return tuple(outs)


# ---------------- parameter construction / packing ----------------

def init_head_f32(key, in_features, dims):
    """PyTorch-Linear-style init: U(-1/sqrt(fan_in), 1/sqrt(fan_in)).
    Weights stored (in, out) (already transposed vs torch)."""
    layers = []
    cin = in_features
    for d in dims:
        key, wk, bk = jax.random.split(key, 3)
        bound = 1.0 / (cin ** 0.5)
        w = jax.random.uniform(wk, (cin, d), jnp.float32, -bound, bound)
        b = jax.random.uniform(bk, (d,), jnp.float32, -bound, bound)
        layers.append((w, b))
        cin = d
    return layers


def _pack_group(head_a, head_b):
    """Pack two same-structure heads into the 13 arrays _group_forward expects."""
    arrs = []

    # layer 0: concatenate both heads along N (one wide MXU panel).
    wa0, ba0 = head_a[0]
    wb0, bb0 = head_b[0]
    assert wa0.shape[1] == wb0.shape[1] and wa0.shape[1] % 128 == 0
    arrs.append(jnp.concatenate([wa0, wb0], axis=1).astype(jnp.bfloat16))
    arrs.append(jnp.concatenate([ba0, bb0]).reshape(1, -1).astype(jnp.float32))

    # layers 1 & 2: per head, hidden dims zero-padded up to 128-multiples
    # (zero weight cols + zero bias -> ReLU keeps padded units at exactly 0).
    for li in (1, 2):
        for head in (head_a, head_b):
            w, b = head[li]
            ip = _round_up(w.shape[0], 128)
            op = _round_up(w.shape[1], 128)
            w = jnp.pad(w, ((0, ip - w.shape[0]), (0, op - w.shape[1])))
            b = jnp.pad(b, ((0, op - b.shape[0]),))
            arrs.append(w.astype(jnp.bfloat16))
            arrs.append(b.reshape(1, -1).astype(jnp.float32))

    # layer 3: both heads' logits packed into one shared 128-wide column block
    # (head_a -> cols [0, na), head_b -> cols [na, na+nb)); rows padded with
    # zeros to match the padded hidden width.
    wa3, ba3 = head_a[3]
    wb3, bb3 = head_b[3]
    na, nb = wa3.shape[1], wb3.shape[1]
    op = _round_up(na + nb, 128)
    ia = _round_up(wa3.shape[0], 128)
    ib = _round_up(wb3.shape[0], 128)
    w3a = jnp.zeros((ia, op), jnp.float32).at[:wa3.shape[0], :na].set(wa3)
    w3b = jnp.zeros((ib, op), jnp.float32).at[:wb3.shape[0], na:na + nb].set(wb3)
    b3 = jnp.zeros((op,), jnp.float32).at[:na].set(ba3).at[na:na + nb].set(bb3)
    arrs += [w3a.astype(jnp.bfloat16), w3b.astype(jnp.bfloat16),
             b3.reshape(1, -1).astype(jnp.float32)]
    return arrs


def pack_classifier(params_f32):
    packed = []
    for (a, b) in GROUPS:
        packed += _pack_group(params_f32[a], params_f32[b])
    assert len(packed) == 26
    return tuple(packed)


# ---------------- pure-JAX f32 reference ----------------

def classifier_ref(x, params_f32):
    outs = []
    for name in HEAD_DIMS:
        h = x
        layers = params_f32[name]
        for i, (w, b) in enumerate(layers):
            h = jnp.dot(h, w, precision=lax.Precision.HIGHEST) + b
            if i < len(layers) - 1:
                h = jnp.maximum(h, 0.0)
        outs.append(h)
    return tuple(outs)


if __name__ == "__main__":
    key = jax.random.PRNGKey(0)
    kx, kp = jax.random.split(key)

    B, F = 2, 128  # batch=2, input_features=128
    x = jax.random.normal(kx, (B, F), jnp.float32)

    params_f32 = {}
    head_keys = jax.random.split(kp, len(HEAD_DIMS))
    for hk, (name, dims) in zip(head_keys, HEAD_DIMS.items()):
        params_f32[name] = init_head_f32(hk, F, dims)
    packed = pack_classifier(params_f32)

    fwd = jax.jit(classifier_forward)
    outs = jax.block_until_ready(fwd(x, packed))

    refs = classifier_ref(x, params_f32)
    for (name, dims), o, r in zip(HEAD_DIMS.items(), outs, refs):
        assert o.shape == (B, dims[-1]), (name, o.shape)
        rel = float(jnp.max(jnp.abs(o - r)) / (jnp.max(jnp.abs(r)) + 1e-6))
        # bf16 MXU path vs f32-HIGHEST reference; 4 layers deep.
        assert rel < 3e-2, (name, rel)

    print("KERNEL_OK")
</pallas_src>

<mosaic_0001>
module attributes {stable_mosaic.version = 11 : i64} {
  func.func @_classifier_kernel(%arg0: i32, %arg1: i32, %arg2: memref<8x128xf32, #tpu.memory_space<vmem>>, %arg3: memref<128x1024xbf16, #tpu.memory_space<vmem>>, %arg4: memref<1x1024xf32, #tpu.memory_space<vmem>>, %arg5: memref<512x256xbf16, #tpu.memory_space<vmem>>, %arg6: memref<1x256xf32, #tpu.memory_space<vmem>>, %arg7: memref<512x256xbf16, #tpu.memory_space<vmem>>, %arg8: memref<1x256xf32, #tpu.memory_space<vmem>>, %arg9: memref<256x256xbf16, #tpu.memory_space<vmem>>, %arg10: memref<1x256xf32, #tpu.memory_space<vmem>>, %arg11: memref<256x256xbf16, #tpu.memory_space<vmem>>, %arg12: memref<1x256xf32, #tpu.memory_space<vmem>>, %arg13: memref<256x128xbf16, #tpu.memory_space<vmem>>, %arg14: memref<256x128xbf16, #tpu.memory_space<vmem>>, %arg15: memref<1x128xf32, #tpu.memory_space<vmem>>, %arg16: memref<128x512xbf16, #tpu.memory_space<vmem>>, %arg17: memref<1x512xf32, #tpu.memory_space<vmem>>, %arg18: memref<256x128xbf16, #tpu.memory_space<vmem>>, %arg19: memref<1x128xf32, #tpu.memory_space<vmem>>, %arg20: memref<256x128xbf16, #tpu.memory_space<vmem>>, %arg21: memref<1x128xf32, #tpu.memory_space<vmem>>, %arg22: memref<128x128xbf16, #tpu.memory_space<vmem>>, %arg23: memref<1x128xf32, #tpu.memory_space<vmem>>, %arg24: memref<128x128xbf16, #tpu.memory_space<vmem>>, %arg25: memref<1x128xf32, #tpu.memory_space<vmem>>, %arg26: memref<128x128xbf16, #tpu.memory_space<vmem>>, %arg27: memref<128x128xbf16, #tpu.memory_space<vmem>>, %arg28: memref<1x128xf32, #tpu.memory_space<vmem>>, %arg29: memref<8x128xf32, #tpu.memory_space<vmem>>) attributes {dimension_semantics = [#tpu.dimension_semantics<parallel>, #tpu.dimension_semantics<parallel>], iteration_bounds = array<i64: 2, 1>, scalar_prefetch = 0 : i64, scratch_operands = 0 : i64, tpu.core_type = #tpu.core_type<tc>, window_params = [{transform_indices = @transform_0, window_bounds = array<i64: 8, 128>}, {pipeline_mode = #tpu.pipeline_mode<synchronous>, transform_indices = @transform_1, window_bounds = array<i64: 128, 1024>}, {pipeline_mode = #tpu.pipeline_mode<synchronous>, transform_indices = @transform_2, window_bounds = array<i64: 1, 1024>}, {pipeline_mode = #tpu.pipeline_mode<synchronous>, transform_indices = @transform_3, window_bounds = array<i64: 512, 256>}, {pipeline_mode = #tpu.pipeline_mode<synchronous>, transform_indices = @transform_4, window_bounds = array<i64: 1, 256>}, {pipeline_mode = #tpu.pipeline_mode<synchronous>, transform_indices = @transform_5, window_bounds = array<i64: 512, 256>}, {pipeline_mode = #tpu.pipeline_mode<synchronous>, transform_indices = @transform_6, window_bounds = array<i64: 1, 256>}, {pipeline_mode = #tpu.pipeline_mode<synchronous>, transform_indices = @transform_7, window_bounds = array<i64: 256, 256>}, {pipeline_mode = #tpu.pipeline_mode<synchronous>, transform_indices = @transform_8, window_bounds = array<i64: 1, 256>}, {pipeline_mode = #tpu.pipeline_mode<synchronous>, transform_indices = @transform_9, window_bounds = array<i64: 256, 256>}, {pipeline_mode = #tpu.pipeline_mode<synchronous>, transform_indices = @transform_10, window_bounds = array<i64: 1, 256>}, {pipeline_mode = #tpu.pipeline_mode<synchronous>, transform_indices = @transform_11, window_bounds = array<i64: 256, 128>}, {pipeline_mode = #tpu.pipeline_mode<synchronous>, transform_indices = @transform_12, window_bounds = array<i64: 256, 128>}, {pipeline_mode = #tpu.pipeline_mode<synchronous>, transform_indices = @transform_13, window_bounds = array<i64: 1, 128>}, {pipeline_mode = #tpu.pipeline_mode<synchronous>, transform_indices = @transform_14, window_bounds = array<i64: 128, 512>}, {pipeline_mode = #tpu.pipeline_mode<synchronous>, transform_indices = @transform_15, window_bounds = array<i64: 1, 512>}, {pipeline_mode = #tpu.pipeline_mode<synchronous>, transform_indices = @transform_16, window_bounds = array<i64: 256, 128>}, {pipeline_mode = #tpu.pipeline_mode<synchronous>, transform_indices = @transform_17, window_bounds = array<i64: 1, 128>}, {pipeline_mode = #tpu.pipeline_mode<synchronous>, transform_indices = @transform_18, window_bounds = array<i64: 256, 128>}, {pipeline_mode = #tpu.pipeline_mode<synchronous>, transform_indices = @transform_19, window_bounds = array<i64: 1, 128>}, {pipeline_mode = #tpu.pipeline_mode<synchronous>, transform_indices = @transform_20, window_bounds = array<i64: 128, 128>}, {pipeline_mode = #tpu.pipeline_mode<synchronous>, transform_indices = @transform_21, window_bounds = array<i64: 1, 128>}, {pipeline_mode = #tpu.pipeline_mode<synchronous>, transform_indices = @transform_22, window_bounds = array<i64: 128, 128>}, {pipeline_mode = #tpu.pipeline_mode<synchronous>, transform_indices = @transform_23, window_bounds = array<i64: 1, 128>}, {pipeline_mode = #tpu.pipeline_mode<synchronous>, transform_indices = @transform_24, window_bounds = array<i64: 128, 128>}, {pipeline_mode = #tpu.pipeline_mode<synchronous>, transform_indices = @transform_25, window_bounds = array<i64: 128, 128>}, {pipeline_mode = #tpu.pipeline_mode<synchronous>, transform_indices = @transform_26, window_bounds = array<i64: 1, 128>}, {transform_indices = @transform_27, window_bounds = array<i64: 8, 128>}]} {
    %c0 = arith.constant 0 : index
    %c0_0 = arith.constant 0 : index
    %0 = vector.load %arg2[%c0, %c0_0] : memref<8x128xf32, #tpu.memory_space<vmem>>, vector<8x128xf32>
    %1 = arith.truncf %0 : vector<8x128xf32> to vector<8x128xbf16>
    %c0_i32 = arith.constant 0 : i32
    %2 = arith.cmpi eq, %arg0, %c0_i32 : i32
    %3 = arith.extui %2 : i1 to i32
    %c0_i32_1 = arith.constant 0 : i32
    %4 = arith.cmpi ne, %3, %c0_i32_1 : i32
    scf.if %4 {
      %c0_3 = arith.constant 0 : index
      %c0_4 = arith.constant 0 : index
      %8 = vector.load %arg3[%c0_3, %c0_4] : memref<128x1024xbf16, #tpu.memory_space<vmem>>, vector<128x1024xbf16>
      %cst = arith.constant dense<0.000000e+00> : vector<8x1024xf32>
      %9 = tpu.matmul %1, %8, %cst {dimension_numbers = #tpu.dot_dimension_numbers<[1], [0], [0], [1], [0, 0, 1, 1], [], []>} : vector<8x128xbf16>, vector<128x1024xbf16>, vector<8x1024xf32> -> vector<8x1024xf32>
      %c0_5 = arith.constant 0 : index
      %c0_6 = arith.constant 0 : index
      %10 = vector.load %arg4[%c0_5, %c0_6] : memref<1x1024xf32, #tpu.memory_space<vmem>>, vector<1x1024xf32>
      %11 = vector.broadcast %10 : vector<1x1024xf32> to vector<8x1024xf32>
      %12 = arith.addf %9, %11 : vector<8x1024xf32>
      %cst_7 = arith.constant 0.000000e+00 : f32
      %13 = vector.broadcast %cst_7 : f32 to vector<8x1024xf32>
      %14 = arith.maximumf %12, %13 : vector<8x1024xf32>
      %15 = arith.truncf %14 : vector<8x1024xf32> to vector<8x1024xbf16>
      %16 = vector.extract_strided_slice %15 {offsets = [0, 0], sizes = [8, 512], strides = [1, 1]} : vector<8x1024xbf16> to vector<8x512xbf16>
      %c0_8 = arith.constant 0 : index
      %c0_9 = arith.constant 0 : index
      %17 = vector.load %arg5[%c0_8, %c0_9] : memref<512x256xbf16, #tpu.memory_space<vmem>>, vector<512x256xbf16>
      %cst_10 = arith.constant dense<0.000000e+00> : vector<8x256xf32>
      %18 = tpu.matmul %16, %17, %cst_10 {dimension_numbers = #tpu.dot_dimension_numbers<[1], [0], [0], [1], [0, 0, 1, 1], [], []>} : vector<8x512xbf16>, vector<512x256xbf16>, vector<8x256xf32> -> vector<8x256xf32>
      %c0_11 = arith.constant 0 : index
      %c0_12 = arith.constant 0 : index
      %19 = vector.load %arg6[%c0_11, %c0_12] : memref<1x256xf32, #tpu.memory_space<vmem>>, vector<1x256xf32>
      %20 = vector.broadcast %19 : vector<1x256xf32> to vector<8x256xf32>
      %21 = arith.addf %18, %20 : vector<8x256xf32>
      %cst_13 = arith.constant 0.000000e+00 : f32
      %22 = vector.broadcast %cst_13 : f32 to vector<8x256xf32>
      %23 = arith.maximumf %21, %22 : vector<8x256xf32>
      %24 = arith.truncf %23 : vector<8x256xf32> to vector<8x256xbf16>
      %c0_14 = arith.constant 0 : index
      %c0_15 = arith.constant 0 : index
      %25 = vector.load %arg9[%c0_14, %c0_15] : memref<256x256xbf16, #tpu.memory_space<vmem>>, vector<256x256xbf16>
      %cst_16 = arith.constant dense<0.000000e+00> : vector<8x256xf32>
      %26 = tpu.matmul %24, %25, %cst_16 {dimension_numbers = #tpu.dot_dimension_numbers<[1], [0], [0], [1], [0, 0, 1, 1], [], []>} : vector<8x256xbf16>, vector<256x256xbf16>, vector<8x256xf32> -> vector<8x256xf32>
      %c0_17 = arith.constant 0 : index
      %c0_18 = arith.constant 0 : index
      %27 = vector.load %arg10[%c0_17, %c0_18] : memref<1x256xf32, #tpu.memory_space<vmem>>, vector<1x256xf32>
      %28 = vector.broadcast %27 : vector<1x256xf32> to vector<8x256xf32>
      %29 = arith.addf %26, %28 : vector<8x256xf32>
      %cst_19 = arith.constant 0.000000e+00 : f32
      %30 = vector.broadcast %cst_19 : f32 to vector<8x256xf32>
      %31 = arith.maximumf %29, %30 : vector<8x256xf32>
      %32 = arith.truncf %31 : vector<8x256xf32> to vector<8x256xbf16>
      %c0_20 = arith.constant 0 : index
      %c0_21 = arith.constant 0 : index
      %33 = vector.load %arg13[%c0_20, %c0_21] : memref<256x128xbf16, #tpu.memory_space<vmem>>, vector<256x128xbf16>
      %cst_22 = arith.constant dense<0.000000e+00> : vector<8x128xf32>
      %34 = tpu.matmul %32, %33, %cst_22 {dimension_numbers = #tpu.dot_dimension_numbers<[1], [0], [0], [1], [0, 0, 1, 1], [], []>} : vector<8x256xbf16>, vector<256x128xbf16>, vector<8x128xf32> -> vector<8x128xf32>
      %35 = vector.extract_strided_slice %15 {offsets = [0, 512], sizes = [8, 512], strides = [1, 1]} : vector<8x1024xbf16> to vector<8x512xbf16>
      %c0_23 = arith.constant 0 : index
      %c0_24 = arith.constant 0 : index
      %36 = vector.load %arg7[%c0_23, %c0_24] : memref<512x256xbf16, #tpu.memory_space<vmem>>, vector<512x256xbf16>
      %cst_25 = arith.constant dense<0.000000e+00> : vector<8x256xf32>
      %37 = tpu.matmul %35, %36, %cst_25 {dimension_numbers = #tpu.dot_dimension_numbers<[1], [0], [0], [1], [0, 0, 1, 1], [], []>} : vector<8x512xbf16>, vector<512x256xbf16>, vector<8x256xf32> -> vector<8x256xf32>
      %c0_26 = arith.constant 0 : index
      %c0_27 = arith.constant 0 : index
      %38 = vector.load %arg8[%c0_26, %c0_27] : memref<1x256xf32, #tpu.memory_space<vmem>>, vector<1x256xf32>
      %39 = vector.broadcast %38 : vector<1x256xf32> to vector<8x256xf32>
      %40 = arith.addf %37, %39 : vector<8x256xf32>
      %cst_28 = arith.constant 0.000000e+00 : f32
      %41 = vector.broadcast %cst_28 : f32 to vector<8x256xf32>
      %42 = arith.maximumf %40, %41 : vector<8x256xf32>
      %43 = arith.truncf %42 : vector<8x256xf32> to vector<8x256xbf16>
      %c0_29 = arith.constant 0 : index
      %c0_30 = arith.constant 0 : index
      %44 = vector.load %arg11[%c0_29, %c0_30] : memref<256x256xbf16, #tpu.memory_space<vmem>>, vector<256x256xbf16>
      %cst_31 = arith.constant dense<0.000000e+00> : vector<8x256xf32>
      %45 = tpu.matmul %43, %44, %cst_31 {dimension_numbers = #tpu.dot_dimension_numbers<[1], [0], [0], [1], [0, 0, 1, 1], [], []>} : vector<8x256xbf16>, vector<256x256xbf16>, vector<8x256xf32> -> vector<8x256xf32>
      %c0_32 = arith.constant 0 : index
      %c0_33 = arith.constant 0 : index
      %46 = vector.load %arg12[%c0_32, %c0_33] : memref<1x256xf32, #tpu.memory_space<vmem>>, vector<1x256xf32>
      %47 = vector.broadcast %46 : vector<1x256xf32> to vector<8x256xf32>
      %48 = arith.addf %45, %47 : vector<8x256xf32>
      %cst_34 = arith.constant 0.000000e+00 : f32
      %49 = vector.broadcast %cst_34 : f32 to vector<8x256xf32>
      %50 = arith.maximumf %48, %49 : vector<8x256xf32>
      %51 = arith.truncf %50 : vector<8x256xf32> to vector<8x256xbf16>
      %c0_35 = arith.constant 0 : index
      %c0_36 = arith.constant 0 : index
      %52 = vector.load %arg14[%c0_35, %c0_36] : memref<256x128xbf16, #tpu.memory_space<vmem>>, vector<256x128xbf16>
      %cst_37 = arith.constant dense<0.000000e+00> : vector<8x128xf32>
      %53 = tpu.matmul %51, %52, %cst_37 {dimension_numbers = #tpu.dot_dimension_numbers<[1], [0], [0], [1], [0, 0, 1, 1], [], []>} : vector<8x256xbf16>, vector<256x128xbf16>, vector<8x128xf32> -> vector<8x128xf32>
      %54 = arith.addf %34, %53 : vector<8x128xf32>
      %c0_38 = arith.constant 0 : index
      %c0_39 = arith.constant 0 : index
      %55 = vector.load %arg15[%c0_38, %c0_39] : memref<1x128xf32, #tpu.memory_space<vmem>>, vector<1x128xf32>
      %56 = vector.broadcast %55 : vector<1x128xf32> to vector<8x128xf32>
      %57 = arith.addf %54, %56 : vector<8x128xf32>
      %c0_40 = arith.constant 0 : index
      %c0_41 = arith.constant 0 : index
      %58 = vector.load %arg29[%c0_40, %c0_41] : memref<8x128xf32, #tpu.memory_space<vmem>>, vector<8x128xf32>
      tpu.vector_store %arg29[%c0_40, %c0_41], %57 {strides = array<i32>} : memref<8x128xf32, #tpu.memory_space<vmem>>, vector<8x128xf32>,
    } else {
    }
    %c1_i32 = arith.constant 1 : i32
    %5 = arith.cmpi eq, %arg0, %c1_i32 : i32
    %6 = arith.extui %5 : i1 to i32
    %c0_i32_2 = arith.constant 0 : i32
    %7 = arith.cmpi ne, %6, %c0_i32_2 : i32
    scf.if %7 {
      %c0_3 = arith.constant 0 : index
      %c0_4 = arith.constant 0 : index
      %8 = vector.load %arg16[%c0_3, %c0_4] : memref<128x512xbf16, #tpu.memory_space<vmem>>, vector<128x512xbf16>
      %cst = arith.constant dense<0.000000e+00> : vector<8x512xf32>
      %9 = tpu.matmul %1, %8, %cst {dimension_numbers = #tpu.dot_dimension_numbers<[1], [0], [0], [1], [0, 0, 1, 1], [], []>} : vector<8x128xbf16>, vector<128x512xbf16>, vector<8x512xf32> -> vector<8x512xf32>
      %c0_5 = arith.constant 0 : index
      %c0_6 = arith.constant 0 : index
      %10 = vector.load %arg17[%c0_5, %c0_6] : memref<1x512xf32, #tpu.memory_space<vmem>>, vector<1x512xf32>
      %11 = vector.broadcast %10 : vector<1x512xf32> to vector<8x512xf32>
      %12 = arith.addf %9, %11 : vector<8x512xf32>
      %cst_7 = arith.constant 0.000000e+00 : f32
      %13 = vector.broadcast %cst_7 : f32 to vector<8x512xf32>
      %14 = arith.maximumf %12, %13 : vector<8x512xf32>
      %15 = arith.truncf %14 : vector<8x512xf32> to vector<8x512xbf16>
      %16 = vector.extract_strided_slice %15 {offsets = [0, 0], sizes = [8, 256], strides = [1, 1]} : vector<8x512xbf16> to vector<8x256xbf16>
      %c0_8 = arith.constant 0 : index
      %c0_9 = arith.constant 0 : index
      %17 = vector.load %arg18[%c0_8, %c0_9] : memref<256x128xbf16, #tpu.memory_space<vmem>>, vector<256x128xbf16>
      %cst_10 = arith.constant dense<0.000000e+00> : vector<8x128xf32>
      %18 = tpu.matmul %16, %17, %cst_10 {dimension_numbers = #tpu.dot_dimension_numbers<[1], [0], [0], [1], [0, 0, 1, 1], [], []>} : vector<8x256xbf16>, vector<256x128xbf16>, vector<8x128xf32> -> vector<8x128xf32>
      %c0_11 = arith.constant 0 : index
      %c0_12 = arith.constant 0 : index
      %19 = vector.load %arg19[%c0_11, %c0_12] : memref<1x128xf32, #tpu.memory_space<vmem>>, vector<1x128xf32>
      %20 = vector.broadcast %19 : vector<1x128xf32> to vector<8x128xf32>
      %21 = arith.addf %18, %20 : vector<8x128xf32>
      %cst_13 = arith.constant 0.000000e+00 : f32
      %22 = vector.broadcast %cst_13 : f32 to vector<8x128xf32>
      %23 = arith.maximumf %21, %22 : vector<8x128xf32>
      %24 = arith.truncf %23 : vector<8x128xf32> to vector<8x128xbf16>
      %c0_14 = arith.constant 0 : index
      %c0_15 = arith.constant 0 : index
      %25 = vector.load %arg22[%c0_14, %c0_15] : memref<128x128xbf16, #tpu.memory_space<vmem>>, vector<128x128xbf16>
      %cst_16 = arith.constant dense<0.000000e+00> : vector<8x128xf32>
      %26 = tpu.matmul %24, %25, %cst_16 {dimension_numbers = #tpu.dot_dimension_numbers<[1], [0], [0], [1], [0, 0, 1, 1], [], []>} : vector<8x128xbf16>, vector<128x128xbf16>, vector<8x128xf32> -> vector<8x128xf32>
      %c0_17 = arith.constant 0 : index
      %c0_18 = arith.constant 0 : index
      %27 = vector.load %arg23[%c0_17, %c0_18] : memref<1x128xf32, #tpu.memory_space<vmem>>, vector<1x128xf32>
      %28 = vector.broadcast %27 : vector<1x128xf32> to vector<8x128xf32>
      %29 = arith.addf %26, %28 : vector<8x128xf32>
      %cst_19 = arith.constant 0.000000e+00 : f32
      %30 = vector.broadcast %cst_19 : f32 to vector<8x128xf32>
      %31 = arith.maximumf %29, %30 : vector<8x128xf32>
      %32 = arith.truncf %31 : vector<8x128xf32> to vector<8x128xbf16>
      %c0_20 = arith.constant 0 : index
      %c0_21 = arith.constant 0 : index
      %33 = vector.load %arg26[%c0_20, %c0_21] : memref<128x128xbf16, #tpu.memory_space<vmem>>, vector<128x128xbf16>
      %cst_22 = arith.constant dense<0.000000e+00> : vector<8x128xf32>
      %34 = tpu.matmul %32, %33, %cst_22 {dimension_numbers = #tpu.dot_dimension_numbers<[1], [0], [0], [1], [0, 0, 1, 1], [], []>} : vector<8x128xbf16>, vector<128x128xbf16>, vector<8x128xf32> -> vector<8x128xf32>
      %35 = vector.extract_strided_slice %15 {offsets = [0, 256], sizes = [8, 256], strides = [1, 1]} : vector<8x512xbf16> to vector<8x256xbf16>
      %c0_23 = arith.constant 0 : index
      %c0_24 = arith.constant 0 : index
      %36 = vector.load %arg20[%c0_23, %c0_24] : memref<256x128xbf16, #tpu.memory_space<vmem>>, vector<256x128xbf16>
      %cst_25 = arith.constant dense<0.000000e+00> : vector<8x128xf32>
      %37 = tpu.matmul %35, %36, %cst_25 {dimension_numbers = #tpu.dot_dimension_numbers<[1], [0], [0], [1], [0, 0, 1, 1], [], []>} : vector<8x256xbf16>, vector<256x128xbf16>, vector<8x128xf32> -> vector<8x128xf32>
      %c0_26 = arith.constant 0 : index
      %c0_27 = arith.constant 0 : index
      %38 = vector.load %arg21[%c0_26, %c0_27] : memref<1x128xf32, #tpu.memory_space<vmem>>, vector<1x128xf32>
      %39 = vector.broadcast %38 : vector<1x128xf32> to vector<8x128xf32>
      %40 = arith.addf %37, %39 : vector<8x128xf32>
      %cst_28 = arith.constant 0.000000e+00 : f32
      %41 = vector.broadcast %cst_28 : f32 to vector<8x128xf32>
      %42 = arith.maximumf %40, %41 : vector<8x128xf32>
      %43 = arith.truncf %42 : vector<8x128xf32> to vector<8x128xbf16>
      %c0_29 = arith.constant 0 : index
      %c0_30 = arith.constant 0 : index
      %44 = vector.load %arg24[%c0_29, %c0_30] : memref<128x128xbf16, #tpu.memory_space<vmem>>, vector<128x128xbf16>
      %cst_31 = arith.constant dense<0.000000e+00> : vector<8x128xf32>
      %45 = tpu.matmul %43, %44, %cst_31 {dimension_numbers = #tpu.dot_dimension_numbers<[1], [0], [0], [1], [0, 0, 1, 1], [], []>} : vector<8x128xbf16>, vector<128x128xbf16>, vector<8x128xf32> -> vector<8x128xf32>
      %c0_32 = arith.constant 0 : index
      %c0_33 = arith.constant 0 : index
      %46 = vector.load %arg25[%c0_32, %c0_33] : memref<1x128xf32, #tpu.memory_space<vmem>>, vector<1x128xf32>
      %47 = vector.broadcast %46 : vector<1x128xf32> to vector<8x128xf32>
      %48 = arith.addf %45, %47 : vector<8x128xf32>
      %cst_34 = arith.constant 0.000000e+00 : f32
      %49 = vector.broadcast %cst_34 : f32 to vector<8x128xf32>
      %50 = arith.maximumf %48, %49 : vector<8x128xf32>
      %51 = arith.truncf %50 : vector<8x128xf32> to vector<8x128xbf16>
      %c0_35 = arith.constant 0 : index
      %c0_36 = arith.constant 0 : index
      %52 = vector.load %arg27[%c0_35, %c0_36] : memref<128x128xbf16, #tpu.memory_space<vmem>>, vector<128x128xbf16>
      %cst_37 = arith.constant dense<0.000000e+00> : vector<8x128xf32>
      %53 = tpu.matmul %51, %52, %cst_37 {dimension_numbers = #tpu.dot_dimension_numbers<[1], [0], [0], [1], [0, 0, 1, 1], [], []>} : vector<8x128xbf16>, vector<128x128xbf16>, vector<8x128xf32> -> vector<8x128xf32>
      %54 = arith.addf %34, %53 : vector<8x128xf32>
      %c0_38 = arith.constant 0 : index
      %c0_39 = arith.constant 0 : index
      %55 = vector.load %arg28[%c0_38, %c0_39] : memref<1x128xf32, #tpu.memory_space<vmem>>, vector<1x128xf32>
      %56 = vector.broadcast %55 : vector<1x128xf32> to vector<8x128xf32>
      %57 = arith.addf %54, %56 : vector<8x128xf32>
      %c0_40 = arith.constant 0 : index
      %c0_41 = arith.constant 0 : index
      %58 = vector.load %arg29[%c0_40, %c0_41] : memref<8x128xf32, #tpu.memory_space<vmem>>, vector<8x128xf32>
      tpu.vector_store %arg29[%c0_40, %c0_41], %57 {strides = array<i32>} : memref<8x128xf32, #tpu.memory_space<vmem>>, vector<8x128xf32>,
    } else {
    }
    return
  }
  func.func @transform_0(%arg0: i32, %arg1: i32) -> (i32, i32) {
    %c0_i32 = arith.constant 0 : i32
    %c0_i32_0 = arith.constant 0 : i32
    return %arg1, %c0_i32 : i32, i32
  }
  func.func @transform_1(%arg0: i32, %arg1: i32) -> (i32, i32) {
    %c0_i32 = arith.constant 0 : i32
    %c0_i32_0 = arith.constant 0 : i32
    %c0_i32_1 = arith.constant 0 : i32
    return %c0_i32, %c0_i32_0 : i32, i32
  }
  func.func @transform_2(%arg0: i32, %arg1: i32) -> (i32, i32) {
    %c0_i32 = arith.constant 0 : i32
    %c0_i32_0 = arith.constant 0 : i32
    %c0_i32_1 = arith.constant 0 : i32
    return %c0_i32, %c0_i32_0 : i32, i32
  }
  func.func @transform_3(%arg0: i32, %arg1: i32) -> (i32, i32) {
    %c0_i32 = arith.constant 0 : i32
    %c0_i32_0 = arith.constant 0 : i32
    %c0_i32_1 = arith.constant 0 : i32
    return %c0_i32, %c0_i32_0 : i32, i32
  }
  func.func @transform_4(%arg0: i32, %arg1: i32) -> (i32, i32) {
    %c0_i32 = arith.constant 0 : i32
    %c0_i32_0 = arith.constant 0 : i32
    %c0_i32_1 = arith.constant 0 : i32
    return %c0_i32, %c0_i32_0 : i32, i32
  }
  func.func @transform_5(%arg0: i32, %arg1: i32) -> (i32, i32) {
    %c0_i32 = arith.constant 0 : i32
    %c0_i32_0 = arith.constant 0 : i32
    %c0_i32_1 = arith.constant 0 : i32
    return %c0_i32, %c0_i32_0 : i32, i32
  }
  func.func @transform_6(%arg0: i32, %arg1: i32) -> (i32, i32) {
    %c0_i32 = arith.constant 0 : i32
    %c0_i32_0 = arith.constant 0 : i32
    %c0_i32_1 = arith.constant 0 : i32
    return %c0_i32, %c0_i32_0 : i32, i32
  }
  func.func @transform_7(%arg0: i32, %arg1: i32) -> (i32, i32) {
    %c0_i32 = arith.constant 0 : i32
    %c0_i32_0 = arith.constant 0 : i32
    %c0_i32_1 = arith.constant 0 : i32
    return %c0_i32, %c0_i32_0 : i32, i32
  }
  func.func @transform_8(%arg0: i32, %arg1: i32) -> (i32, i32) {
    %c0_i32 = arith.constant 0 : i32
    %c0_i32_0 = arith.constant 0 : i32
    %c0_i32_1 = arith.constant 0 : i32
    return %c0_i32, %c0_i32_0 : i32, i32
  }
  func.func @transform_9(%arg0: i32, %arg1: i32) -> (i32, i32) {
    %c0_i32 = arith.constant 0 : i32
    %c0_i32_0 = arith.constant 0 : i32
    %c0_i32_1 = arith.constant 0 : i32
    return %c0_i32, %c0_i32_0 : i32, i32
  }
  func.func @transform_10(%arg0: i32, %arg1: i32) -> (i32, i32) {
    %c0_i32 = arith.constant 0 : i32
    %c0_i32_0 = arith.constant 0 : i32
    %c0_i32_1 = arith.constant 0 : i32
    return %c0_i32, %c0_i32_0 : i32, i32
  }
  func.func @transform_11(%arg0: i32, %arg1: i32) -> (i32, i32) {
    %c0_i32 = arith.constant 0 : i32
    %c0_i32_0 = arith.constant 0 : i32
    %c0_i32_1 = arith.constant 0 : i32
    return %c0_i32, %c0_i32_0 : i32, i32
  }
  func.func @transform_12(%arg0: i32, %arg1: i32) -> (i32, i32) {
    %c0_i32 = arith.constant 0 : i32
    %c0_i32_0 = arith.constant 0 : i32
    %c0_i32_1 = arith.constant 0 : i32
    return %c0_i32, %c0_i32_0 : i32, i32
  }
  func.func @transform_13(%arg0: i32, %arg1: i32) -> (i32, i32) {
    %c0_i32 = arith.constant 0 : i32
    %c0_i32_0 = arith.constant 0 : i32
    %c0_i32_1 = arith.constant 0 : i32
    return %c0_i32, %c0_i32_0 : i32, i32
  }
  func.func @transform_14(%arg0: i32, %arg1: i32) -> (i32, i32) {
    %c0_i32 = arith.constant 0 : i32
    %c0_i32_0 = arith.constant 0 : i32
    %c0_i32_1 = arith.constant 0 : i32
    return %c0_i32, %c0_i32_0 : i32, i32
  }
  func.func @transform_15(%arg0: i32, %arg1: i32) -> (i32, i32) {
    %c0_i32 = arith.constant 0 : i32
    %c0_i32_0 = arith.constant 0 : i32
    %c0_i32_1 = arith.constant 0 : i32
    return %c0_i32, %c0_i32_0 : i32, i32
  }
  func.func @transform_16(%arg0: i32, %arg1: i32) -> (i32, i32) {
    %c0_i32 = arith.constant 0 : i32
    %c0_i32_0 = arith.constant 0 : i32
    %c0_i32_1 = arith.constant 0 : i32
    return %c0_i32, %c0_i32_0 : i32, i32
  }
  func.func @transform_17(%arg0: i32, %arg1: i32) -> (i32, i32) {
    %c0_i32 = arith.constant 0 : i32
    %c0_i32_0 = arith.constant 0 : i32
    %c0_i32_1 = arith.constant 0 : i32
    return %c0_i32, %c0_i32_0 : i32, i32
  }
  func.func @transform_18(%arg0: i32, %arg1: i32) -> (i32, i32) {
    %c0_i32 = arith.constant 0 : i32
    %c0_i32_0 = arith.constant 0 : i32
    %c0_i32_1 = arith.constant 0 : i32
    return %c0_i32, %c0_i32_0 : i32, i32
  }
  func.func @transform_19(%arg0: i32, %arg1: i32) -> (i32, i32) {
    %c0_i32 = arith.constant 0 : i32
    %c0_i32_0 = arith.constant 0 : i32
    %c0_i32_1 = arith.constant 0 : i32
    return %c0_i32, %c0_i32_0 : i32, i32
  }
  func.func @transform_20(%arg0: i32, %arg1: i32) -> (i32, i32) {
    %c0_i32 = arith.constant 0 : i32
    %c0_i32_0 = arith.constant 0 : i32
    %c0_i32_1 = arith.constant 0 : i32
    return %c0_i32, %c0_i32_0 : i32, i32
  }
  func.func @transform_21(%arg0: i32, %arg1: i32) -> (i32, i32) {
    %c0_i32 = arith.constant 0 : i32
    %c0_i32_0 = arith.constant 0 : i32
    %c0_i32_1 = arith.constant 0 : i32
    return %c0_i32, %c0_i32_0 : i32, i32
  }
  func.func @transform_22(%arg0: i32, %arg1: i32) -> (i32, i32) {
    %c0_i32 = arith.constant 0 : i32
    %c0_i32_0 = arith.constant 0 : i32
    %c0_i32_1 = arith.constant 0 : i32
    return %c0_i32, %c0_i32_0 : i32, i32
  }
  func.func @transform_23(%arg0: i32, %arg1: i32) -> (i32, i32) {
    %c0_i32 = arith.constant 0 : i32
    %c0_i32_0 = arith.constant 0 : i32
    %c0_i32_1 = arith.constant 0 : i32
    return %c0_i32, %c0_i32_0 : i32, i32
  }
  func.func @transform_24(%arg0: i32, %arg1: i32) -> (i32, i32) {
    %c0_i32 = arith.constant 0 : i32
    %c0_i32_0 = arith.constant 0 : i32
    %c0_i32_1 = arith.constant 0 : i32
    return %c0_i32, %c0_i32_0 : i32, i32
  }
  func.func @transform_25(%arg0: i32, %arg1: i32) -> (i32, i32) {
    %c0_i32 = arith.constant 0 : i32
    %c0_i32_0 = arith.constant 0 : i32
    %c0_i32_1 = arith.constant 0 : i32
    return %c0_i32, %c0_i32_0 : i32, i32
  }
  func.func @transform_26(%arg0: i32, %arg1: i32) -> (i32, i32) {
    %c0_i32 = arith.constant 0 : i32
    %c0_i32_0 = arith.constant 0 : i32
    %c0_i32_1 = arith.constant 0 : i32
    return %c0_i32, %c0_i32_0 : i32, i32
  }
  func.func @transform_27(%arg0: i32, %arg1: i32) -> (i32, i32) {
    %c0_i32 = arith.constant 0 : i32
    return %arg1, %arg0 : i32, i32
  }
}

</mosaic_0001>

<llo_original>
// kernel: classifier_forward.1
$region0: #{classifier_forward.1}
  #allocation0 [shape = 'u32[]', space=smem, size = 0x4, offset = 0x4, fixed_abs, tag = 'smem constant byte address 0x4 - core index']
  #allocation1 [shape = 'u32[144,128]{1,0:T(1,128)}', space=vmem, size = 0x12000, scoped, tag = 'internal scratch']
  %s0 = inlined_call_operand.vmem [shape: f32[8,128], index: 0, kind: input, shape index: {}]
  %s1 = inlined_call_operand.hbm [shape: bf16[128,1024], index: 1, kind: input, shape index: {}]
  %s2 = inlined_call_operand.vmem [shape: f32[1,1024], index: 2, kind: input, shape index: {}]
  %s3 = inlined_call_operand.hbm [shape: bf16[512,256], index: 3, kind: input, shape index: {}]
  %s4 = inlined_call_operand.vmem [shape: f32[1,256], index: 4, kind: input, shape index: {}]
  %s5 = inlined_call_operand.hbm [shape: bf16[512,256], index: 5, kind: input, shape index: {}]
  %s6 = inlined_call_operand.vmem [shape: f32[1,256], index: 6, kind: input, shape index: {}]
  %s7 = inlined_call_operand.hbm [shape: bf16[256,256], index: 7, kind: input, shape index: {}]
  %s8 = inlined_call_operand.vmem [shape: f32[1,256], index: 8, kind: input, shape index: {}]
  %s9 = inlined_call_operand.hbm [shape: bf16[256,256], index: 9, kind: input, shape index: {}]
  %s10 = inlined_call_operand.vmem [shape: f32[1,256], index: 10, kind: input, shape index: {}]
  %s11 = inlined_call_operand.hbm [shape: bf16[256,128], index: 11, kind: input, shape index: {}]
  %s12 = inlined_call_operand.hbm [shape: bf16[256,128], index: 12, kind: input, shape index: {}]
  %s13 = inlined_call_operand.vmem [shape: f32[1,128], index: 13, kind: input, shape index: {}]
  %s14 = inlined_call_operand.hbm [shape: bf16[128,512], index: 14, kind: input, shape index: {}]
  %s15 = inlined_call_operand.vmem [shape: f32[1,512], index: 15, kind: input, shape index: {}]
  %s16 = inlined_call_operand.hbm [shape: bf16[256,128], index: 16, kind: input, shape index: {}]
  %s17 = inlined_call_operand.vmem [shape: f32[1,128], index: 17, kind: input, shape index: {}]
  %s18 = inlined_call_operand.hbm [shape: bf16[256,128], index: 18, kind: input, shape index: {}]
  %s19 = inlined_call_operand.hbm [shape: f32[1,128], index: 19, kind: input, shape index: {}]
  %s20 = inlined_call_operand.vmem [shape: bf16[128,128], index: 20, kind: input, shape index: {}]
  %s21 = inlined_call_operand.vmem [shape: f32[1,128], index: 21, kind: input, shape index: {}]
  %s22 = inlined_call_operand.hbm [shape: bf16[128,128], index: 22, kind: input, shape index: {}]
  %s23 = inlined_call_operand.vmem [shape: f32[1,128], index: 23, kind: input, shape index: {}]
  %s24 = inlined_call_operand.hbm [shape: bf16[128,128], index: 24, kind: input, shape index: {}]
  %s25 = inlined_call_operand.hbm [shape: bf16[128,128], index: 25, kind: input, shape index: {}]
  %s26 = inlined_call_operand.vmem [shape: f32[1,128], index: 26, kind: input, shape index: {}]
  %s27 = inlined_call_operand.vmem [shape: f32[8,256], index: 27, kind: output, shape index: {}]
  %s28 = sld [smem:[#allocation0]]
  $region205: #{classifier_forward.1} parent=0
    _
  %s30 = ssub.s32 1, %s28
  %s31 = scalar_select 0, %s30, %s28
  $region1: #{classifier_forward.1} parent=0
    #allocation2 [shape = 'u8[262144]{0}', space=vmem, size = 0x40000, scoped, tag = 'input window, operand 1, single buffered']
    #allocation3 [shape = 's32[2]{0}', space=sflag, size = 0x8, scoped, tag = 'scoped memory for classifier_forward.1']
    #allocation4 [shape = 'u8[262144]{0}', space=vmem, size = 0x40000, scoped, tag = 'input window, operand 3, single buffered']
    #allocation5 [shape = 's32[1]{0}', space=sflag, size = 0x4, scoped, tag = 'scoped memory for classifier_forward.1']
    #allocation6 [shape = 'u8[262144]{0}', space=vmem, size = 0x40000, scoped, tag = 'input window, operand 5, single buffered']
    #allocation7 [shape = 'u8[131072]{0}', space=vmem, size = 0x20000, scoped, tag = 'input window, operand 7, single buffered']
    #allocation8 [shape = 's32[1]{0}', space=sflag, size = 0x4, scoped, tag = 'scoped memory for classifier_forward.1']
    #allocation9 [shape = 'u8[131072]{0}', space=vmem, size = 0x20000, scoped, tag = 'input window, operand 9, single buffered']
    #allocation10 [shape = 'u8[65536]{0}', space=vmem, size = 0x10000, scoped, tag = 'input window, operand 11, single buffered']
    #allocation11 [shape = 's32[1]{0}', space=sflag, size = 0x4, scoped, tag = 'scoped memory for classifier_forward.1']
    #allocation12 [shape = 'u8[65536]{0}', space=vmem, size = 0x10000, scoped, tag = 'input window, operand 12, single buffered']
    #allocation13 [shape = 'u8[131072]{0}', space=vmem, size = 0x20000, scoped, tag = 'input window, operand 14, single buffered']
    #allocation14 [shape = 's32[1]{0}', space=sflag, size = 0x4, scoped, tag = 'scoped memory for classifier_forward.1']
    #allocation15 [shape = 'u8[65536]{0}', space=vmem, size = 0x10000, scoped, tag = 'input window, operand 16, single buffered']
    #allocation16 [shape = 'u8[65536]{0}', space=vmem, size = 0x10000, scoped, tag = 'input window, operand 18, single buffered']
    #allocation17 [shape = 's32[1]{0}', space=sflag, size = 0x4, scoped, tag = 'scoped memory for classifier_forward.1']
    #allocation18 [shape = 'u8[512]{0}', space=vmem, size = 0x400, scoped, tag = 'input window, operand 19, single buffered']
    #allocation19 [shape = 'u8[32768]{0}', space=vmem, size = 0x8000, scoped, tag = 'input window, operand 22, single buffered']
    #allocation20 [shape = 's32[1]{0}', space=sflag, size = 0x4, scoped, tag = 'scoped memory for classifier_forward.1']
    #allocation21 [shape = 'u8[32768]{0}', space=vmem, size = 0x8000, scoped, tag = 'input window, operand 24, single buffered']
    #allocation22 [shape = 'u8[32768]{0}', space=vmem, size = 0x8000, scoped, tag = 'input window, operand 25, single buffered']
    #allocation23 [shape = 's32[1]{0}', space=sflag, size = 0x4, scoped, tag = 'scoped memory for classifier_forward.1']
    %32 = vsyncpa [#allocation3], 0
    %33 = vsyncpa [#allocation5], 0
    %34 = vsyncpa [#allocation8], 0
    %35 = vsyncpa [#allocation11], 0
    %36 = vsyncpa [#allocation14], 0
    %37 = vsyncpa [#allocation17], 0
    %38 = vsyncpa [#allocation20], 0
    %39 = vsyncpa [#allocation23], 0
    loop: start=0, step=1, limit=4
    $region2: #{classifier_forward.1} parent=1 // loop_pre_header
      _
    $region3: #{classifier_forward.1} parent=1 // loop_header
      %s41 = sphi 0, %s45
      %p42 = scmp.ge.s32.totalorder %s41, 4
      %s48 = sphi 0, %s60
      %s49 = sphi 0, %s56
      %s50 = sphi 0, %s48
      %s51 = sphi 0, %s49
      %s52 = sphi 0, %s50
      %s53 = sphi 0, %s51
      %s63 = sphi 0, %s65
      %s66 = sphi 0, %s63
      %s67 = sphi 0, %s66
      %s83 = sphi 0, %s67
      %s87 = sphi 0, %s87
      %s89 = sphi 0, %s87
      %s90 = sphi 0, %s89
      %s104 = sphi 0, %s90
      %s108 = sphi 0, %s108
      %s110 = sphi 0, %s108
      %s111 = sphi 0, %s110
      %s125 = sphi 0, %s111
      %s129 = sphi 0, %s129
      %s131 = sphi 0, %s129
      %s132 = sphi 0, %s131
      %s146 = sphi 0, %s132
      %s150 = sphi 0, %s150
      %s152 = sphi 0, %s150
      %s153 = sphi 0, %s152
      %s167 = sphi 0, %s153
      %s171 = sphi 0, %s171
      %s173 = sphi 0, %s171
      %s174 = sphi 0, %s173
      %s188 = sphi 0, %s174
      %s192 = sphi 0, %s192
      %s194 = sphi 0, %s192
      %s195 = sphi 0, %s194
      %s209 = sphi 0, %s195
      %s213 = sphi 0, %s213
      %s215 = sphi 0, %s213
      %s216 = sphi 0, %s215
      %s230 = sphi 0, %s216
      %s234 = sphi 0, %s234
      %s236 = sphi 0, %s234
      %s237 = sphi 0, %s236
      %s251 = sphi 0, %s237
      %s255 = sphi 0, %s255
      %s257 = sphi 0, %s255
      %s258 = sphi 0, %s257
      %s272 = sphi 0, %s258
      %s276 = sphi 0, %s276
      %s278 = sphi 0, %s276
      %s279 = sphi 0, %s278
      %s293 = sphi 0, %s279
      %s297 = sphi 0, %s297
      %s299 = sphi 0, %s297
      %s300 = sphi 0, %s299
      %s314 = sphi 0, %s300
      %s318 = sphi 0, %s318
      %s320 = sphi 0, %s318
      %s321 = sphi 0, %s320
      %s335 = sphi 0, %s321
      %s339 = sphi 0, %s339
      %s341 = sphi 0, %s339
      %s342 = sphi 0, %s341
      %s356 = sphi 0, %s342
      %s360 = sphi 0, %s360
      %s362 = sphi 0, %s360
      %s363 = sphi 0, %s362
      %s377 = sphi 0, %s363
      %s381 = sphi 0, %s381
      %s383 = sphi 0, %s381
      %s384 = sphi 0, %s383
      %s398 = sphi 0, %s384
      %s402 = sphi 0, %s402
      %s404 = sphi 0, %s402
      %s405 = sphi 0, %s404
      %s419 = sphi 0, %s405
      %s423 = sphi 0, %s423
      %s425 = sphi 0, %s423
      %s426 = sphi 0, %s425
      %s440 = sphi 0, %s426
      %s444 = sphi 0, %s444
      %s446 = sphi 0, %s444
      %s447 = sphi 0, %s446
      %s461 = sphi 0, %s447
      %s465 = sphi 0, %s465
      %s467 = sphi 0, %s465
      %s468 = sphi 0, %s467
      %s482 = sphi 0, %s468
      %s486 = sphi 0, %s486
      %s488 = sphi 0, %s486
      %s489 = sphi 0, %s488
      %s503 = sphi 0, %s489
      %s507 = sphi 0, %s507
      %s509 = sphi 0, %s507
      %s510 = sphi 0, %s509
      %s524 = sphi 0, %s510
      %s528 = sphi 0, %s528
      %s530 = sphi 0, %s528
      %s531 = sphi 0, %s530
      %s545 = sphi 0, %s531
      %s549 = sphi 0, %s549
      %s551 = sphi 0, %s549
      %s552 = sphi 0, %s551
      %s566 = sphi 0, %s552
      %s570 = sphi 0, %s570
      %s572 = sphi 0, %s570
      %s573 = sphi 0, %s572
      %s587 = sphi 0, %s573
      %s591 = sphi 0, %s591
      %s593 = sphi 0, %s591
      %s594 = sphi 0, %s593
      %s608 = sphi 0, %s594
      %s612 = sphi 0, %s612
      %s614 = sphi 0, %s612
      %s615 = sphi 0, %s614
      %s629 = sphi 0, %s615
      %s637 = sphi 0, %s639
      %s640 = sphi 0, %s637
      %s641 = sphi 0, %s640
      %s657 = sphi 0, %s641
    $region4: #{classifier_forward.1} parent=1 // loop_header_branch
      %44 = sbr.rel (%p42) target = $region8
    $region5: #{classifier_forward.1} parent=1 // loop_body
      %s46 = ssub.s32 %s41, 1
      %s47 = ssub.s32 %s41, 2
      %s54 = sadd.s32 1, %s49
      %p55 = scmp.ge.s32.totalorder %s54, 1
      %s56 = scalar_select %p55, 0, %s54
      %s57 = sadd.s32 1, %s48
      %s58 = scalar_select %p55, %s57, %s48
      %p59 = scmp.ge.s32.totalorder %s58, 2
      %s60 = scalar_select %p59, 0, %s58
      %s61 = ssub.s32 %s49, %s56
      %p62 = scmp.eq.s32.totalorder %s61, 0
      %s64 = sadd.s32 %s63, 1
      %s65 = scalar_select %p62, %s63, %s64
      %p68 = pneg %p62
      %p69 = scmp.eq.s32.totalorder %s41, 1
      %p70 = por %p68, %p69
      %p71 = scmp.ne.s32.totalorder %s63, %s66
      %p72 = scmp.eq.s32.totalorder %s41, 0
      %p73 = por %p71, %p72
      %p74 = scmp.ne.s32.totalorder %s63, %s66
      %p75 = scmp.eq.s32.totalorder %s46, 1
      %p76 = por %p74, %p75
      %p77 = scmp.ne.s32.totalorder %s66, %s67
      %p78 = scmp.eq.s32.totalorder %s46, 0
      %p79 = por %p77, %p78
      %p80 = scmp.ne.s32.totalorder %s66, %s67
      %p81 = scmp.eq.s32.totalorder %s47, 1
      %p82 = por %p80, %p81
      %p84 = scmp.ne.s32.totalorder %s67, %s83
      %p85 = scmp.eq.s32.totalorder %s47, 0
      %p86 = por %p84, %p85
      %s88 = sadd.s32 %s87, 1
      %p91 = scmp.eq.s32.totalorder %s41, 1
      %p92 = scmp.ne.s32.totalorder %s87, %s89
      %p93 = scmp.eq.s32.totalorder %s41, 0
      %p94 = por %p92, %p93
      %p95 = scmp.ne.s32.totalorder %s87, %s89
      %p96 = scmp.eq.s32.totalorder %s46, 1
      %p97 = por %p95, %p96
      %p98 = scmp.ne.s32.totalorder %s89, %s90
      %p99 = scmp.eq.s32.totalorder %s46, 0
      %p100 = por %p98, %p99
      %p101 = scmp.ne.s32.totalorder %s89, %s90
      %p102 = scmp.eq.s32.totalorder %s47, 1
      %p103 = por %p101, %p102
      %p105 = scmp.ne.s32.totalorder %s90, %s104
      %p106 = scmp.eq.s32.totalorder %s47, 0
      %p107 = por %p105, %p106
      %s109 = sadd.s32 %s108, 1
      %p112 = scmp.eq.s32.totalorder %s41, 1
      %p113 = scmp.ne.s32.totalorder %s108, %s110
      %p114 = scmp.eq.s32.totalorder %s41, 0
      %p115 = por %p113, %p114
      %p116 = scmp.ne.s32.totalorder %s108, %s110
      %p117 = scmp.eq.s32.totalorder %s46, 1
      %p118 = por %p116, %p117
      %p119 = scmp.ne.s32.totalorder %s110, %s111
      %p120 = scmp.eq.s32.totalorder %s46, 0
      %p121 = por %p119, %p120
      %p122 = scmp.ne.s32.totalorder %s110, %s111
      %p123 = scmp.eq.s32.totalorder %s47, 1
      %p124 = por %p122, %p123
      %p126 = scmp.ne.s32.totalorder %s111, %s125
      %p127 = scmp.eq.s32.totalorder %s47, 0
      %p128 = por %p126, %p127
      %s130 = sadd.s32 %s129, 1
      %p133 = scmp.eq.s32.totalorder %s41, 1
      %p134 = scmp.ne.s32.totalorder %s129, %s131
      %p135 = scmp.eq.s32.totalorder %s41, 0
      %p136 = por %p134, %p135
      %p137 = scmp.ne.s32.totalorder %s129, %s131
      %p138 = scmp.eq.s32.totalorder %s46, 1
      %p139 = por %p137, %p138
      %p140 = scmp.ne.s32.totalorder %s131, %s132
      %p141 = scmp.eq.s32.totalorder %s46, 0
      %p142 = por %p140, %p141
      %p143 = scmp.ne.s32.totalorder %s131, %s132
      %p144 = scmp.eq.s32.totalorder %s47, 1
      %p145 = por %p143, %p144
      %p147 = scmp.ne.s32.totalorder %s132, %s146
      %p148 = scmp.eq.s32.totalorder %s47, 0
      %p149 = por %p147, %p148
      %s151 = sadd.s32 %s150, 1
      %p154 = scmp.eq.s32.totalorder %s41, 1
      %p155 = scmp.ne.s32.totalorder %s150, %s152
      %p156 = scmp.eq.s32.totalorder %s41, 0
      %p157 = por %p155, %p156
      %p158 = scmp.ne.s32.totalorder %s150, %s152
      %p159 = scmp.eq.s32.totalorder %s46, 1
      %p160 = por %p158, %p159
      %p161 = scmp.ne.s32.totalorder %s152, %s153
      %p162 = scmp.eq.s32.totalorder %s46, 0
      %p163 = por %p161, %p162
      %p164 = scmp.ne.s32.totalorder %s152, %s153
      %p165 = scmp.eq.s32.totalorder %s47, 1
      %p166 = por %p164, %p165
      %p168 = scmp.ne.s32.totalorder %s153, %s167
      %p169 = scmp.eq.s32.totalorder %s47, 0
      %p170 = por %p168, %p169
      %s172 = sadd.s32 %s171, 1
      %p175 = scmp.eq.s32.totalorder %s41, 1
      %p176 = scmp.ne.s32.totalorder %s171, %s173
      %p177 = scmp.eq.s32.totalorder %s41, 0
      %p178 = por %p176, %p177
      %p179 = scmp.ne.s32.totalorder %s171, %s173
      %p180 = scmp.eq.s32.totalorder %s46, 1
      %p181 = por %p179, %p180
      %p182 = scmp.ne.s32.totalorder %s173, %s174
      %p183 = scmp.eq.s32.totalorder %s46, 0
      %p184 = por %p182, %p183
      %p185 = scmp.ne.s32.totalorder %s173, %s174
      %p186 = scmp.eq.s32.totalorder %s47, 1
      %p187 = por %p185, %p186
      %p189 = scmp.ne.s32.totalorder %s174, %s188
      %p190 = scmp.eq.s32.totalorder %s47, 0
      %p191 = por %p189, %p190
      %s193 = sadd.s32 %s192, 1
      %p196 = scmp.eq.s32.totalorder %s41, 1
      %p197 = scmp.ne.s32.totalorder %s192, %s194
      %p198 = scmp.eq.s32.totalorder %s41, 0
      %p199 = por %p197, %p198
      %p200 = scmp.ne.s32.totalorder %s192, %s194
      %p201 = scmp.eq.s32.totalorder %s46, 1
      %p202 = por %p200, %p201
      %p203 = scmp.ne.s32.totalorder %s194, %s195
      %p204 = scmp.eq.s32.totalorder %s46, 0
      %p205 = por %p203, %p204
      %p206 = scmp.ne.s32.totalorder %s194, %s195
      %p207 = scmp.eq.s32.totalorder %s47, 1
      %p208 = por %p206, %p207
      %p210 = scmp.ne.s32.totalorder %s195, %s209
      %p211 = scmp.eq.s32.totalorder %s47, 0
      %p212 = por %p210, %p211
      %s214 = sadd.s32 %s213, 1
      %p217 = scmp.eq.s32.totalorder %s41, 1
      %p218 = scmp.ne.s32.totalorder %s213, %s215
      %p219 = scmp.eq.s32.totalorder %s41, 0
      %p220 = por %p218, %p219
      %p221 = scmp.ne.s32.totalorder %s213, %s215
      %p222 = scmp.eq.s32.totalorder %s46, 1
      %p223 = por %p221, %p222
      %p224 = scmp.ne.s32.totalorder %s215, %s216
      %p225 = scmp.eq.s32.totalorder %s46, 0
      %p226 = por %p224, %p225
      %p227 = scmp.ne.s32.totalorder %s215, %s216
      %p228 = scmp.eq.s32.totalorder %s47, 1
      %p229 = por %p227, %p228
      %p231 = scmp.ne.s32.totalorder %s216, %s230
      %p232 = scmp.eq.s32.totalorder %s47, 0
      %p233 = por %p231, %p232
      %s235 = sadd.s32 %s234, 1
      %p238 = scmp.eq.s32.totalorder %s41, 1
      %p239 = scmp.ne.s32.totalorder %s234, %s236
      %p240 = scmp.eq.s32.totalorder %s41, 0
      %p241 = por %p239, %p240
      %p242 = scmp.ne.s32.totalorder %s234, %s236
      %p243 = scmp.eq.s32.totalorder %s46, 1
      %p244 = por %p242, %p243
      %p245 = scmp.ne.s32.totalorder %s236, %s237
      %p246 = scmp.eq.s32.totalorder %s46, 0
      %p247 = por %p245, %p246
      %p248 = scmp.ne.s32.totalorder %s236, %s237
      %p249 = scmp.eq.s32.totalorder %s47, 1
      %p250 = por %p248, %p249
      %p252 = scmp.ne.s32.totalorder %s237, %s251
      %p253 = scmp.eq.s32.totalorder %s47, 0
      %p254 = por %p252, %p253
      %s256 = sadd.s32 %s255, 1
      %p259 = scmp.eq.s32.totalorder %s41, 1
      %p260 = scmp.ne.s32.totalorder %s255, %s257
      %p261 = scmp.eq.s32.totalorder %s41, 0
      %p262 = por %p260, %p261
      %p263 = scmp.ne.s32.totalorder %s255, %s257
      %p264 = scmp.eq.s32.totalorder %s46, 1
      %p265 = por %p263, %p264
      %p266 = scmp.ne.s32.totalorder %s257, %s258
      %p267 = scmp.eq.s32.totalorder %s46, 0
      %p268 = por %p266, %p267
      %p269 = scmp.ne.s32.totalorder %s257, %s258
      %p270 = scmp.eq.s32.totalorder %s47, 1
      %p271 = por %p269, %p270
      %p273 = scmp.ne.s32.totalorder %s258, %s272
      %p274 = scmp.eq.s32.totalorder %s47, 0
      %p275 = por %p273, %p274
      %s277 = sadd.s32 %s276, 1
      %p280 = scmp.eq.s32.totalorder %s41, 1
      %p281 = scmp.ne.s32.totalorder %s276, %s278
      %p282 = scmp.eq.s32.totalorder %s41, 0
      %p283 = por %p281, %p282
      %p284 = scmp.ne.s32.totalorder %s276, %s278
      %p285 = scmp.eq.s32.totalorder %s46, 1
      %p286 = por %p284, %p285
      %p287 = scmp.ne.s32.totalorder %s278, %s279
      %p288 = scmp.eq.s32.totalorder %s46, 0
      %p289 = por %p287, %p288
      %p290 = scmp.ne.s32.totalorder %s278, %s279
      %p291 = scmp.eq.s32.totalorder %s47, 1
      %p292 = por %p290, %p291
      %p294 = scmp.ne.s32.totalorder %s279, %s293
      %p295 = scmp.eq.s32.totalorder %s47, 0
      %p296 = por %p294, %p295
      %s298 = sadd.s32 %s297, 1
      %p301 = scmp.eq.s32.totalorder %s41, 1
      %p302 = scmp.ne.s32.totalorder %s297, %s299
      %p303 = scmp.eq.s32.totalorder %s41, 0
      %p304 = por %p302, %p303
      %p305 = scmp.ne.s32.totalorder %s297, %s299
      %p306 = scmp.eq.s32.totalorder %s46, 1
      %p307 = por %p305, %p306
      %p308 = scmp.ne.s32.totalorder %s299, %s300
      %p309 = scmp.eq.s32.totalorder %s46, 0
      %p310 = por %p308, %p309
      %p311 = scmp.ne.s32.totalorder %s299, %s300
      %p312 = scmp.eq.s32.totalorder %s47, 1
      %p313 = por %p311, %p312
      %p315 = scmp.ne.s32.totalorder %s300, %s314
      %p316 = scmp.eq.s32.totalorder %s47, 0
      %p317 = por %p315, %p316
      %s319 = sadd.s32 %s318, 1
      %p322 = scmp.eq.s32.totalorder %s41, 1
      %p323 = scmp.ne.s32.totalorder %s318, %s320
      %p324 = scmp.eq.s32.totalorder %s41, 0
      %p325 = por %p323, %p324
      %p326 = scmp.ne.s32.totalorder %s318, %s320
      %p327 = scmp.eq.s32.totalorder %s46, 1
      %p328 = por %p326, %p327
      %p329 = scmp.ne.s32.totalorder %s320, %s321
      %p330 = scmp.eq.s32.totalorder %s46, 0
      %p331 = por %p329, %p330
      %p332 = scmp.ne.s32.totalorder %s320, %s321
      %p333 = scmp.eq.s32.totalorder %s47, 1
      %p334 = por %p332, %p333
      %p336 = scmp.ne.s32.totalorder %s321, %s335
      %p337 = scmp.eq.s32.totalorder %s47, 0
      %p338 = por %p336, %p337
      %s340 = sadd.s32 %s339, 1
      %p343 = scmp.eq.s32.totalorder %s41, 1
      %p344 = scmp.ne.s32.totalorder %s339, %s341
      %p345 = scmp.eq.s32.totalorder %s41, 0
      %p346 = por %p344, %p345
      %p347 = scmp.ne.s32.totalorder %s339, %s341
      %p348 = scmp.eq.s32.totalorder %s46, 1
      %p349 = por %p347, %p348
      %p350 = scmp.ne.s32.totalorder %s341, %s342
      %p351 = scmp.eq.s32.totalorder %s46, 0
      %p352 = por %p350, %p351
      %p353 = scmp.ne.s32.totalorder %s341, %s342
      %p354 = scmp.eq.s32.totalorder %s47, 1
      %p355 = por %p353, %p354
      %p357 = scmp.ne.s32.totalorder %s342, %s356
      %p358 = scmp.eq.s32.totalorder %s47, 0
      %p359 = por %p357, %p358
      %s361 = sadd.s32 %s360, 1
      %p364 = scmp.eq.s32.totalorder %s41, 1
      %p365 = scmp.ne.s32.totalorder %s360, %s362
      %p366 = scmp.eq.s32.totalorder %s41, 0
      %p367 = por %p365, %p366
      %p368 = scmp.ne.s32.totalorder %s360, %s362
      %p369 = scmp.eq.s32.totalorder %s46, 1
      %p370 = por %p368, %p369
      %p371 = scmp.ne.s32.totalorder %s362, %s363
      %p372 = scmp.eq.s32.totalorder %s46, 0
      %p373 = por %p371, %p372
      %p374 = scmp.ne.s32.totalorder %s362, %s363
      %p375 = scmp.eq.s32.totalorder %s47, 1
      %p376 = por %p374, %p375
      %p378 = scmp.ne.s32.totalorder %s363, %s377
      %p379 = scmp.eq.s32.totalorder %s47, 0
      %p380 = por %p378, %p379
      %s382 = sadd.s32 %s381, 1
      %p385 = scmp.eq.s32.totalorder %s41, 1
      %p386 = scmp.ne.s32.totalorder %s381, %s383
      %p387 = scmp.eq.s32.totalorder %s41, 0
      %p388 = por %p386, %p387
      %p389 = scmp.ne.s32.totalorder %s381, %s383
      %p390 = scmp.eq.s32.totalorder %s46, 1
      %p391 = por %p389, %p390
      %p392 = scmp.ne.s32.totalorder %s383, %s384
      %p393 = scmp.eq.s32.totalorder %s46, 0
      %p394 = por %p392, %p393
      %p395 = scmp.ne.s32.totalorder %s383, %s384
      %p396 = scmp.eq.s32.totalorder %s47, 1
      %p397 = por %p395, %p396
      %p399 = scmp.ne.s32.totalorder %s384, %s398
      %p400 = scmp.eq.s32.totalorder %s47, 0
      %p401 = por %p399, %p400
      %s403 = sadd.s32 %s402, 1
      %p406 = scmp.eq.s32.totalorder %s41, 1
      %p407 = scmp.ne.s32.totalorder %s402, %s404
      %p408 = scmp.eq.s32.totalorder %s41, 0
      %p409 = por %p407, %p408
      %p410 = scmp.ne.s32.totalorder %s402, %s404
      %p411 = scmp.eq.s32.totalorder %s46, 1
      %p412 = por %p410, %p411
      %p413 = scmp.ne.s32.totalorder %s404, %s405
      %p414 = scmp.eq.s32.totalorder %s46, 0
      %p415 = por %p413, %p414
      %p416 = scmp.ne.s32.totalorder %s404, %s405
      %p417 = scmp.eq.s32.totalorder %s47, 1
      %p418 = por %p416, %p417
      %p420 = scmp.ne.s32.totalorder %s405, %s419
      %p421 = scmp.eq.s32.totalorder %s47, 0
      %p422 = por %p420, %p421
      %s424 = sadd.s32 %s423, 1
      %p427 = scmp.eq.s32.totalorder %s41, 1
      %p428 = scmp.ne.s32.totalorder %s423, %s425
      %p429 = scmp.eq.s32.totalorder %s41, 0
      %p430 = por %p428, %p429
      %p431 = scmp.ne.s32.totalorder %s423, %s425
      %p432 = scmp.eq.s32.totalorder %s46, 1
      %p433 = por %p431, %p432
      %p434 = scmp.ne.s32.totalorder %s425, %s426
      %p435 = scmp.eq.s32.totalorder %s46, 0
      %p436 = por %p434, %p435
      %p437 = scmp.ne.s32.totalorder %s425, %s426
      %p438 = scmp.eq.s32.totalorder %s47, 1
      %p439 = por %p437, %p438
      %p441 = scmp.ne.s32.totalorder %s426, %s440
      %p442 = scmp.eq.s32.totalorder %s47, 0
      %p443 = por %p441, %p442
      %s445 = sadd.s32 %s444, 1
      %p448 = scmp.eq.s32.totalorder %s41, 1
      %p449 = scmp.ne.s32.totalorder %s444, %s446
      %p450 = scmp.eq.s32.totalorder %s41, 0
      %p451 = por %p449, %p450
      %p452 = scmp.ne.s32.totalorder %s444, %s446
      %p453 = scmp.eq.s32.totalorder %s46, 1
      %p454 = por %p452, %p453
      %p455 = scmp.ne.s32.totalorder %s446, %s447
      %p456 = scmp.eq.s32.totalorder %s46, 0
      %p457 = por %p455, %p456
      %p458 = scmp.ne.s32.totalorder %s446, %s447
      %p459 = scmp.eq.s32.totalorder %s47, 1
      %p460 = por %p458, %p459
      %p462 = scmp.ne.s32.totalorder %s447, %s461
      %p463 = scmp.eq.s32.totalorder %s47, 0
      %p464 = por %p462, %p463
      %s466 = sadd.s32 %s465, 1
      %p469 = scmp.eq.s32.totalorder %s41, 1
      %p470 = scmp.ne.s32.totalorder %s465, %s467
      %p471 = scmp.eq.s32.totalorder %s41, 0
      %p472 = por %p470, %p471
      %p473 = scmp.ne.s32.totalorder %s465, %s467
      %p474 = scmp.eq.s32.totalorder %s46, 1
      %p475 = por %p473, %p474
      %p476 = scmp.ne.s32.totalorder %s467, %s468
      %p477 = scmp.eq.s32.totalorder %s46, 0
      %p478 = por %p476, %p477
      %p479 = scmp.ne.s32.totalorder %s467, %s468
      %p480 = scmp.eq.s32.totalorder %s47, 1
      %p481 = por %p479, %p480
      %p483 = scmp.ne.s32.totalorder %s468, %s482
      %p484 = scmp.eq.s32.totalorder %s47, 0
      %p485 = por %p483, %p484
      %s487 = sadd.s32 %s486, 1
      %p490 = scmp.eq.s32.totalorder %s41, 1
      %p491 = scmp.ne.s32.totalorder %s486, %s488
      %p492 = scmp.eq.s32.totalorder %s41, 0
      %p493 = por %p491, %p492
      %p494 = scmp.ne.s32.totalorder %s486, %s488
      %p495 = scmp.eq.s32.totalorder %s46, 1
      %p496 = por %p494, %p495
      %p497 = scmp.ne.s32.totalorder %s488, %s489
      %p498 = scmp.eq.s32.totalorder %s46, 0
      %p499 = por %p497, %p498
      %p500 = scmp.ne.s32.totalorder %s488, %s489
      %p501 = scmp.eq.s32.totalorder %s47, 1
      %p502 = por %p500, %p501
      %p504 = scmp.ne.s32.totalorder %s489, %s503
      %p505 = scmp.eq.s32.totalorder %s47, 0
      %p506 = por %p504, %p505
      %s508 = sadd.s32 %s507, 1
      %p511 = scmp.eq.s32.totalorder %s41, 1
      %p512 = scmp.ne.s32.totalorder %s507, %s509
      %p513 = scmp.eq.s32.totalorder %s41, 0
      %p514 = por %p512, %p513
      %p515 = scmp.ne.s32.totalorder %s507, %s509
      %p516 = scmp.eq.s32.totalorder %s46, 1
      %p517 = por %p515, %p516
      %p518 = scmp.ne.s32.totalorder %s509, %s510
      %p519 = scmp.eq.s32.totalorder %s46, 0
      %p520 = por %p518, %p519
      %p521 = scmp.ne.s32.totalorder %s509, %s510
      %p522 = scmp.eq.s32.totalorder %s47, 1
      %p523 = por %p521, %p522
      %p525 = scmp.ne.s32.totalorder %s510, %s524
      %p526 = scmp.eq.s32.totalorder %s47, 0
      %p527 = por %p525, %p526
      %s529 = sadd.s32 %s528, 1
      %p532 = scmp.eq.s32.totalorder %s41, 1
      %p533 = scmp.ne.s32.totalorder %s528, %s530
      %p534 = scmp.eq.s32.totalorder %s41, 0
      %p535 = por %p533, %p534
      %p536 = scmp.ne.s32.totalorder %s528, %s530
      %p537 = scmp.eq.s32.totalorder %s46, 1
      %p538 = por %p536, %p537
      %p539 = scmp.ne.s32.totalorder %s530, %s531
      %p540 = scmp.eq.s32.totalorder %s46, 0
      %p541 = por %p539, %p540
      %p542 = scmp.ne.s32.totalorder %s530, %s531
      %p543 = scmp.eq.s32.totalorder %s47, 1
      %p544 = por %p542, %p543
      %p546 = scmp.ne.s32.totalorder %s531, %s545
      %p547 = scmp.eq.s32.totalorder %s47, 0
      %p548 = por %p546, %p547
      %s550 = sadd.s32 %s549, 1
      %p553 = scmp.eq.s32.totalorder %s41, 1
      %p554 = scmp.ne.s32.totalorder %s549, %s551
      %p555 = scmp.eq.s32.totalorder %s41, 0
      %p556 = por %p554, %p555
      %p557 = scmp.ne.s32.totalorder %s549, %s551
      %p558 = scmp.eq.s32.totalorder %s46, 1
      %p559 = por %p557, %p558
      %p560 = scmp.ne.s32.totalorder %s551, %s552
      %p561 = scmp.eq.s32.totalorder %s46, 0
      %p562 = por %p560, %p561
      %p563 = scmp.ne.s32.totalorder %s551, %s552
      %p564 = scmp.eq.s32.totalorder %s47, 1
      %p565 = por %p563, %p564
      %p567 = scmp.ne.s32.totalorder %s552, %s566
      %p568 = scmp.eq.s32.totalorder %s47, 0
      %p569 = por %p567, %p568
      %s571 = sadd.s32 %s570, 1
      %p574 = scmp.eq.s32.totalorder %s41, 1
      %p575 = scmp.ne.s32.totalorder %s570, %s572
      %p576 = scmp.eq.s32.totalorder %s41, 0
      %p577 = por %p575, %p576
      %p578 = scmp.ne.s32.totalorder %s570, %s572
      %p579 = scmp.eq.s32.totalorder %s46, 1
      %p580 = por %p578, %p579
      %p581 = scmp.ne.s32.totalorder %s572, %s573
      %p582 = scmp.eq.s32.totalorder %s46, 0
      %p583 = por %p581, %p582
      %p584 = scmp.ne.s32.totalorder %s572, %s573
      %p585 = scmp.eq.s32.totalorder %s47, 1
      %p586 = por %p584, %p585
      %p588 = scmp.ne.s32.totalorder %s573, %s587
      %p589 = scmp.eq.s32.totalorder %s47, 0
      %p590 = por %p588, %p589
      %s592 = sadd.s32 %s591, 1
      %p595 = scmp.eq.s32.totalorder %s41, 1
      %p596 = scmp.ne.s32.totalorder %s591, %s593
      %p597 = scmp.eq.s32.totalorder %s41, 0
      %p598 = por %p596, %p597
      %p599 = scmp.ne.s32.totalorder %s591, %s593
      %p600 = scmp.eq.s32.totalorder %s46, 1
      %p601 = por %p599, %p600
      %p602 = scmp.ne.s32.totalorder %s593, %s594
      %p603 = scmp.eq.s32.totalorder %s46, 0
      %p604 = por %p602, %p603
      %p605 = scmp.ne.s32.totalorder %s593, %s594
      %p606 = scmp.eq.s32.totalorder %s47, 1
      %p607 = por %p605, %p606
      %p609 = scmp.ne.s32.totalorder %s594, %s608
      %p610 = scmp.eq.s32.totalorder %s47, 0
      %p611 = por %p609, %p610
      %s613 = sadd.s32 %s612, 1
      %p616 = scmp.eq.s32.totalorder %s41, 1
      %p617 = scmp.ne.s32.totalorder %s612, %s614
      %p618 = scmp.eq.s32.totalorder %s41, 0
      %p619 = por %p617, %p618
      %p620 = scmp.ne.s32.totalorder %s612, %s614
      %p621 = scmp.eq.s32.totalorder %s46, 1
      %p622 = por %p620, %p621
      %p623 = scmp.ne.s32.totalorder %s614, %s615
      %p624 = scmp.eq.s32.totalorder %s46, 0
      %p625 = por %p623, %p624
      %p626 = scmp.ne.s32.totalorder %s614, %s615
      %p627 = scmp.eq.s32.totalorder %s47, 1
      %p628 = por %p626, %p627
      %p630 = scmp.ne.s32.totalorder %s615, %s629
      %p631 = scmp.eq.s32.totalorder %s47, 0
      %p632 = por %p630, %p631
      %s633 = ssub.s32 %s49, %s56
      %s634 = ssub.s32 %s48, %s60
      %s635 = sor.u32 %s633, %s634
      %p636 = scmp.eq.s32.totalorder %s635, 0
      %s638 = sadd.s32 %s637, 1
      %s639 = scalar_select %p636, %s637, %s638
      %p642 = pneg %p636
      %p643 = scmp.eq.s32.totalorder %s41, 1
      %p644 = por %p642, %p643
      %p645 = scmp.ne.s32.totalorder %s637, %s640
      %p646 = scmp.eq.s32.totalorder %s41, 0
      %p647 = por %p645, %p646
      %p648 = scmp.ne.s32.totalorder %s637, %s640
      %p649 = scmp.eq.s32.totalorder %s46, 1
      %p650 = por %p648, %p649
      %p651 = scmp.ne.s32.totalorder %s640, %s641
      %p652 = scmp.eq.s32.totalorder %s46, 0
      %p653 = por %p651, %p652
      %p654 = scmp.ne.s32.totalorder %s640, %s641
      %p655 = scmp.eq.s32.totalorder %s47, 1
      %p656 = por %p654, %p655
      %p658 = scmp.ne.s32.totalorder %s641, %s657
      %p659 = scmp.eq.s32.totalorder %s47, 0
      %p660 = por %p658, %p659
      %p661 = scmp.le.s32.totalorder 1, %s41
      %p662 = scmp.lt.s32.totalorder %s41, 3
      %p663 = pnand %p661, %p662
      %p664 = pneg %p663
      // Predicated region
      $region9: #{classifier_forward.1} parent=5 // pred_check
        _
      $region10: #{classifier_forward.1} parent=5 // pred_check_branch
        %666 = sbr.rel (%p663) target = $region12
      $region11: #{classifier_forward.1} parent=5 // pred_region
        %s667 = ssub.s32 %s41, 1
        // Predicated region
        $region13: #{classifier_forward.1} parent=11 // pred_check
          %p668 = pneg %p79
        $region14: #{classifier_forward.1} parent=11 // pred_check_branch
          %670 = sbr.rel (%p668) target = $region16
        $region15: #{classifier_forward.1} parent=11 // pred_region
          %p671 = scmp.lt.s32.totalorder %s51, 0
          %s672 = scalar_select %p671, %s51, 0
          %s673 = smul.addr %s672, 8
          %s674 = scalar_lea.vmem %s0, %s673
        $region16: #{classifier_forward.1} parent=11 // pred_fallthru
          _
        // Predicated region
        $region17: #{classifier_forward.1} parent=11 // pred_check
          %p675 = pneg %p100
        $region18: #{classifier_forward.1} parent=11 // pred_check_branch
          %677 = sbr.rel (%p675) target = $region20
        $region19: #{classifier_forward.1} parent=11 // pred_region
          %s679 = ssub.s32 8192, 8192
          %680 = vsyncadd [#allocation3], %s679
          %s681 = sshll.u32 [#allocation2], 4
          %s682 = int_to_ptr.vmem [resolvable:$true] %s681
          %687 = dma.hbm_to_vmem [thread:$0]  %s1, 8192, %s682, [#allocation3], 512, 512, 32
        $region20: #{classifier_forward.1} parent=11 // pred_fallthru
          _
        // Predicated region
        $region21: #{classifier_forward.1} parent=11 // pred_check
          %p688 = pneg %p121
        $region22: #{classifier_forward.1} parent=11 // pred_check_branch
          %690 = sbr.rel (%p688) target = $region24
        $region23: #{classifier_forward.1} parent=11 // pred_region
          _
        $region24: #{classifier_forward.1} parent=11 // pred_fallthru
          _
        // Predicated region
        $region25: #{classifier_forward.1} parent=11 // pred_check
          %p691 = pneg %p142
        $region26: #{classifier_forward.1} parent=11 // pred_check_branch
          %693 = sbr.rel (%p691) target = $region28
        $region27: #{classifier_forward.1} parent=11 // pred_region
          %s695 = ssub.s32 8192, 8192
          %696 = vsyncadd [#allocation5], %s695
          %s697 = sshll.u32 [#allocation4], 4
          %s698 = int_to_ptr.vmem [resolvable:$true] %s697
          %703 = dma.hbm_to_vmem [thread:$0]  %s3, 8192, %s698, [#allocation5], 128, 128, 8
        $region28: #{classifier_forward.1} parent=11 // pred_fallthru
          _
        // Predicated region
        $region29: #{classifier_forward.1} parent=11 // pred_check
          %p704 = pneg %p163
        $region30: #{classifier_forward.1} parent=11 // pred_check_branch
          %706 = sbr.rel (%p704) target = $region32
        $region31: #{classifier_forward.1} parent=11 // pred_region
          _
        $region32: #{classifier_forward.1} parent=11 // pred_fallthru
          _
        // Predicated region
        $region33: #{classifier_forward.1} parent=11 // pred_check
          %p707 = pneg %p184
        $region34: #{classifier_forward.1} parent=11 // pred_check_branch
          %709 = sbr.rel (%p707) target = $region36
        $region35: #{classifier_forward.1} parent=11 // pred_region
          %s711 = ssub.s32 8192, 8192
          %712 = vsyncadd [#allocation5], %s711
          %s713 = sshll.u32 [#allocation6], 4
          %s714 = int_to_ptr.vmem [resolvable:$true] %s713
          %719 = dma.hbm_to_vmem [thread:$0]  %s5, 8192, %s714, [#allocation5], 128, 128, 8
        $region36: #{classifier_forward.1} parent=11 // pred_fallthru
          _
        // Predicated region
        $region37: #{classifier_forward.1} parent=11 // pred_check
          %p720 = pneg %p205
        $region38: #{classifier_forward.1} parent=11 // pred_check_branch
          %722 = sbr.rel (%p720) target = $region40
        $region39: #{classifier_forward.1} parent=11 // pred_region
          _
        $region40: #{classifier_forward.1} parent=11 // pred_fallthru
          _
        // Predicated region
        $region41: #{classifier_forward.1} parent=11 // pred_check
          %p723 = pneg %p226
        $region42: #{classifier_forward.1} parent=11 // pred_check_branch
          %725 = sbr.rel (%p723) target = $region44
        $region43: #{classifier_forward.1} parent=11 // pred_region
          %s727 = ssub.s32 4096, 4096
          %728 = vsyncadd [#allocation8], %s727
          %s729 = sshll.u32 [#allocation7], 4
          %s730 = int_to_ptr.vmem [resolvable:$true] %s729
          %735 = dma.hbm_to_vmem [thread:$0]  %s7, 4096, %s730, [#allocation8], 128, 128, 8
        $region44: #{classifier_forward.1} parent=11 // pred_fallthru
          _
        // Predicated region
        $region45: #{classifier_forward.1} parent=11 // pred_check
          %p736 = pneg %p247
        $region46: #{classifier_forward.1} parent=11 // pred_check_branch
          %738 = sbr.rel (%p736) target = $region48
        $region47: #{classifier_forward.1} parent=11 // pred_region
          _
        $region48: #{classifier_forward.1} parent=11 // pred_fallthru
          _
        // Predicated region
        $region49: #{classifier_forward.1} parent=11 // pred_check
          %p739 = pneg %p268
        $region50: #{classifier_forward.1} parent=11 // pred_check_branch
          %741 = sbr.rel (%p739) target = $region52
        $region51: #{classifier_forward.1} parent=11 // pred_region
          %s743 = ssub.s32 4096, 4096
          %744 = vsyncadd [#allocation8], %s743
          %s745 = sshll.u32 [#allocation9], 4
          %s746 = int_to_ptr.vmem [resolvable:$true] %s745
          %751 = dma.hbm_to_vmem [thread:$0]  %s9, 4096, %s746, [#allocation8], 128, 128, 8
        $region52: #{classifier_forward.1} parent=11 // pred_fallthru
          _
        // Predicated region
        $region53: #{classifier_forward.1} parent=11 // pred_check
          %p752 = pneg %p289
        $region54: #{classifier_forward.1} parent=11 // pred_check_branch
          %754 = sbr.rel (%p752) target = $region56
        $region55: #{classifier_forward.1} parent=11 // pred_region
          _
        $region56: #{classifier_forward.1} parent=11 // pred_fallthru
          _
        // Predicated region
        $region57: #{classifier_forward.1} parent=11 // pred_check
          %p755 = pneg %p310
        $region58: #{classifier_forward.1} parent=11 // pred_check_branch
          %757 = sbr.rel (%p755) target = $region60
        $region59: #{classifier_forward.1} parent=11 // pred_region
          %s759 = ssub.s32 2048, 2048
          %760 = vsyncadd [#allocation11], %s759
          %s761 = sshll.u32 [#allocation10], 4
          %s762 = int_to_ptr.vmem [resolvable:$true] %s761
          %767 = dma.hbm_to_vmem [thread:$0]  %s11, 2048, %s762, [#allocation11], 64, 64, 4
        $region60: #{classifier_forward.1} parent=11 // pred_fallthru
          _
        // Predicated region
        $region61: #{classifier_forward.1} parent=11 // pred_check
          %p768 = pneg %p331
        $region62: #{classifier_forward.1} parent=11 // pred_check_branch
          %770 = sbr.rel (%p768) target = $region64
        $region63: #{classifier_forward.1} parent=11 // pred_region
          %s772 = ssub.s32 2048, 2048
          %773 = vsyncadd [#allocation11], %s772
          %s774 = sshll.u32 [#allocation12], 4
          %s775 = int_to_ptr.vmem [resolvable:$true] %s774
          %780 = dma.hbm_to_vmem [thread:$0]  %s12, 2048, %s775, [#allocation11], 64, 64, 4
        $region64: #{classifier_forward.1} parent=11 // pred_fallthru
          _
        // Predicated region
        $region65: #{classifier_forward.1} parent=11 // pred_check
          %p781 = pneg %p352
        $region66: #{classifier_forward.1} parent=11 // pred_check_branch
          %783 = sbr.rel (%p781) target = $region68
        $region67: #{classifier_forward.1} parent=11 // pred_region
          _
        $region68: #{classifier_forward.1} parent=11 // pred_fallthru
          _
        // Predicated region
        $region69: #{classifier_forward.1} parent=11 // pred_check
          %p784 = pneg %p373
        $region70: #{classifier_forward.1} parent=11 // pred_check_branch
          %786 = sbr.rel (%p784) target = $region72
        $region71: #{classifier_forward.1} parent=11 // pred_region
          %s788 = ssub.s32 4096, 4096
          %789 = vsyncadd [#allocation14], %s788
          %s790 = sshll.u32 [#allocation13], 4
          %s791 = int_to_ptr.vmem [resolvable:$true] %s790
          %796 = dma.hbm_to_vmem [thread:$0]  %s14, 4096, %s791, [#allocation14], 256, 256, 16
        $region72: #{classifier_forward.1} parent=11 // pred_fallthru
          _
        // Predicated region
        $region73: #{classifier_forward.1} parent=11 // pred_check
          %p797 = pneg %p394
        $region74: #{classifier_forward.1} parent=11 // pred_check_branch
          %799 = sbr.rel (%p797) target = $region76
        $region75: #{classifier_forward.1} parent=11 // pred_region
          _
        $region76: #{classifier_forward.1} parent=11 // pred_fallthru
          _
        // Predicated region
        $region77: #{classifier_forward.1} parent=11 // pred_check
          %p800 = pneg %p415
        $region78: #{classifier_forward.1} parent=11 // pred_check_branch
          %802 = sbr.rel (%p800) target = $region80
        $region79: #{classifier_forward.1} parent=11 // pred_region
          %s804 = ssub.s32 2048, 2048
          %805 = vsyncadd [#allocation14], %s804
          %s806 = sshll.u32 [#allocation15], 4
          %s807 = int_to_ptr.vmem [resolvable:$true] %s806
          %812 = dma.hbm_to_vmem [thread:$0]  %s16, 2048, %s807, [#allocation14], 64, 64, 4
        $region80: #{classifier_forward.1} parent=11 // pred_fallthru
          _
        // Predicated region
        $region81: #{classifier_forward.1} parent=11 // pred_check
          %p813 = pneg %p436
        $region82: #{classifier_forward.1} parent=11 // pred_check_branch
          %815 = sbr.rel (%p813) target = $region84
        $region83: #{classifier_forward.1} parent=11 // pred_region
          _
        $region84: #{classifier_forward.1} parent=11 // pred_fallthru
          _
        // Predicated region
        $region85: #{classifier_forward.1} parent=11 // pred_check
          %p816 = pneg %p457
        $region86: #{classifier_forward.1} parent=11 // pred_check_branch
          %818 = sbr.rel (%p816) target = $region88
        $region87: #{classifier_forward.1} parent=11 // pred_region
          %s820 = ssub.s32 2048, 2048
          %821 = vsyncadd [#allocation17], %s820
          %s822 = sshll.u32 [#allocation16], 4
          %s823 = int_to_ptr.vmem [resolvable:$true] %s822
          %828 = dma.hbm_to_vmem [thread:$0]  %s18, 2048, %s823, [#allocation17], 64, 64, 4
        $region88: #{classifier_forward.1} parent=11 // pred_fallthru
          _
        // Predicated region
        $region89: #{classifier_forward.1} parent=11 // pred_check
          %p829 = pneg %p478
        $region90: #{classifier_forward.1} parent=11 // pred_check_branch
          %831 = sbr.rel (%p829) target = $region92
        $region91: #{classifier_forward.1} parent=11 // pred_region
          %s833 = ssub.s32 16, 16
          %834 = vsyncadd [#allocation17], %s833
          %s836 = sshll.u32 [#allocation18], 4
          %s837 = int_to_ptr.vmem [resolvable:$true] %s836
          %839 = dma.hbm_to_vmem [thread:$0]  %s19, 16, %s837, [#allocation17]
        $region92: #{classifier_forward.1} parent=11 // pred_fallthru
          _
        // Predicated region
        $region93: #{classifier_forward.1} parent=11 // pred_check
          %p840 = pneg %p499
        $region94: #{classifier_forward.1} parent=11 // pred_check_branch
          %842 = sbr.rel (%p840) target = $region96
        $region95: #{classifier_forward.1} parent=11 // pred_region
          _
        $region96: #{classifier_forward.1} parent=11 // pred_fallthru
          _
        // Predicated region
        $region97: #{classifier_forward.1} parent=11 // pred_check
          %p843 = pneg %p520
        $region98: #{classifier_forward.1} parent=11 // pred_check_branch
          %845 = sbr.rel (%p843) target = $region100
        $region99: #{classifier_forward.1} parent=11 // pred_region
          _
        $region100: #{classifier_forward.1} parent=11 // pred_fallthru
          _
        // Predicated region
        $region101: #{classifier_forward.1} parent=11 // pred_check
          %p846 = pneg %p541
        $region102: #{classifier_forward.1} parent=11 // pred_check_branch
          %848 = sbr.rel (%p846) target = $region104
        $region103: #{classifier_forward.1} parent=11 // pred_region
          %s850 = ssub.s32 1024, 1024
          %851 = vsyncadd [#allocation20], %s850
          %s852 = sshll.u32 [#allocation19], 4
          %s853 = int_to_ptr.vmem [resolvable:$true] %s852
          %858 = dma.hbm_to_vmem [thread:$0]  %s22, 1024, %s853, [#allocation20], 64, 64, 4
        $region104: #{classifier_forward.1} parent=11 // pred_fallthru
          _
        // Predicated region
        $region105: #{classifier_forward.1} parent=11 // pred_check
          %p859 = pneg %p562
        $region106: #{classifier_forward.1} parent=11 // pred_check_branch
          %861 = sbr.rel (%p859) target = $region108
        $region107: #{classifier_forward.1} parent=11 // pred_region
          _
        $region108: #{classifier_forward.1} parent=11 // pred_fallthru
          _
        // Predicated region
        $region109: #{classifier_forward.1} parent=11 // pred_check
          %p862 = pneg %p583
        $region110: #{classifier_forward.1} parent=11 // pred_check_branch
          %864 = sbr.rel (%p862) target = $region112
        $region111: #{classifier_forward.1} parent=11 // pred_region
          %s866 = ssub.s32 1024, 1024
          %867 = vsyncadd [#allocation20], %s866
          %s868 = sshll.u32 [#allocation21], 4
          %s869 = int_to_ptr.vmem [resolvable:$true] %s868
          %874 = dma.hbm_to_vmem [thread:$0]  %s24, 1024, %s869, [#allocation20], 64, 64, 4
        $region112: #{classifier_forward.1} parent=11 // pred_fallthru
          _
        // Predicated region
        $region113: #{classifier_forward.1} parent=11 // pred_check
          %p875 = pneg %p604
        $region114: #{classifier_forward.1} parent=11 // pred_check_branch
          %877 = sbr.rel (%p875) target = $region116
        $region115: #{classifier_forward.1} parent=11 // pred_region
          %s879 = ssub.s32 1024, 1024
          %880 = vsyncadd [#allocation23], %s879
          %s881 = sshll.u32 [#allocation22], 4
          %s882 = int_to_ptr.vmem [resolvable:$true] %s881
          %887 = dma.hbm_to_vmem [thread:$0]  %s25, 1024, %s882, [#allocation23], 64, 64, 4
        $region116: #{classifier_forward.1} parent=11 // pred_fallthru
          _
        // Predicated region
        $region117: #{classifier_forward.1} parent=11 // pred_check
          %p888 = pneg %p625
        $region118: #{classifier_forward.1} parent=11 // pred_check_branch
          %890 = sbr.rel (%p888) target = $region120
        $region119: #{classifier_forward.1} parent=11 // pred_region
          _
        $region120: #{classifier_forward.1} parent=11 // pred_fallthru
          _
      $region12: #{classifier_forward.1} parent=5 // pred_fallthru
        _
      %p891 = scmp.lt.s32.totalorder %s41, 2
      // Predicated region
      $region121: #{classifier_forward.1} parent=5 // pred_check
        %p892 = pneg %p891
      $region122: #{classifier_forward.1} parent=5 // pred_check_branch
        %894 = sbr.rel (%p892) target = $region124
      $region123: #{classifier_forward.1} parent=5 // pred_region
        _
      $region124: #{classifier_forward.1} parent=5 // pred_fallthru
        _
      %p895 = scmp.le.s32.totalorder 1, %s41
      %p896 = scmp.lt.s32.totalorder %s41, 3
      %p897 = pnand %p895, %p896
      %p898 = pneg %p897
      // Predicated region
      $region125: #{classifier_forward.1} parent=5 // pred_check
        _
      $region126: #{classifier_forward.1} parent=5 // pred_check_branch
        %900 = sbr.rel (%p897) target = $region128
      $region127: #{classifier_forward.1} parent=5 // pred_region
        %s901 = ssub.s32 %s41, 1
        // Predicated region
        $region129: #{classifier_forward.1} parent=127 // pred_check
          %p902 = pneg %p100
        $region130: #{classifier_forward.1} parent=127 // pred_check_branch
          %904 = sbr.rel (%p902) target = $region132
        $region131: #{classifier_forward.1} parent=127 // pred_region
          %905 = dma.done [#allocation3], 8192
        $region132: #{classifier_forward.1} parent=127 // pred_fallthru
          _
        // Predicated region
        $region133: #{classifier_forward.1} parent=127 // pred_check
          %p906 = pneg %p142
        $region134: #{classifier_forward.1} parent=127 // pred_check_branch
          %908 = sbr.rel (%p906) target = $region136
        $region135: #{classifier_forward.1} parent=127 // pred_region
          %909 = dma.done [#allocation5], 8192
        $region136: #{classifier_forward.1} parent=127 // pred_fallthru
          _
        // Predicated region
        $region137: #{classifier_forward.1} parent=127 // pred_check
          %p910 = pneg %p184
        $region138: #{classifier_forward.1} parent=127 // pred_check_branch
          %912 = sbr.rel (%p910) target = $region140
        $region139: #{classifier_forward.1} parent=127 // pred_region
          %913 = dma.done [#allocation5], 8192
        $region140: #{classifier_forward.1} parent=127 // pred_fallthru
          _
        // Predicated region
        $region141: #{classifier_forward.1} parent=127 // pred_check
          %p914 = pneg %p226
        $region142: #{classifier_forward.1} parent=127 // pred_check_branch
          %916 = sbr.rel (%p914) target = $region144
        $region143: #{classifier_forward.1} parent=127 // pred_region
          %917 = dma.done [#allocation8], 4096
        $region144: #{classifier_forward.1} parent=127 // pred_fallthru
          _
        // Predicated region
        $region145: #{classifier_forward.1} parent=127 // pred_check
          %p918 = pneg %p268
        $region146: #{classifier_forward.1} parent=127 // pred_check_branch
          %920 = sbr.rel (%p918) target = $region148
        $region147: #{classifier_forward.1} parent=127 // pred_region
          %921 = dma.done [#allocation8], 4096
        $region148: #{classifier_forward.1} parent=127 // pred_fallthru
          _
        // Predicated region
        $region149: #{classifier_forward.1} parent=127 // pred_check
          %p922 = pneg %p310
        $region150: #{classifier_forward.1} parent=127 // pred_check_branch
          %924 = sbr.rel (%p922) target = $region152
        $region151: #{classifier_forward.1} parent=127 // pred_region
          %925 = dma.done [#allocation11], 2048
        $region152: #{classifier_forward.1} parent=127 // pred_fallthru
          _
        // Predicated region
        $region153: #{classifier_forward.1} parent=127 // pred_check
          %p926 = pneg %p331
        $region154: #{classifier_forward.1} parent=127 // pred_check_branch
          %928 = sbr.rel (%p926) target = $region156
        $region155: #{classifier_forward.1} parent=127 // pred_region
          %929 = dma.done [#allocation11], 2048
        $region156: #{classifier_forward.1} parent=127 // pred_fallthru
          _
        // Predicated region
        $region157: #{classifier_forward.1} parent=127 // pred_check
          %p930 = pneg %p373
        $region158: #{classifier_forward.1} parent=127 // pred_check_branch
          %932 = sbr.rel (%p930) target = $region160
        $region159: #{classifier_forward.1} parent=127 // pred_region
          %933 = dma.done [#allocation14], 4096
        $region160: #{classifier_forward.1} parent=127 // pred_fallthru
          _
        // Predicated region
        $region161: #{classifier_forward.1} parent=127 // pred_check
          %p934 = pneg %p415
        $region162: #{classifier_forward.1} parent=127 // pred_check_branch
          %936 = sbr.rel (%p934) target = $region164
        $region163: #{classifier_forward.1} parent=127 // pred_region
          %937 = dma.done [#allocation14], 2048
        $region164: #{classifier_forward.1} parent=127 // pred_fallthru
          _
        // Predicated region
        $region165: #{classifier_forward.1} parent=127 // pred_check
          %p938 = pneg %p457
        $region166: #{classifier_forward.1} parent=127 // pred_check_branch
          %940 = sbr.rel (%p938) target = $region168
        $region167: #{classifier_forward.1} parent=127 // pred_region
          %941 = dma.done [#allocation17], 2048
        $region168: #{classifier_forward.1} parent=127 // pred_fallthru
          _
        // Predicated region
        $region169: #{classifier_forward.1} parent=127 // pred_check
          %p942 = pneg %p478
        $region170: #{classifier_forward.1} parent=127 // pred_check_branch
          %944 = sbr.rel (%p942) target = $region172
        $region171: #{classifier_forward.1} parent=127 // pred_region
          %945 = dma.done [#allocation17], 16
        $region172: #{classifier_forward.1} parent=127 // pred_fallthru
          _
        // Predicated region
        $region173: #{classifier_forward.1} parent=127 // pred_check
          %p946 = pneg %p541
        $region174: #{classifier_forward.1} parent=127 // pred_check_branch
          %948 = sbr.rel (%p946) target = $region176
        $region175: #{classifier_forward.1} parent=127 // pred_region
          %949 = dma.done [#allocation20], 1024
        $region176: #{classifier_forward.1} parent=127 // pred_fallthru
          _
        // Predicated region
        $region177: #{classifier_forward.1} parent=127 // pred_check
          %p950 = pneg %p583
        $region178: #{classifier_forward.1} parent=127 // pred_check_branch
          %952 = sbr.rel (%p950) target = $region180
        $region179: #{classifier_forward.1} parent=127 // pred_region
          %953 = dma.done [#allocation20], 1024
        $region180: #{classifier_forward.1} parent=127 // pred_fallthru
          _
        // Predicated region
        $region181: #{classifier_forward.1} parent=127 // pred_check
          %p954 = pneg %p604
        $region182: #{classifier_forward.1} parent=127 // pred_check_branch
          %956 = sbr.rel (%p954) target = $region184
        $region183: #{classifier_forward.1} parent=127 // pred_region
          %957 = dma.done [#allocation23], 1024
        $region184: #{classifier_forward.1} parent=127 // pred_fallthru
          _
        %p958 = scmp.lt.s32.totalorder %s51, 0
        %s959 = scalar_select %p958, %s51, 0
        %s960 = smul.addr %s959, 8
        %s961 = scalar_lea.vmem %s0, %s960
        %p962 = pneg %p79
        %p963 = pneg %p76
        %p964 = pneg %p100
        %p965 = pneg %p97
        %p966 = pneg %p121
        %p967 = pneg %p118
        %p968 = pneg %p142
        %p969 = pneg %p139
        %p970 = pneg %p163
        %p971 = pneg %p160
        %p972 = pneg %p184
        %p973 = pneg %p181
        %p974 = pneg %p205
        %p975 = pneg %p202
        %p976 = pneg %p226
        %p977 = pneg %p223
        %p978 = pneg %p247
        %p979 = pneg %p244
        %p980 = pneg %p268
        %p981 = pneg %p265
        %p982 = pneg %p289
        %p983 = pneg %p286
        %p984 = pneg %p310
        %p985 = pneg %p307
        %p986 = pneg %p331
        %p987 = pneg %p328
        %p988 = pneg %p352
        %p989 = pneg %p349
        %p990 = pneg %p373
        %p991 = pneg %p370
        %p992 = pneg %p394
        %p993 = pneg %p391
        %p994 = pneg %p415
        %p995 = pneg %p412
        %p996 = pneg %p436
        %p997 = pneg %p433
        %p998 = pneg %p457
        %p999 = pneg %p454
        %p1000 = pneg %p478
        %p1001 = pneg %p475
        %p1002 = pneg %p499
        %p1003 = pneg %p496
        %p1004 = pneg %p520
        %p1005 = pneg %p517
        %p1006 = pneg %p541
        %p1007 = pneg %p538
        %p1008 = pneg %p562
        %p1009 = pneg %p559
        %p1010 = pneg %p583
        %p1011 = pneg %p580
        %p1012 = pneg %p604
        %p1013 = pneg %p601
        %p1014 = pneg %p625
        %p1015 = pneg %p622
        %p1016 = pneg %p653
        %p1017 = pneg %p650
        %p1018 = scmp.lt.s32.totalorder %s51, 0
        %s1019 = scalar_select %p1018, %s51, 0
        %p1020 = scmp.lt.s32.totalorder %s50, 1
        %s1021 = scalar_select %p1020, %s50, 1
        %s1022 = smul.addr %s1019, 2
        %s1023 = sadd.s32 %s1021, %s1022
        %s1024 = smul.addr %s1023, 8
        %s1025 = scalar_lea.vmem %s27, %s1024
        %p1026 = scmp.lt.s32.totalorder %s51, 0
        %s1027 = scalar_select %p1026, %s51, 0
        %s1028 = smul.addr %s1027, 8
        %s1029 = scalar_lea.vmem %s0, %s1028
        %p1030 = scmp.lt.s32.totalorder %s51, 0
        %s1031 = scalar_select %p1030, %s51, 0
        %p1032 = scmp.lt.s32.totalorder %s50, 1
        %s1033 = scalar_select %p1032, %s50, 1
        %s1034 = smul.addr %s1031, 2
        %s1035 = sadd.s32 %s1033, %s1034
        %s1036 = smul.addr %s1035, 8
        %s1037 = scalar_lea.vmem %s27, %s1036
        %v1039 = vld [vmem:[%s1029] sm:$0xff]
        %v1040 = vpack.c.bf16 %v1039, %v1039
        %p1041 = scmp.eq.s32.totalorder %s50, 0
        // Predicated region
        $region185: #{classifier_forward.1} parent=127 // pred_check
          %p1042 = pneg %p1041
        $region186: #{classifier_forward.1} parent=127 // pred_check_branch
          %1044 = sbr.rel (%p1042) target = $region188
        $region187: #{classifier_forward.1} parent=127 // pred_region
          %v1045 = vld [vmem:[#allocation2] sm:$0xff]
          %v1046 = vld [vmem:[#allocation2 + $0x8] sm:$0xff]
          %v1047 = vld [vmem:[#allocation2 + $0x10] sm:$0xff]
          %v1048 = vld [vmem:[#allocation2 + $0x18] sm:$0xff]
          %v1049 = vld [vmem:[#allocation2 + $0x20] sm:$0xff]
          %v1050 = vld [vmem:[#allocation2 + $0x28] sm:$0xff]
          %v1051 = vld [vmem:[#allocation2 + $0x30] sm:$0xff]
          %v1052 = vld [vmem:[#allocation2 + $0x38] sm:$0xff]
          %v1053 = vld [vmem:[#allocation2 + $0x40] sm:$0xff]
          %v1054 = vld [vmem:[#allocation2 + $0x48] sm:$0xff]
          %v1055 = vld [vmem:[#allocation2 + $0x50] sm:$0xff]
          %v1056 = vld [vmem:[#allocation2 + $0x58] sm:$0xff]
          %v1057 = vld [vmem:[#allocation2 + $0x60] sm:$0xff]
          %v1058 = vld [vmem:[#allocation2 + $0x68] sm:$0xff]
          %v1059 = vld [vmem:[#allocation2 + $0x70] sm:$0xff]
          %v1060 = vld [vmem:[#allocation2 + $0x78] sm:$0xff]
          %v1061 = vld [vmem:[#allocation2 + $0x80] sm:$0xff]
          %v1062 = vld [vmem:[#allocation2 + $0x88] sm:$0xff]
          %v1063 = vld [vmem:[#allocation2 + $0x90] sm:$0xff]
          %v1064 = vld [vmem:[#allocation2 + $0x98] sm:$0xff]
          %v1065 = vld [vmem:[#allocation2 + $0xa0] sm:$0xff]
          %v1066 = vld [vmem:[#allocation2 + $0xa8] sm:$0xff]
          %v1067 = vld [vmem:[#allocation2 + $0xb0] sm:$0xff]
          %v1068 = vld [vmem:[#allocation2 + $0xb8] sm:$0xff]
          %v1069 = vld [vmem:[#allocation2 + $0xc0] sm:$0xff]
          %v1070 = vld [vmem:[#allocation2 + $0xc8] sm:$0xff]
          %v1071 = vld [vmem:[#allocation2 + $0xd0] sm:$0xff]
          %v1072 = vld [vmem:[#allocation2 + $0xd8] sm:$0xff]
          %v1073 = vld [vmem:[#allocation2 + $0xe0] sm:$0xff]
          %v1074 = vld [vmem:[#allocation2 + $0xe8] sm:$0xff]
          %v1075 = vld [vmem:[#allocation2 + $0xf0] sm:$0xff]
          %v1076 = vld [vmem:[#allocation2 + $0xf8] sm:$0xff]
          %v1077 = vld [vmem:[#allocation2 + $0x100] sm:$0xff]
          %v1078 = vld [vmem:[#allocation2 + $0x108] sm:$0xff]
          %v1079 = vld [vmem:[#allocation2 + $0x110] sm:$0xff]
          %v1080 = vld [vmem:[#allocation2 + $0x118] sm:$0xff]
          %v1081 = vld [vmem:[#allocation2 + $0x120] sm:$0xff]
          %v1082 = vld [vmem:[#allocation2 + $0x128] sm:$0xff]
          %v1083 = vld [vmem:[#allocation2 + $0x130] sm:$0xff]
          %v1084 = vld [vmem:[#allocation2 + $0x138] sm:$0xff]
          %v1085 = vld [vmem:[#allocation2 + $0x140] sm:$0xff]
          %v1086 = vld [vmem:[#allocation2 + $0x148] sm:$0xff]
          %v1087 = vld [vmem:[#allocation2 + $0x150] sm:$0xff]
          %v1088 = vld [vmem:[#allocation2 + $0x158] sm:$0xff]
          %v1089 = vld [vmem:[#allocation2 + $0x160] sm:$0xff]
          %v1090 = vld [vmem:[#allocation2 + $0x168] sm:$0xff]
          %v1091 = vld [vmem:[#allocation2 + $0x170] sm:$0xff]
          %v1092 = vld [vmem:[#allocation2 + $0x178] sm:$0xff]
          %v1093 = vld [vmem:[#allocation2 + $0x180] sm:$0xff]
          %v1094 = vld [vmem:[#allocation2 + $0x188] sm:$0xff]
          %v1095 = vld [vmem:[#allocation2 + $0x190] sm:$0xff]
          %v1096 = vld [vmem:[#allocation2 + $0x198] sm:$0xff]
          %v1097 = vld [vmem:[#allocation2 + $0x1a0] sm:$0xff]
          %v1098 = vld [vmem:[#allocation2 + $0x1a8] sm:$0xff]
          %v1099 = vld [vmem:[#allocation2 + $0x1b0] sm:$0xff]
          %v1100 = vld [vmem:[#allocation2 + $0x1b8] sm:$0xff]
          %v1101 = vld [vmem:[#allocation2 + $0x1c0] sm:$0xff]
          %v1102 = vld [vmem:[#allocation2 + $0x1c8] sm:$0xff]
          %v1103 = vld [vmem:[#allocation2 + $0x1d0] sm:$0xff]
          %v1104 = vld [vmem:[#allocation2 + $0x1d8] sm:$0xff]
          %v1105 = vld [vmem:[#allocation2 + $0x1e0] sm:$0xff]
          %v1106 = vld [vmem:[#allocation2 + $0x1e8] sm:$0xff]
          %v1107 = vld [vmem:[#allocation2 + $0x1f0] sm:$0xff]
          %v1108 = vld [vmem:[#allocation2 + $0x1f8] sm:$0xff]
          %v1109 = vld [vmem:[%s2] sm:$0xff]
          %v1111 = vlaneseq
          %v1112 = vshrl.u32 %v1111, 7
          %v1113 = vsub.s32 0, %v1112
          %v1114 = vrot.slane %v1109, %v1113
          %v1115 = vlaneseq
          %v1116 = vshrl.u32 %v1115, 7
          %v1117 = vsub.s32 1, %v1116
          %v1118 = vrot.slane %v1109, %v1117
          %v1119 = vlaneseq
          %v1120 = vshrl.u32 %v1119, 7
          %v1121 = vsub.s32 2, %v1120
          %v1122 = vrot.slane %v1109, %v1121
          %v1123 = vlaneseq
          %v1124 = vshrl.u32 %v1123, 7
          %v1125 = vsub.s32 3, %v1124
          %v1126 = vrot.slane %v1109, %v1125
          %v1127 = vlaneseq
          %v1128 = vshrl.u32 %v1127, 7
          %v1129 = vsub.s32 4, %v1128
          %v1130 = vrot.slane %v1109, %v1129
          %v1131 = vlaneseq
          %v1132 = vshrl.u32 %v1131, 7
          %v1133 = vsub.s32 5, %v1132
          %v1134 = vrot.slane %v1109, %v1133
          %v1135 = vlaneseq
          %v1136 = vshrl.u32 %v1135, 7
          %v1137 = vsub.s32 6, %v1136
          %v1138 = vrot.slane %v1109, %v1137
          %v1139 = vlaneseq
          %v1140 = vshrl.u32 %v1139, 7
          %v1141 = vsub.s32 7, %v1140
          %v1142 = vrot.slane %v1109, %v1141
          %v1215 = vunpack.c.l.b16 %v1045
          %v1216 = vunpack.c.h.b16 %v1045
          %v1217 = vunpack.c.l.b16 %v1046
          %v1218 = vunpack.c.h.b16 %v1046
          %v1219 = vunpack.c.l.b16 %v1047
          %v1220 = vunpack.c.h.b16 %v1047
          %v1221 = vunpack.c.l.b16 %v1048
          %v1222 = vunpack.c.h.b16 %v1048
          %v1223 = vunpack.c.l.b16 %v1049
          %v1224 = vunpack.c.h.b16 %v1049
          %v1225 = vunpack.c.l.b16 %v1050
          %v1226 = vunpack.c.h.b16 %v1050
          %v1227 = vunpack.c.l.b16 %v1051
          %v1228 = vunpack.c.h.b16 %v1051
          %v1229 = vunpack.c.l.b16 %v1052
          %v1230 = vunpack.c.h.b16 %v1052
          %v1231 = vunpack.c.l.b16 %v1053
          %v1232 = vunpack.c.h.b16 %v1053
          %v1233 = vunpack.c.l.b16 %v1054
          %v1234 = vunpack.c.h.b16 %v1054
          %v1235 = vunpack.c.l.b16 %v1055
          %v1236 = vunpack.c.h.b16 %v1055
          %v1237 = vunpack.c.l.b16 %v1056
          %v1238 = vunpack.c.h.b16 %v1056
          %v1239 = vunpack.c.l.b16 %v1057
          %v1240 = vunpack.c.h.b16 %v1057
          %v1241 = vunpack.c.l.b16 %v1058
          %v1242 = vunpack.c.h.b16 %v1058
          %v1243 = vunpack.c.l.b16 %v1059
          %v1244 = vunpack.c.h.b16 %v1059
          %v1245 = vunpack.c.l.b16 %v1060
          %v1246 = vunpack.c.h.b16 %v1060
          %v1247 = vunpack.c.l.b16 %v1061
          %v1248 = vunpack.c.h.b16 %v1061
          %v1249 = vunpack.c.l.b16 %v1062
          %v1250 = vunpack.c.h.b16 %v1062
          %v1251 = vunpack.c.l.b16 %v1063
          %v1252 = vunpack.c.h.b16 %v1063
          %v1253 = vunpack.c.l.b16 %v1064
          %v1254 = vunpack.c.h.b16 %v1064
          %v1255 = vunpack.c.l.b16 %v1065
          %v1256 = vunpack.c.h.b16 %v1065
          %v1257 = vunpack.c.l.b16 %v1066
          %v1258 = vunpack.c.h.b16 %v1066
          %v1259 = vunpack.c.l.b16 %v1067
          %v1260 = vunpack.c.h.b16 %v1067
          %v1261 = vunpack.c.l.b16 %v1068
          %v1262 = vunpack.c.h.b16 %v1068
          %v1263 = vunpack.c.l.b16 %v1069
          %v1264 = vunpack.c.h.b16 %v1069
          %v1265 = vunpack.c.l.b16 %v1070
          %v1266 = vunpack.c.h.b16 %v1070
          %v1267 = vunpack.c.l.b16 %v1071
          %v1268 = vunpack.c.h.b16 %v1071
          %v1269 = vunpack.c.l.b16 %v1072
          %v1270 = vunpack.c.h.b16 %v1072
          %v1271 = vunpack.c.l.b16 %v1073
          %v1272 = vunpack.c.h.b16 %v1073
          %v1273 = vunpack.c.l.b16 %v1074
          %v1274 = vunpack.c.h.b16 %v1074
          %v1275 = vunpack.c.l.b16 %v1075
          %v1276 = vunpack.c.h.b16 %v1075
          %v1277 = vunpack.c.l.b16 %v1076
          %v1278 = vunpack.c.h.b16 %v1076
          %v1279 = vunpack.c.l.b16 %v1077
          %v1280 = vunpack.c.h.b16 %v1077
          %v1281 = vunpack.c.l.b16 %v1078
          %v1282 = vunpack.c.h.b16 %v1078
          %v1283 = vunpack.c.l.b16 %v1079
          %v1284 = vunpack.c.h.b16 %v1079
          %v1285 = vunpack.c.l.b16 %v1080
          %v1286 = vunpack.c.h.b16 %v1080
          %v1287 = vunpack.c.l.b16 %v1081
          %v1288 = vunpack.c.h.b16 %v1081
          %v1289 = vunpack.c.l.b16 %v1082
          %v1290 = vunpack.c.h.b16 %v1082
          %v1291 = vunpack.c.l.b16 %v1083
          %v1292 = vunpack.c.h.b16 %v1083
          %v1293 = vunpack.c.l.b16 %v1084
          %v1294 = vunpack.c.h.b16 %v1084
          %v1295 = vunpack.c.l.b16 %v1085
          %v1296 = vunpack.c.h.b16 %v1085
          %v1297 = vunpack.c.l.b16 %v1086
          %v1298 = vunpack.c.h.b16 %v1086
          %v1299 = vunpack.c.l.b16 %v1087
          %v1300 = vunpack.c.h.b16 %v1087
          %v1301 = vunpack.c.l.b16 %v1088
          %v1302 = vunpack.c.h.b16 %v1088
          %v1303 = vunpack.c.l.b16 %v1089
          %v1304 = vunpack.c.h.b16 %v1089
          %v1305 = vunpack.c.l.b16 %v1090
          %v1306 = vunpack.c.h.b16 %v1090
          %v1307 = vunpack.c.l.b16 %v1091
          %v1308 = vunpack.c.h.b16 %v1091
          %v1309 = vunpack.c.l.b16 %v1092
          %v1310 = vunpack.c.h.b16 %v1092
          %v1311 = vunpack.c.l.b16 %v1093
          %v1312 = vunpack.c.h.b16 %v1093
          %v1313 = vunpack.c.l.b16 %v1094
          %v1314 = vunpack.c.h.b16 %v1094
          %v1315 = vunpack.c.l.b16 %v1095
          %v1316 = vunpack.c.h.b16 %v1095
          %v1317 = vunpack.c.l.b16 %v1096
          %v1318 = vunpack.c.h.b16 %v1096
          %v1319 = vunpack.c.l.b16 %v1097
          %v1320 = vunpack.c.h.b16 %v1097
          %v1321 = vunpack.c.l.b16 %v1098
          %v1322 = vunpack.c.h.b16 %v1098
          %v1323 = vunpack.c.l.b16 %v1099
          %v1324 = vunpack.c.h.b16 %v1099
          %v1325 = vunpack.c.l.b16 %v1100
          %v1326 = vunpack.c.h.b16 %v1100
          %v1327 = vunpack.c.l.b16 %v1101
          %v1328 = vunpack.c.h.b16 %v1101
          %v1329 = vunpack.c.l.b16 %v1102
          %v1330 = vunpack.c.h.b16 %v1102
          %v1331 = vunpack.c.l.b16 %v1103
          %v1332 = vunpack.c.h.b16 %v1103
          %v1333 = vunpack.c.l.b16 %v1104
          %v1334 = vunpack.c.h.b16 %v1104
          %v1335 = vunpack.c.l.b16 %v1105
          %v1336 = vunpack.c.h.b16 %v1105
          %v1337 = vunpack.c.l.b16 %v1106
          %v1338 = vunpack.c.h.b16 %v1106
          %v1339 = vunpack.c.l.b16 %v1107
          %v1340 = vunpack.c.h.b16 %v1107
          %v1341 = vunpack.c.l.b16 %v1108
          %v1342 = vunpack.c.h.b16 %v1108
          %v1343 = vpack.c.b16 %v1223, %v1215
          %v1344 = vpack.c.b16 %v1224, %v1216
          %v1345 = vpack.c.b16 %v1225, %v1217
          %v1346 = vpack.c.b16 %v1226, %v1218
          %v1347 = vpack.c.b16 %v1227, %v1219
          %v1348 = vpack.c.b16 %v1228, %v1220
          %v1349 = vpack.c.b16 %v1229, %v1221
          %v1350 = vpack.c.b16 %v1230, %v1222
          %v1351 = vpack.c.b16 %v1239, %v1231
          %v1352 = vpack.c.b16 %v1240, %v1232
          %v1353 = vpack.c.b16 %v1241, %v1233
          %v1354 = vpack.c.b16 %v1242, %v1234
          %v1355 = vpack.c.b16 %v1243, %v1235
          %v1356 = vpack.c.b16 %v1244, %v1236
          %v1357 = vpack.c.b16 %v1245, %v1237
          %v1358 = vpack.c.b16 %v1246, %v1238
          %v1359 = vpack.c.b16 %v1255, %v1247
          %v1360 = vpack.c.b16 %v1256, %v1248
          %v1361 = vpack.c.b16 %v1257, %v1249
          %v1362 = vpack.c.b16 %v1258, %v1250
          %v1363 = vpack.c.b16 %v1259, %v1251
          %v1364 = vpack.c.b16 %v1260, %v1252
          %v1365 = vpack.c.b16 %v1261, %v1253
          %v1366 = vpack.c.b16 %v1262, %v1254
          %v1367 = vpack.c.b16 %v1271, %v1263
          %v1368 = vpack.c.b16 %v1272, %v1264
          %v1369 = vpack.c.b16 %v1273, %v1265
          %v1370 = vpack.c.b16 %v1274, %v1266
          %v1371 = vpack.c.b16 %v1275, %v1267
          %v1372 = vpack.c.b16 %v1276, %v1268
          %v1373 = vpack.c.b16 %v1277, %v1269
          %v1374 = vpack.c.b16 %v1278, %v1270
          %v1375 = vpack.c.b16 %v1287, %v1279
          %v1376 = vpack.c.b16 %v1288, %v1280
          %v1377 = vpack.c.b16 %v1289, %v1281
          %v1378 = vpack.c.b16 %v1290, %v1282
          %v1379 = vpack.c.b16 %v1291, %v1283
          %v1380 = vpack.c.b16 %v1292, %v1284
          %v1381 = vpack.c.b16 %v1293, %v1285
          %v1382 = vpack.c.b16 %v1294, %v1286
          %v1383 = vpack.c.b16 %v1303, %v1295
          %v1384 = vpack.c.b16 %v1304, %v1296
          %v1385 = vpack.c.b16 %v1305, %v1297
          %v1386 = vpack.c.b16 %v1306, %v1298
          %v1387 = vpack.c.b16 %v1307, %v1299
          %v1388 = vpack.c.b16 %v1308, %v1300
          %v1389 = vpack.c.b16 %v1309, %v1301
          %v1390 = vpack.c.b16 %v1310, %v1302
          %v1391 = vpack.c.b16 %v1319, %v1311
          %v1392 = vpack.c.b16 %v1320, %v1312
          %v1393 = vpack.c.b16 %v1321, %v1313
          %v1394 = vpack.c.b16 %v1322, %v1314
          %v1395 = vpack.c.b16 %v1323, %v1315
          %v1396 = vpack.c.b16 %v1324, %v1316
          %v1397 = vpack.c.b16 %v1325, %v1317
          %v1398 = vpack.c.b16 %v1326, %v1318
          %v1399 = vpack.c.b16 %v1335, %v1327
          %v1400 = vpack.c.b16 %v1336, %v1328
          %v1401 = vpack.c.b16 %v1337, %v1329
          %v1402 = vpack.c.b16 %v1338, %v1330
          %v1403 = vpack.c.b16 %v1339, %v1331
          %v1404 = vpack.c.b16 %v1340, %v1332
          %v1405 = vpack.c.b16 %v1341, %v1333
          %v1406 = vpack.c.b16 %v1342, %v1334
          %1471 = vmatprep.subr.bf16.mxu0 %v1344
          %1472 = vmatpush1.bf16.msra.mxu0 %v1343
          %1473 = vmatprep.subr.bf16.mxu0 %v1352
          %1474 = vmatpush1.bf16.msra.mxu0 %v1351
          %1475 = vmatprep.subr.bf16.mxu0 %v1360
          %1476 = vmatpush1.bf16.msra.mxu0 %v1359
          %1477 = vmatprep.subr.bf16.mxu0 %v1368
          %1478 = vmatpush1.bf16.msra.mxu0 %v1367
          %1479 = vmatprep.subr.bf16.mxu0 %v1376
          %1480 = vmatpush1.bf16.msra.mxu0 %v1375
          %1481 = vmatprep.subr.bf16.mxu0 %v1384
          %1482 = vmatpush1.bf16.msra.mxu0 %v1383
          %1483 = vmatprep.subr.bf16.mxu0 %v1392
          %1484 = vmatpush1.bf16.msra.mxu0 %v1391
          %1485 = vmatprep.subr.bf16.mxu0 %v1400
          %1486 = vmatpush1.bf16.msra.mxu0 %v1399
          %1487 = vmatprep.subr.bf16.mxu0 0
          %1488 = vmatpush1.bf16.msra.mxu0 0
          %1489 = vmatprep.subr.bf16.mxu0 0
          %1490 = vmatpush1.bf16.msra.mxu0 0
          %1491 = vmatprep.subr.bf16.mxu0 0
          %1492 = vmatpush1.bf16.msra.mxu0 0
          %1493 = vmatprep.subr.bf16.mxu0 0
          %1494 = vmatpush1.bf16.msra.mxu0 0
          %1495 = vmatprep.subr.bf16.mxu0 0
          %1496 = vmatpush1.bf16.msra.mxu0 0
          %1497 = vmatprep.subr.bf16.mxu0 0
          %1498 = vmatpush1.bf16.msra.mxu0 0
          %1499 = vmatprep.subr.bf16.mxu0 0
          %1500 = vmatpush1.bf16.msra.mxu0 0
          %1501 = vmatprep.subr.bf16.mxu0 0
          %1502 = vmatpush1.bf16.msra.mxu0 0
          %1503 = vmatprep.mubr.bf16.mxu0 0
          %1504 = vmatmul.mubr.bf16.gmra.mrb[0].mxu0 %v1040
          %v1505 = vpop.f32.mrb[0].mxu0
          %v1506 = vadd.f32 %v1114, %v1505
          %v1507 = vpop.f32.mrb[0].mxu0
          %v1508 = vadd.f32 %v1118, %v1507
          %v1509 = vpop.f32.mrb[0].mxu0
          %v1510 = vpop.f32.mrb[0].mxu0
          %1511 = vdwg.mxu0
          %1512 = vmatprep.subr.bf16.mxu0 %v1346
          %1513 = vmatpush1.bf16.msra.mxu0 %v1345
          %1514 = vmatprep.subr.bf16.mxu0 %v1354
          %1515 = vmatpush1.bf16.msra.mxu0 %v1353
          %1516 = vmatprep.subr.bf16.mxu0 %v1362
          %1517 = vmatpush1.bf16.msra.mxu0 %v1361
          %1518 = vmatprep.subr.bf16.mxu0 %v1370
          %1519 = vmatpush1.bf16.msra.mxu0 %v1369
          %1520 = vmatprep.subr.bf16.mxu0 %v1378
          %1521 = vmatpush1.bf16.msra.mxu0 %v1377
          %1522 = vmatprep.subr.bf16.mxu0 %v1386
          %1523 = vmatpush1.bf16.msra.mxu0 %v1385
          %1524 = vmatprep.subr.bf16.mxu0 %v1394
          %1525 = vmatpush1.bf16.msra.mxu0 %v1393
          %1526 = vmatprep.subr.bf16.mxu0 %v1402
          %1527 = vmatpush1.bf16.msra.mxu0 %v1401
          %1528 = vmatprep.subr.bf16.mxu0 0
          %1529 = vmatpush1.bf16.msra.mxu0 0
          %1530 = vmatprep.subr.bf16.mxu0 0
          %1531 = vmatpush1.bf16.msra.mxu0 0
          %1532 = vmatprep.subr.bf16.mxu0 0
          %1533 = vmatpush1.bf16.msra.mxu0 0
          %1534 = vmatprep.subr.bf16.mxu0 0
          %1535 = vmatpush1.bf16.msra.mxu0 0
          %1536 = vmatprep.subr.bf16.mxu0 0
          %1537 = vmatpush1.bf16.msra.mxu0 0
          %1538 = vmatprep.subr.bf16.mxu0 0
          %1539 = vmatpush1.bf16.msra.mxu0 0
          %1540 = vmatprep.subr.bf16.mxu0 0
          %1541 = vmatpush1.bf16.msra.mxu0 0
          %1542 = vmatprep.subr.bf16.mxu0 0
          %1543 = vmatpush1.bf16.msra.mxu0 0
          %1544 = vmatprep.mubr.bf16.mxu0 0
          %1545 = vmatmul.mubr.bf16.gmra.mrb[0].mxu0 %v1040
          %v1546 = vpop.f32.mrb[0].mxu0
          %v1547 = vadd.f32 %v1122, %v1546
          %v1548 = vpop.f32.mrb[0].mxu0
          %v1549 = vadd.f32 %v1126, %v1548
          %v1550 = vpop.f32.mrb[0].mxu0
          %v1551 = vpop.f32.mrb[0].mxu0
          %1552 = vdwg.mxu0
          %1553 = vmatprep.subr.bf16.mxu0 %v1348
          %1554 = vmatpush1.bf16.msra.mxu0 %v1347
          %1555 = vmatprep.subr.bf16.mxu0 %v1356
          %1556 = vmatpush1.bf16.msra.mxu0 %v1355
          %1557 = vmatprep.subr.bf16.mxu0 %v1364
          %1558 = vmatpush1.bf16.msra.mxu0 %v1363
          %1559 = vmatprep.subr.bf16.mxu0 %v1372
          %1560 = vmatpush1.bf16.msra.mxu0 %v1371
          %1561 = vmatprep.subr.bf16.mxu0 %v1380
          %1562 = vmatpush1.bf16.msra.mxu0 %v1379
          %1563 = vmatprep.subr.bf16.mxu0 %v1388
          %1564 = vmatpush1.bf16.msra.mxu0 %v1387
          %1565 = vmatprep.subr.bf16.mxu0 %v1396
          %1566 = vmatpush1.bf16.msra.mxu0 %v1395
          %1567 = vmatprep.subr.bf16.mxu0 %v1404
          %1568 = vmatpush1.bf16.msra.mxu0 %v1403
          %1569 = vmatprep.subr.bf16.mxu0 0
          %1570 = vmatpush1.bf16.msra.mxu0 0
          %1571 = vmatprep.subr.bf16.mxu0 0
          %1572 = vmatpush1.bf16.msra.mxu0 0
          %1573 = vmatprep.subr.bf16.mxu0 0
          %1574 = vmatpush1.bf16.msra.mxu0 0
          %1575 = vmatprep.subr.bf16.mxu0 0
          %1576 = vmatpush1.bf16.msra.mxu0 0
          %1577 = vmatprep.subr.bf16.mxu0 0
          %1578 = vmatpush1.bf16.msra.mxu0 0
          %1579 = vmatprep.subr.bf16.mxu0 0
          %1580 = vmatpush1.bf16.msra.mxu0 0
          %1581 = vmatprep.subr.bf16.mxu0 0
          %1582 = vmatpush1.bf16.msra.mxu0 0
          %1583 = vmatprep.subr.bf16.mxu0 0
          %1584 = vmatpush1.bf16.msra.mxu0 0
          %1585 = vmatprep.mubr.bf16.mxu0 0
          %1586 = vmatmul.mubr.bf16.gmra.mrb[0].mxu0 %v1040
          %v1587 = vpop.f32.mrb[0].mxu0
          %v1588 = vadd.f32 %v1130, %v1587
          %v1589 = vpop.f32.mrb[0].mxu0
          %v1590 = vadd.f32 %v1134, %v1589
          %v1591 = vpop.f32.mrb[0].mxu0
          %v1592 = vpop.f32.mrb[0].mxu0
          %1593 = vdwg.mxu0
          %1594 = vmatprep.subr.bf16.mxu0 %v1350
          %1595 = vmatpush1.bf16.msra.mxu0 %v1349
          %1596 = vmatprep.subr.bf16.mxu0 %v1358
          %1597 = vmatpush1.bf16.msra.mxu0 %v1357
          %1598 = vmatprep.subr.bf16.mxu0 %v1366
          %1599 = vmatpush1.bf16.msra.mxu0 %v1365
          %1600 = vmatprep.subr.bf16.mxu0 %v1374
          %1601 = vmatpush1.bf16.msra.mxu0 %v1373
          %1602 = vmatprep.subr.bf16.mxu0 %v1382
          %1603 = vmatpush1.bf16.msra.mxu0 %v1381
          %1604 = vmatprep.subr.bf16.mxu0 %v1390
          %1605 = vmatpush1.bf16.msra.mxu0 %v1389
          %1606 = vmatprep.subr.bf16.mxu0 %v1398
          %1607 = vmatpush1.bf16.msra.mxu0 %v1397
          %1608 = vmatprep.subr.bf16.mxu0 %v1406
          %1609 = vmatpush1.bf16.msra.mxu0 %v1405
          %1610 = vmatprep.subr.bf16.mxu0 0
          %1611 = vmatpush1.bf16.msra.mxu0 0
          %1612 = vmatprep.subr.bf16.mxu0 0
          %1613 = vmatpush1.bf16.msra.mxu0 0
          %1614 = vmatprep.subr.bf16.mxu0 0
          %1615 = vmatpush1.bf16.msra.mxu0 0
          %1616 = vmatprep.subr.bf16.mxu0 0
          %1617 = vmatpush1.bf16.msra.mxu0 0
          %1618 = vmatprep.subr.bf16.mxu0 0
          %1619 = vmatpush1.bf16.msra.mxu0 0
          %1620 = vmatprep.subr.bf16.mxu0 0
          %1621 = vmatpush1.bf16.msra.mxu0 0
          %1622 = vmatprep.subr.bf16.mxu0 0
          %1623 = vmatpush1.bf16.msra.mxu0 0
          %1624 = vmatprep.subr.bf16.mxu0 0
          %1625 = vmatpush1.bf16.msra.mxu0 0
          %1626 = vmatprep.mubr.bf16.mxu0 0
          %1627 = vmatmul.mubr.bf16.gmra.mrb[0].mxu0 %v1040
          %v1628 = vpop.f32.mrb[0].mxu0
          %v1629 = vadd.f32 %v1138, %v1628
          %v1630 = vpop.f32.mrb[0].mxu0
          %v1631 = vadd.f32 %v1142, %v1630
          %v1632 = vpop.f32.mrb[0].mxu0
          %v1633 = vpop.f32.mrb[0].mxu0
          %1634 = vdwg.mxu0
          %v1635 = vmax.f32 %v1506, 0.0
          %v1636 = vmax.f32 %v1508, 0.0
          %v1637 = vmax.f32 %v1547, 0.0
          %v1638 = vmax.f32 %v1549, 0.0
          %v1639 = vmax.f32 %v1588, 0.0
          %v1640 = vmax.f32 %v1590, 0.0
          %v1641 = vmax.f32 %v1629, 0.0
          %v1642 = vmax.f32 %v1631, 0.0
          %v1643 = vpack.c.bf16 %v1635, %v1635
          %v1644 = vpack.c.bf16 %v1636, %v1636
          %v1645 = vpack.c.bf16 %v1637, %v1637
          %v1646 = vpack.c.bf16 %v1638, %v1638
          %v1647 = vpack.c.bf16 %v1639, %v1639
          %v1648 = vpack.c.bf16 %v1640, %v1640
          %v1649 = vpack.c.bf16 %v1641, %v1641
          %v1650 = vpack.c.bf16 %v1642, %v1642
          %v1651 = vld [vmem:[#allocation4] sm:$0xff]
          %v1652 = vld [vmem:[#allocation4 + $0x8] sm:$0xff]
          %v1653 = vld [vmem:[#allocation4 + $0x10] sm:$0xff]
          %v1654 = vld [vmem:[#allocation4 + $0x18] sm:$0xff]
          %v1655 = vld [vmem:[#allocation4 + $0x20] sm:$0xff]
          %v1656 = vld [vmem:[#allocation4 + $0x28] sm:$0xff]
          %v1657 = vld [vmem:[#allocation4 + $0x30] sm:$0xff]
          %v1658 = vld [vmem:[#allocation4 + $0x38] sm:$0xff]
          %v1659 = vld [vmem:[#allocation4 + $0x40] sm:$0xff]
          %v1660 = vld [vmem:[#allocation4 + $0x48] sm:$0xff]
          %v1661 = vld [vmem:[#allocation4 + $0x50] sm:$0xff]
          %v1662 = vld [vmem:[#allocation4 + $0x58] sm:$0xff]
          %v1663 = vld [vmem:[#allocation4 + $0x60] sm:$0xff]
          %v1664 = vld [vmem:[#allocation4 + $0x68] sm:$0xff]
          %v1665 = vld [vmem:[#allocation4 + $0x70] sm:$0xff]
          %v1666 = vld [vmem:[#allocation4 + $0x78] sm:$0xff]
          %v1667 = vld [vmem:[#allocation4 + $0x80] sm:$0xff]
          %v1668 = vld [vmem:[#allocation4 + $0x88] sm:$0xff]
          %v1669 = vld [vmem:[#allocation4 + $0x90] sm:$0xff]
          %v1670 = vld [vmem:[#allocation4 + $0x98] sm:$0xff]
          %v1671 = vld [vmem:[#allocation4 + $0xa0] sm:$0xff]
          %v1672 = vld [vmem:[#allocation4 + $0xa8] sm:$0xff]
          %v1673 = vld [vmem:[#allocation4 + $0xb0] sm:$0xff]
          %v1674 = vld [vmem:[#allocation4 + $0xb8] sm:$0xff]
          %v1675 = vld [vmem:[#allocation4 + $0xc0] sm:$0xff]
          %v1676 = vld [vmem:[#allocation4 + $0xc8] sm:$0xff]
          %v1677 = vld [vmem:[#allocation4 + $0xd0] sm:$0xff]
          %v1678 = vld [vmem:[#allocation4 + $0xd8] sm:$0xff]
          %v1679 = vld [vmem:[#allocation4 + $0xe0] sm:$0xff]
          %v1680 = vld [vmem:[#allocation4 + $0xe8] sm:$0xff]
          %v1681 = vld [vmem:[#allocation4 + $0xf0] sm:$0xff]
          %v1682 = vld [vmem:[#allocation4 + $0xf8] sm:$0xff]
          %v1683 = vld [vmem:[#allocation4 + $0x100] sm:$0xff]
          %v1684 = vld [vmem:[#allocation4 + $0x108] sm:$0xff]
          %v1685 = vld [vmem:[#allocation4 + $0x110] sm:$0xff]
          %v1686 = vld [vmem:[#allocation4 + $0x118] sm:$0xff]
          %v1687 = vld [vmem:[#allocation4 + $0x120] sm:$0xff]
          %v1688 = vld [vmem:[#allocation4 + $0x128] sm:$0xff]
          %v1689 = vld [vmem:[#allocation4 + $0x130] sm:$0xff]
          %v1690 = vld [vmem:[#allocation4 + $0x138] sm:$0xff]
          %v1691 = vld [vmem:[#allocation4 + $0x140] sm:$0xff]
          %v1692 = vld [vmem:[#allocation4 + $0x148] sm:$0xff]
          %v1693 = vld [vmem:[#allocation4 + $0x150] sm:$0xff]
          %v1694 = vld [vmem:[#allocation4 + $0x158] sm:$0xff]
          %v1695 = vld [vmem:[#allocation4 + $0x160] sm:$0xff]
          %v1696 = vld [vmem:[#allocation4 + $0x168] sm:$0xff]
          %v1697 = vld [vmem:[#allocation4 + $0x170] sm:$0xff]
          %v1698 = vld [vmem:[#allocation4 + $0x178] sm:$0xff]
          %v1699 = vld [vmem:[#allocation4 + $0x180] sm:$0xff]
          %v1700 = vld [vmem:[#allocation4 + $0x188] sm:$0xff]
          %v1701 = vld [vmem:[#allocation4 + $0x190] sm:$0xff]
          %v1702 = vld [vmem:[#allocation4 + $0x198] sm:$0xff]
          %v1703 = vld [vmem:[#allocation4 + $0x1a0] sm:$0xff]
          %v1704 = vld [vmem:[#allocation4 + $0x1a8] sm:$0xff]
          %v1705 = vld [vmem:[#allocation4 + $0x1b0] sm:$0xff]
          %v1706 = vld [vmem:[#allocation4 + $0x1b8] sm:$0xff]
          %v1707 = vld [vmem:[#allocation4 + $0x1c0] sm:$0xff]
          %v1708 = vld [vmem:[#allocation4 + $0x1c8] sm:$0xff]
          %v1709 = vld [vmem:[#allocation4 + $0x1d0] sm:$0xff]
          %v1710 = vld [vmem:[#allocation4 + $0x1d8] sm:$0xff]
          %v1711 = vld [vmem:[#allocation4 + $0x1e0] sm:$0xff]
          %v1712 = vld [vmem:[#allocation4 + $0x1e8] sm:$0xff]
          %v1713 = vld [vmem:[#allocation4 + $0x1f0] sm:$0xff]
          %v1714 = vld [vmem:[#allocation4 + $0x1f8] sm:$0xff]
          %v1715 = vld [vmem:[%s4] sm:$0x3]
          %v1717 = vlaneseq
          %v1718 = vshrl.u32 %v1717, 7
          %v1719 = vsub.s32 0, %v1718
          %v1720 = vrot.slane %v1715, %v1719
          %v1721 = vlaneseq
          %v1722 = vshrl.u32 %v1721, 7
          %v1723 = vsub.s32 1, %v1722
          %v1724 = vrot.slane %v1715, %v1723
          %v1791 = vunpack.c.l.b16 %v1651
          %v1792 = vunpack.c.h.b16 %v1651
          %v1793 = vunpack.c.l.b16 %v1652
          %v1794 = vunpack.c.h.b16 %v1652
          %v1795 = vunpack.c.l.b16 %v1653
          %v1796 = vunpack.c.h.b16 %v1653
          %v1797 = vunpack.c.l.b16 %v1654
          %v1798 = vunpack.c.h.b16 %v1654
          %v1799 = vunpack.c.l.b16 %v1655
          %v1800 = vunpack.c.h.b16 %v1655
          %v1801 = vunpack.c.l.b16 %v1656
          %v1802 = vunpack.c.h.b16 %v1656
          %v1803 = vunpack.c.l.b16 %v1657
          %v1804 = vunpack.c.h.b16 %v1657
          %v1805 = vunpack.c.l.b16 %v1658
          %v1806 = vunpack.c.h.b16 %v1658
          %v1807 = vunpack.c.l.b16 %v1659
          %v1808 = vunpack.c.h.b16 %v1659
          %v1809 = vunpack.c.l.b16 %v1660
          %v1810 = vunpack.c.h.b16 %v1660
          %v1811 = vunpack.c.l.b16 %v1661
          %v1812 = vunpack.c.h.b16 %v1661
          %v1813 = vunpack.c.l.b16 %v1662
          %v1814 = vunpack.c.h.b16 %v1662
          %v1815 = vunpack.c.l.b16 %v1663
          %v1816 = vunpack.c.h.b16 %v1663
          %v1817 = vunpack.c.l.b16 %v1664
          %v1818 = vunpack.c.h.b16 %v1664
          %v1819 = vunpack.c.l.b16 %v1665
          %v1820 = vunpack.c.h.b16 %v1665
          %v1821 = vunpack.c.l.b16 %v1666
          %v1822 = vunpack.c.h.b16 %v1666
          %v1823 = vunpack.c.l.b16 %v1667
          %v1824 = vunpack.c.h.b16 %v1667
          %v1825 = vunpack.c.l.b16 %v1668
          %v1826 = vunpack.c.h.b16 %v1668
          %v1827 = vunpack.c.l.b16 %v1669
          %v1828 = vunpack.c.h.b16 %v1669
          %v1829 = vunpack.c.l.b16 %v1670
          %v1830 = vunpack.c.h.b16 %v1670
          %v1831 = vunpack.c.l.b16 %v1671
          %v1832 = vunpack.c.h.b16 %v1671
          %v1833 = vunpack.c.l.b16 %v1672
          %v1834 = vunpack.c.h.b16 %v1672
          %v1835 = vunpack.c.l.b16 %v1673
          %v1836 = vunpack.c.h.b16 %v1673
          %v1837 = vunpack.c.l.b16 %v1674
          %v1838 = vunpack.c.h.b16 %v1674
          %v1839 = vunpack.c.l.b16 %v1675
          %v1840 = vunpack.c.h.b16 %v1675
          %v1841 = vunpack.c.l.b16 %v1676
          %v1842 = vunpack.c.h.b16 %v1676
          %v1843 = vunpack.c.l.b16 %v1677
          %v1844 = vunpack.c.h.b16 %v1677
          %v1845 = vunpack.c.l.b16 %v1678
          %v1846 = vunpack.c.h.b16 %v1678
          %v1847 = vunpack.c.l.b16 %v1679
          %v1848 = vunpack.c.h.b16 %v1679
          %v1849 = vunpack.c.l.b16 %v1680
          %v1850 = vunpack.c.h.b16 %v1680
          %v1851 = vunpack.c.l.b16 %v1681
          %v1852 = vunpack.c.h.b16 %v1681
          %v1853 = vunpack.c.l.b16 %v1682
          %v1854 = vunpack.c.h.b16 %v1682
          %v1855 = vunpack.c.l.b16 %v1683
          %v1856 = vunpack.c.h.b16 %v1683
          %v1857 = vunpack.c.l.b16 %v1684
          %v1858 = vunpack.c.h.b16 %v1684
          %v1859 = vunpack.c.l.b16 %v1685
          %v1860 = vunpack.c.h.b16 %v1685
          %v1861 = vunpack.c.l.b16 %v1686
          %v1862 = vunpack.c.h.b16 %v1686
          %v1863 = vunpack.c.l.b16 %v1687
          %v1864 = vunpack.c.h.b16 %v1687
          %v1865 = vunpack.c.l.b16 %v1688
          %v1866 = vunpack.c.h.b16 %v1688
          %v1867 = vunpack.c.l.b16 %v1689
          %v1868 = vunpack.c.h.b16 %v1689
          %v1869 = vunpack.c.l.b16 %v1690
          %v1870 = vunpack.c.h.b16 %v1690
          %v1871 = vunpack.c.l.b16 %v1691
          %v1872 = vunpack.c.h.b16 %v1691
          %v1873 = vunpack.c.l.b16 %v1692
          %v1874 = vunpack.c.h.b16 %v1692
          %v1875 = vunpack.c.l.b16 %v1693
          %v1876 = vunpack.c.h.b16 %v1693
          %v1877 = vunpack.c.l.b16 %v1694
          %v1878 = vunpack.c.h.b16 %v1694
          %v1879 = vunpack.c.l.b16 %v1695
          %v1880 = vunpack.c.h.b16 %v1695
          %v1881 = vunpack.c.l.b16 %v1696
          %v1882 = vunpack.c.h.b16 %v1696
          %v1883 = vunpack.c.l.b16 %v1697
          %v1884 = vunpack.c.h.b16 %v1697
          %v1885 = vunpack.c.l.b16 %v1698
          %v1886 = vunpack.c.h.b16 %v1698
          %v1887 = vunpack.c.l.b16 %v1699
          %v1888 = vunpack.c.h.b16 %v1699
          %v1889 = vunpack.c.l.b16 %v1700
          %v1890 = vunpack.c.h.b16 %v1700
          %v1891 = vunpack.c.l.b16 %v1701
          %v1892 = vunpack.c.h.b16 %v1701
          %v1893 = vunpack.c.l.b16 %v1702
          %v1894 = vunpack.c.h.b16 %v1702
          %v1895 = vunpack.c.l.b16 %v1703
          %v1896 = vunpack.c.h.b16 %v1703
          %v1897 = vunpack.c.l.b16 %v1704
          %v1898 = vunpack.c.h.b16 %v1704
          %v1899 = vunpack.c.l.b16 %v1705
          %v1900 = vunpack.c.h.b16 %v1705
          %v1901 = vunpack.c.l.b16 %v1706
          %v1902 = vunpack.c.h.b16 %v1706
          %v1903 = vunpack.c.l.b16 %v1707
          %v1904 = vunpack.c.h.b16 %v1707
          %v1905 = vunpack.c.l.b16 %v1708
          %v1906 = vunpack.c.h.b16 %v1708
          %v1907 = vunpack.c.l.b16 %v1709
          %v1908 = vunpack.c.h.b16 %v1709
          %v1909 = vunpack.c.l.b16 %v1710
          %v1910 = vunpack.c.h.b16 %v1710
          %v1911 = vunpack.c.l.b16 %v1711
          %v1912 = vunpack.c.h.b16 %v1711
          %v1913 = vunpack.c.l.b16 %v1712
          %v1914 = vunpack.c.h.b16 %v1712
          %v1915 = vunpack.c.l.b16 %v1713
          %v1916 = vunpack.c.h.b16 %v1713
          %v1917 = vunpack.c.l.b16 %v1714
          %v1918 = vunpack.c.h.b16 %v1714
          %v1919 = vpack.c.b16 %v1793, %v1791
          %v1920 = vpack.c.b16 %v1794, %v1792
          %v1921 = vpack.c.b16 %v1797, %v1795
          %v1922 = vpack.c.b16 %v1798, %v1796
          %v1923 = vpack.c.b16 %v1801, %v1799
          %v1924 = vpack.c.b16 %v1802, %v1800
          %v1925 = vpack.c.b16 %v1805, %v1803
          %v1926 = vpack.c.b16 %v1806, %v1804
          %v1927 = vpack.c.b16 %v1809, %v1807
          %v1928 = vpack.c.b16 %v1810, %v1808
          %v1929 = vpack.c.b16 %v1813, %v1811
          %v1930 = vpack.c.b16 %v1814, %v1812
          %v1931 = vpack.c.b16 %v1817, %v1815
          %v1932 = vpack.c.b16 %v1818, %v1816
          %v1933 = vpack.c.b16 %v1821, %v1819
          %v1934 = vpack.c.b16 %v1822, %v1820
          %v1935 = vpack.c.b16 %v1825, %v1823
          %v1936 = vpack.c.b16 %v1826, %v1824
          %v1937 = vpack.c.b16 %v1829, %v1827
          %v1938 = vpack.c.b16 %v1830, %v1828
          %v1939 = vpack.c.b16 %v1833, %v1831
          %v1940 = vpack.c.b16 %v1834, %v1832
          %v1941 = vpack.c.b16 %v1837, %v1835
          %v1942 = vpack.c.b16 %v1838, %v1836
          %v1943 = vpack.c.b16 %v1841, %v1839
          %v1944 = vpack.c.b16 %v1842, %v1840
          %v1945 = vpack.c.b16 %v1845, %v1843
          %v1946 = vpack.c.b16 %v1846, %v1844
          %v1947 = vpack.c.b16 %v1849, %v1847
          %v1948 = vpack.c.b16 %v1850, %v1848
          %v1949 = vpack.c.b16 %v1853, %v1851
          %v1950 = vpack.c.b16 %v1854, %v1852
          %v1951 = vpack.c.b16 %v1857, %v1855
          %v1952 = vpack.c.b16 %v1858, %v1856
          %v1953 = vpack.c.b16 %v1861, %v1859
          %v1954 = vpack.c.b16 %v1862, %v1860
          %v1955 = vpack.c.b16 %v1865, %v1863
          %v1956 = vpack.c.b16 %v1866, %v1864
          %v1957 = vpack.c.b16 %v1869, %v1867
          %v1958 = vpack.c.b16 %v1870, %v1868
          %v1959 = vpack.c.b16 %v1873, %v1871
          %v1960 = vpack.c.b16 %v1874, %v1872
          %v1961 = vpack.c.b16 %v1877, %v1875
          %v1962 = vpack.c.b16 %v1878, %v1876
          %v1963 = vpack.c.b16 %v1881, %v1879
          %v1964 = vpack.c.b16 %v1882, %v1880
          %v1965 = vpack.c.b16 %v1885, %v1883
          %v1966 = vpack.c.b16 %v1886, %v1884
          %v1967 = vpack.c.b16 %v1889, %v1887
          %v1968 = vpack.c.b16 %v1890, %v1888
          %v1969 = vpack.c.b16 %v1893, %v1891
          %v1970 = vpack.c.b16 %v1894, %v1892
          %v1971 = vpack.c.b16 %v1897, %v1895
          %v1972 = vpack.c.b16 %v1898, %v1896
          %v1973 = vpack.c.b16 %v1901, %v1899
          %v1974 = vpack.c.b16 %v1902, %v1900
          %v1975 = vpack.c.b16 %v1905, %v1903
          %v1976 = vpack.c.b16 %v1906, %v1904
          %v1977 = vpack.c.b16 %v1909, %v1907
          %v1978 = vpack.c.b16 %v1910, %v1908
          %v1979 = vpack.c.b16 %v1913, %v1911
          %v1980 = vpack.c.b16 %v1914, %v1912
          %v1981 = vpack.c.b16 %v1917, %v1915
          %v1982 = vpack.c.b16 %v1918, %v1916
          %2047 = vmatprep.subr.bf16.mxu0 %v1920
          %2048 = vmatpush1.bf16.msra.mxu0 %v1919
          %2049 = vmatprep.subr.bf16.mxu0 %v1922
          %2050 = vmatpush1.bf16.msra.mxu0 %v1921
          %2051 = vmatprep.subr.bf16.mxu0 %v1924
          %2052 = vmatpush1.bf16.msra.mxu0 %v1923
          %2053 = vmatprep.subr.bf16.mxu0 %v1926
          %2054 = vmatpush1.bf16.msra.mxu0 %v1925
          %2055 = vmatprep.subr.bf16.mxu0 %v1928
          %2056 = vmatpush1.bf16.msra.mxu0 %v1927
          %2057 = vmatprep.subr.bf16.mxu0 %v1930
          %2058 = vmatpush1.bf16.msra.mxu0 %v1929
          %2059 = vmatprep.subr.bf16.mxu0 %v1932
          %2060 = vmatpush1.bf16.msra.mxu0 %v1931
          %2061 = vmatprep.subr.bf16.mxu0 %v1934
          %2062 = vmatpush1.bf16.msra.mxu0 %v1933
          %2063 = vmatprep.subr.bf16.mxu0 %v1936
          %2064 = vmatpush1.bf16.msra.mxu0 %v1935
          %2065 = vmatprep.subr.bf16.mxu0 %v1938
          %2066 = vmatpush1.bf16.msra.mxu0 %v1937
          %2067 = vmatprep.subr.bf16.mxu0 %v1940
          %2068 = vmatpush1.bf16.msra.mxu0 %v1939
          %2069 = vmatprep.subr.bf16.mxu0 %v1942
          %2070 = vmatpush1.bf16.msra.mxu0 %v1941
          %2071 = vmatprep.subr.bf16.mxu0 %v1944
          %2072 = vmatpush1.bf16.msra.mxu0 %v1943
          %2073 = vmatprep.subr.bf16.mxu0 %v1946
          %2074 = vmatpush1.bf16.msra.mxu0 %v1945
          %2075 = vmatprep.subr.bf16.mxu0 %v1948
          %2076 = vmatpush1.bf16.msra.mxu0 %v1947
          %2077 = vmatprep.subr.bf16.mxu0 %v1950
          %2078 = vmatpush1.bf16.msra.mxu0 %v1949
          %2079 = vmatprep.mubr.bf16.mxu0 %v1644
          %2080 = vmatmul.mubr.bf16.gmra.mrb[0].mxu0 %v1643
          %v2081 = vpop.f32.mrb[0].mxu0
          %v2082 = vadd.f32 %v1720, %v2081
          %v2083 = vpop.f32.mrb[0].mxu0
          %v2084 = vadd.f32 %v1724, %v2083
          %v2085 = vpop.f32.mrb[0].mxu0
          %v2086 = vpop.f32.mrb[0].mxu0
          %2087 = vdwg.mxu0
          %2088 = vmatprep.subr.bf16.mxu0 %v1952
          %2089 = vmatpush1.bf16.msra.mxu0 %v1951
          %2090 = vmatprep.subr.bf16.mxu0 %v1954
          %2091 = vmatpush1.bf16.msra.mxu0 %v1953
          %2092 = vmatprep.subr.bf16.mxu0 %v1956
          %2093 = vmatpush1.bf16.msra.mxu0 %v1955
          %2094 = vmatprep.subr.bf16.mxu0 %v1958
          %2095 = vmatpush1.bf16.msra.mxu0 %v1957
          %2096 = vmatprep.subr.bf16.mxu0 %v1960
          %2097 = vmatpush1.bf16.msra.mxu0 %v1959
          %2098 = vmatprep.subr.bf16.mxu0 %v1962
          %2099 = vmatpush1.bf16.msra.mxu0 %v1961
          %2100 = vmatprep.subr.bf16.mxu0 %v1964
          %2101 = vmatpush1.bf16.msra.mxu0 %v1963
          %2102 = vmatprep.subr.bf16.mxu0 %v1966
          %2103 = vmatpush1.bf16.msra.mxu0 %v1965
          %2104 = vmatprep.subr.bf16.mxu0 %v1968
          %2105 = vmatpush1.bf16.msra.mxu0 %v1967
          %2106 = vmatprep.subr.bf16.mxu0 %v1970
          %2107 = vmatpush1.bf16.msra.mxu0 %v1969
          %2108 = vmatprep.subr.bf16.mxu0 %v1972
          %2109 = vmatpush1.bf16.msra.mxu0 %v1971
          %2110 = vmatprep.subr.bf16.mxu0 %v1974
          %2111 = vmatpush1.bf16.msra.mxu0 %v1973
          %2112 = vmatprep.subr.bf16.mxu0 %v1976
          %2113 = vmatpush1.bf16.msra.mxu0 %v1975
          %2114 = vmatprep.subr.bf16.mxu0 %v1978
          %2115 = vmatpush1.bf16.msra.mxu0 %v1977
          %2116 = vmatprep.subr.bf16.mxu0 %v1980
          %2117 = vmatpush1.bf16.msra.mxu0 %v1979
          %2118 = vmatprep.subr.bf16.mxu0 %v1982
          %2119 = vmatpush1.bf16.msra.mxu0 %v1981
          %2120 = vmatprep.mubr.bf16.mxu0 %v1646
          %2121 = vmatmul.mubr.bf16.gmra.mrb[0].mxu0 %v1645
          %v2122 = vpop.f32.mrb[0].mxu0
          %v2123 = vadd.f32 %v2082, %v2122
          %v2124 = vpop.f32.mrb[0].mxu0
          %v2125 = vadd.f32 %v2084, %v2124
          %v2126 = vpop.f32.mrb[0].mxu0
          %v2127 = vpop.f32.mrb[0].mxu0
          %2128 = vdwg.mxu0
          %v2129 = vmax.f32 %v2123, 0.0
          %v2130 = vmax.f32 %v2125, 0.0
          %v2131 = vpack.c.bf16 %v2129, %v2129
          %v2132 = vpack.c.bf16 %v2130, %v2130
          %v2133 = vld [vmem:[#allocation7] sm:$0xff]
          %v2134 = vld [vmem:[#allocation7 + $0x8] sm:$0xff]
          %v2135 = vld [vmem:[#allocation7 + $0x10] sm:$0xff]
          %v2136 = vld [vmem:[#allocation7 + $0x18] sm:$0xff]
          %v2137 = vld [vmem:[#allocation7 + $0x20] sm:$0xff]
          %v2138 = vld [vmem:[#allocation7 + $0x28] sm:$0xff]
          %v2139 = vld [vmem:[#allocation7 + $0x30] sm:$0xff]
          %v2140 = vld [vmem:[#allocation7 + $0x38] sm:$0xff]
          %v2141 = vld [vmem:[#allocation7 + $0x40] sm:$0xff]
          %v2142 = vld [vmem:[#allocation7 + $0x48] sm:$0xff]
          %v2143 = vld [vmem:[#allocation7 + $0x50] sm:$0xff]
          %v2144 = vld [vmem:[#allocation7 + $0x58] sm:$0xff]
          %v2145 = vld [vmem:[#allocation7 + $0x60] sm:$0xff]
          %v2146 = vld [vmem:[#allocation7 + $0x68] sm:$0xff]
          %v2147 = vld [vmem:[#allocation7 + $0x70] sm:$0xff]
          %v2148 = vld [vmem:[#allocation7 + $0x78] sm:$0xff]
          %v2149 = vld [vmem:[#allocation7 + $0x80] sm:$0xff]
          %v2150 = vld [vmem:[#allocation7 + $0x88] sm:$0xff]
          %v2151 = vld [vmem:[#allocation7 + $0x90] sm:$0xff]
          %v2152 = vld [vmem:[#allocation7 + $0x98] sm:$0xff]
          %v2153 = vld [vmem:[#allocation7 + $0xa0] sm:$0xff]
          %v2154 = vld [vmem:[#allocation7 + $0xa8] sm:$0xff]
          %v2155 = vld [vmem:[#allocation7 + $0xb0] sm:$0xff]
          %v2156 = vld [vmem:[#allocation7 + $0xb8] sm:$0xff]
          %v2157 = vld [vmem:[#allocation7 + $0xc0] sm:$0xff]
          %v2158 = vld [vmem:[#allocation7 + $0xc8] sm:$0xff]
          %v2159 = vld [vmem:[#allocation7 + $0xd0] sm:$0xff]
          %v2160 = vld [vmem:[#allocation7 + $0xd8] sm:$0xff]
          %v2161 = vld [vmem:[#allocation7 + $0xe0] sm:$0xff]
          %v2162 = vld [vmem:[#allocation7 + $0xe8] sm:$0xff]
          %v2163 = vld [vmem:[#allocation7 + $0xf0] sm:$0xff]
          %v2164 = vld [vmem:[#allocation7 + $0xf8] sm:$0xff]
          %v2165 = vld [vmem:[%s8] sm:$0x3]
          %v2167 = vlaneseq
          %v2168 = vshrl.u32 %v2167, 7
          %v2169 = vsub.s32 0, %v2168
          %v2170 = vrot.slane %v2165, %v2169
          %v2171 = vlaneseq
          %v2172 = vshrl.u32 %v2171, 7
          %v2173 = vsub.s32 1, %v2172
          %v2174 = vrot.slane %v2165, %v2173
          %v2209 = vunpack.c.l.b16 %v2133
          %v2210 = vunpack.c.h.b16 %v2133
          %v2211 = vunpack.c.l.b16 %v2134
          %v2212 = vunpack.c.h.b16 %v2134
          %v2213 = vunpack.c.l.b16 %v2135
          %v2214 = vunpack.c.h.b16 %v2135
          %v2215 = vunpack.c.l.b16 %v2136
          %v2216 = vunpack.c.h.b16 %v2136
          %v2217 = vunpack.c.l.b16 %v2137
          %v2218 = vunpack.c.h.b16 %v2137
          %v2219 = vunpack.c.l.b16 %v2138
          %v2220 = vunpack.c.h.b16 %v2138
          %v2221 = vunpack.c.l.b16 %v2139
          %v2222 = vunpack.c.h.b16 %v2139
          %v2223 = vunpack.c.l.b16 %v2140
          %v2224 = vunpack.c.h.b16 %v2140
          %v2225 = vunpack.c.l.b16 %v2141
          %v2226 = vunpack.c.h.b16 %v2141
          %v2227 = vunpack.c.l.b16 %v2142
          %v2228 = vunpack.c.h.b16 %v2142
          %v2229 = vunpack.c.l.b16 %v2143
          %v2230 = vunpack.c.h.b16 %v2143
          %v2231 = vunpack.c.l.b16 %v2144
          %v2232 = vunpack.c.h.b16 %v2144
          %v2233 = vunpack.c.l.b16 %v2145
          %v2234 = vunpack.c.h.b16 %v2145
          %v2235 = vunpack.c.l.b16 %v2146
          %v2236 = vunpack.c.h.b16 %v2146
          %v2237 = vunpack.c.l.b16 %v2147
          %v2238 = vunpack.c.h.b16 %v2147
          %v2239 = vunpack.c.l.b16 %v2148
          %v2240 = vunpack.c.h.b16 %v2148
          %v2241 = vunpack.c.l.b16 %v2149
          %v2242 = vunpack.c.h.b16 %v2149
          %v2243 = vunpack.c.l.b16 %v2150
          %v2244 = vunpack.c.h.b16 %v2150
          %v2245 = vunpack.c.l.b16 %v2151
          %v2246 = vunpack.c.h.b16 %v2151
          %v2247 = vunpack.c.l.b16 %v2152
          %v2248 = vunpack.c.h.b16 %v2152
          %v2249 = vunpack.c.l.b16 %v2153
          %v2250 = vunpack.c.h.b16 %v2153
          %v2251 = vunpack.c.l.b16 %v2154
          %v2252 = vunpack.c.h.b16 %v2154
          %v2253 = vunpack.c.l.b16 %v2155
          %v2254 = vunpack.c.h.b16 %v2155
          %v2255 = vunpack.c.l.b16 %v2156
          %v2256 = vunpack.c.h.b16 %v2156
          %v2257 = vunpack.c.l.b16 %v2157
          %v2258 = vunpack.c.h.b16 %v2157
          %v2259 = vunpack.c.l.b16 %v2158
          %v2260 = vunpack.c.h.b16 %v2158
          %v2261 = vunpack.c.l.b16 %v2159
          %v2262 = vunpack.c.h.b16 %v2159
          %v2263 = vunpack.c.l.b16 %v2160
          %v2264 = vunpack.c.h.b16 %v2160
          %v2265 = vunpack.c.l.b16 %v2161
          %v2266 = vunpack.c.h.b16 %v2161
          %v2267 = vunpack.c.l.b16 %v2162
          %v2268 = vunpack.c.h.b16 %v2162
          %v2269 = vunpack.c.l.b16 %v2163
          %v2270 = vunpack.c.h.b16 %v2163
          %v2271 = vunpack.c.l.b16 %v2164
          %v2272 = vunpack.c.h.b16 %v2164
          %v2273 = vpack.c.b16 %v2211, %v2209
          %v2274 = vpack.c.b16 %v2212, %v2210
          %v2275 = vpack.c.b16 %v2215, %v2213
          %v2276 = vpack.c.b16 %v2216, %v2214
          %v2277 = vpack.c.b16 %v2219, %v2217
          %v2278 = vpack.c.b16 %v2220, %v2218
          %v2279 = vpack.c.b16 %v2223, %v2221
          %v2280 = vpack.c.b16 %v2224, %v2222
          %v2281 = vpack.c.b16 %v2227, %v2225
          %v2282 = vpack.c.b16 %v2228, %v2226
          %v2283 = vpack.c.b16 %v2231, %v2229
          %v2284 = vpack.c.b16 %v2232, %v2230
          %v2285 = vpack.c.b16 %v2235, %v2233
          %v2286 = vpack.c.b16 %v2236, %v2234
          %v2287 = vpack.c.b16 %v2239, %v2237
          %v2288 = vpack.c.b16 %v2240, %v2238
          %v2289 = vpack.c.b16 %v2243, %v2241
          %v2290 = vpack.c.b16 %v2244, %v2242
          %v2291 = vpack.c.b16 %v2247, %v2245
          %v2292 = vpack.c.b16 %v2248, %v2246
          %v2293 = vpack.c.b16 %v2251, %v2249
          %v2294 = vpack.c.b16 %v2252, %v2250
          %v2295 = vpack.c.b16 %v2255, %v2253
          %v2296 = vpack.c.b16 %v2256, %v2254
          %v2297 = vpack.c.b16 %v2259, %v2257
          %v2298 = vpack.c.b16 %v2260, %v2258
          %v2299 = vpack.c.b16 %v2263, %v2261
          %v2300 = vpack.c.b16 %v2264, %v2262
          %v2301 = vpack.c.b16 %v2267, %v2265
          %v2302 = vpack.c.b16 %v2268, %v2266
          %v2303 = vpack.c.b16 %v2271, %v2269
          %v2304 = vpack.c.b16 %v2272, %v2270
          %2337 = vmatprep.subr.bf16.mxu0 %v2274
          %2338 = vmatpush1.bf16.msra.mxu0 %v2273
          %2339 = vmatprep.subr.bf16.mxu0 %v2276
          %2340 = vmatpush1.bf16.msra.mxu0 %v2275
          %2341 = vmatprep.subr.bf16.mxu0 %v2278
          %2342 = vmatpush1.bf16.msra.mxu0 %v2277
          %2343 = vmatprep.subr.bf16.mxu0 %v2280
          %2344 = vmatpush1.bf16.msra.mxu0 %v2279
          %2345 = vmatprep.subr.bf16.mxu0 %v2282
          %2346 = vmatpush1.bf16.msra.mxu0 %v2281
          %2347 = vmatprep.subr.bf16.mxu0 %v2284
          %2348 = vmatpush1.bf16.msra.mxu0 %v2283
          %2349 = vmatprep.subr.bf16.mxu0 %v2286
          %2350 = vmatpush1.bf16.msra.mxu0 %v2285
          %2351 = vmatprep.subr.bf16.mxu0 %v2288
          %2352 = vmatpush1.bf16.msra.mxu0 %v2287
          %2353 = vmatprep.subr.bf16.mxu0 %v2290
          %2354 = vmatpush1.bf16.msra.mxu0 %v2289
          %2355 = vmatprep.subr.bf16.mxu0 %v2292
          %2356 = vmatpush1.bf16.msra.mxu0 %v2291
          %2357 = vmatprep.subr.bf16.mxu0 %v2294
          %2358 = vmatpush1.bf16.msra.mxu0 %v2293
          %2359 = vmatprep.subr.bf16.mxu0 %v2296
          %2360 = vmatpush1.bf16.msra.mxu0 %v2295
          %2361 = vmatprep.subr.bf16.mxu0 %v2298
          %2362 = vmatpush1.bf16.msra.mxu0 %v2297
          %2363 = vmatprep.subr.bf16.mxu0 %v2300
          %2364 = vmatpush1.bf16.msra.mxu0 %v2299
          %2365 = vmatprep.subr.bf16.mxu0 %v2302
          %2366 = vmatpush1.bf16.msra.mxu0 %v2301
          %2367 = vmatprep.subr.bf16.mxu0 %v2304
          %2368 = vmatpush1.bf16.msra.mxu0 %v2303
          %2369 = vmatprep.mubr.bf16.mxu0 %v2132
          %2370 = vmatmul.mubr.bf16.gmra.mrb[0].mxu0 %v2131
          %v2371 = vpop.f32.mrb[0].mxu0
          %v2372 = vadd.f32 %v2170, %v2371
          %v2373 = vpop.f32.mrb[0].mxu0
          %v2374 = vadd.f32 %v2174, %v2373
          %v2375 = vpop.f32.mrb[0].mxu0
          %v2376 = vpop.f32.mrb[0].mxu0
          %2377 = vdwg.mxu0
          %v2378 = vmax.f32 %v2372, 0.0
          %v2379 = vmax.f32 %v2374, 0.0
          %v2380 = vpack.c.bf16 %v2378, %v2378
          %v2381 = vpack.c.bf16 %v2379, %v2379
          %v2382 = vld [vmem:[#allocation10] sm:$0xf]
          %v2383 = vld [vmem:[#allocation10 + $0x4] sm:$0xf]
          %v2384 = vld [vmem:[#allocation10 + $0x8] sm:$0xf]
          %v2385 = vld [vmem:[#allocation10 + $0xc] sm:$0xf]
          %v2386 = vld [vmem:[#allocation10 + $0x10] sm:$0xf]
          %v2387 = vld [vmem:[#allocation10 + $0x14] sm:$0xf]
          %v2388 = vld [vmem:[#allocation10 + $0x18] sm:$0xf]
          %v2389 = vld [vmem:[#allocation10 + $0x1c] sm:$0xf]
          %v2390 = vld [vmem:[#allocation10 + $0x20] sm:$0xf]
          %v2391 = vld [vmem:[#allocation10 + $0x24] sm:$0xf]
          %v2392 = vld [vmem:[#allocation10 + $0x28] sm:$0xf]
          %v2393 = vld [vmem:[#allocation10 + $0x2c] sm:$0xf]
          %v2394 = vld [vmem:[#allocation10 + $0x30] sm:$0xf]
          %v2395 = vld [vmem:[#allocation10 + $0x34] sm:$0xf]
          %v2396 = vld [vmem:[#allocation10 + $0x38] sm:$0xf]
          %v2397 = vld [vmem:[#allocation10 + $0x3c] sm:$0xf]
          %v2398 = vld [vmem:[#allocation10 + $0x40] sm:$0xf]
          %v2399 = vld [vmem:[#allocation10 + $0x44] sm:$0xf]
          %v2400 = vld [vmem:[#allocation10 + $0x48] sm:$0xf]
          %v2401 = vld [vmem:[#allocation10 + $0x4c] sm:$0xf]
          %v2402 = vld [vmem:[#allocation10 + $0x50] sm:$0xf]
          %v2403 = vld [vmem:[#allocation10 + $0x54] sm:$0xf]
          %v2404 = vld [vmem:[#allocation10 + $0x58] sm:$0xf]
          %v2405 = vld [vmem:[#allocation10 + $0x5c] sm:$0xf]
          %v2406 = vld [vmem:[#allocation10 + $0x60] sm:$0xf]
          %v2407 = vld [vmem:[#allocation10 + $0x64] sm:$0xf]
          %v2408 = vld [vmem:[#allocation10 + $0x68] sm:$0xf]
          %v2409 = vld [vmem:[#allocation10 + $0x6c] sm:$0xf]
          %v2410 = vld [vmem:[#allocation10 + $0x70] sm:$0xf]
          %v2411 = vld [vmem:[#allocation10 + $0x74] sm:$0xf]
          %v2412 = vld [vmem:[#allocation10 + $0x78] sm:$0xf]
          %v2413 = vld [vmem:[#allocation10 + $0x7c] sm:$0xf]
          %v2414 = vld [vmem:[#allocation6] sm:$0xff]
          %v2415 = vld [vmem:[#allocation6 + $0x8] sm:$0xff]
          %v2416 = vld [vmem:[#allocation6 + $0x10] sm:$0xff]
          %v2417 = vld [vmem:[#allocation6 + $0x18] sm:$0xff]
          %v2418 = vld [vmem:[#allocation6 + $0x20] sm:$0xff]
          %v2419 = vld [vmem:[#allocation6 + $0x28] sm:$0xff]
          %v2420 = vld [vmem:[#allocation6 + $0x30] sm:$0xff]
          %v2421 = vld [vmem:[#allocation6 + $0x38] sm:$0xff]
          %v2422 = vld [vmem:[#allocation6 + $0x40] sm:$0xff]
          %v2423 = vld [vmem:[#allocation6 + $0x48] sm:$0xff]
          %v2424 = vld [vmem:[#allocation6 + $0x50] sm:$0xff]
          %v2425 = vld [vmem:[#allocation6 + $0x58] sm:$0xff]
          %v2426 = vld [vmem:[#allocation6 + $0x60] sm:$0xff]
          %v2427 = vld [vmem:[#allocation6 + $0x68] sm:$0xff]
          %v2428 = vld [vmem:[#allocation6 + $0x70] sm:$0xff]
          %v2429 = vld [vmem:[#allocation6 + $0x78] sm:$0xff]
          %v2430 = vld [vmem:[#allocation6 + $0x80] sm:$0xff]
          %v2431 = vld [vmem:[#allocation6 + $0x88] sm:$0xff]
          %v2432 = vld [vmem:[#allocation6 + $0x90] sm:$0xff]
          %v2433 = vld [vmem:[#allocation6 + $0x98] sm:$0xff]
          %v2434 = vld [vmem:[#allocation6 + $0xa0] sm:$0xff]
          %v2435 = vld [vmem:[#allocation6 + $0xa8] sm:$0xff]
          %v2436 = vld [vmem:[#allocation6 + $0xb0] sm:$0xff]
          %v2437 = vld [vmem:[#allocation6 + $0xb8] sm:$0xff]
          %v2438 = vld [vmem:[#allocation6 + $0xc0] sm:$0xff]
          %v2439 = vld [vmem:[#allocation6 + $0xc8] sm:$0xff]
          %v2440 = vld [vmem:[#allocation6 + $0xd0] sm:$0xff]
          %v2441 = vld [vmem:[#allocation6 + $0xd8] sm:$0xff]
          %v2442 = vld [vmem:[#allocation6 + $0xe0] sm:$0xff]
          %v2443 = vld [vmem:[#allocation6 + $0xe8] sm:$0xff]
          %v2444 = vld [vmem:[#allocation6 + $0xf0] sm:$0xff]
          %v2445 = vld [vmem:[#allocation6 + $0xf8] sm:$0xff]
          %v2446 = vld [vmem:[#allocation6 + $0x100] sm:$0xff]
          %v2447 = vld [vmem:[#allocation6 + $0x108] sm:$0xff]
          %v2448 = vld [vmem:[#allocation6 + $0x110] sm:$0xff]
          %v2449 = vld [vmem:[#allocation6 + $0x118] sm:$0xff]
          %v2450 = vld [vmem:[#allocation6 + $0x120] sm:$0xff]
          %v2451 = vld [vmem:[#allocation6 + $0x128] sm:$0xff]
          %v2452 = vld [vmem:[#allocation6 + $0x130] sm:$0xff]
          %v2453 = vld [vmem:[#allocation6 + $0x138] sm:$0xff]
          %v2454 = vld [vmem:[#allocation6 + $0x140] sm:$0xff]
          %v2455 = vld [vmem:[#allocation6 + $0x148] sm:$0xff]
          %v2456 = vld [vmem:[#allocation6 + $0x150] sm:$0xff]
          %v2457 = vld [vmem:[#allocation6 + $0x158] sm:$0xff]
          %v2458 = vld [vmem:[#allocation6 + $0x160] sm:$0xff]
          %v2459 = vld [vmem:[#allocation6 + $0x168] sm:$0xff]
          %v2460 = vld [vmem:[#allocation6 + $0x170] sm:$0xff]
          %v2461 = vld [vmem:[#allocation6 + $0x178] sm:$0xff]
          %v2462 = vld [vmem:[#allocation6 + $0x180] sm:$0xff]
          %v2463 = vld [vmem:[#allocation6 + $0x188] sm:$0xff]
          %v2464 = vld [vmem:[#allocation6 + $0x190] sm:$0xff]
          %v2465 = vld [vmem:[#allocation6 + $0x198] sm:$0xff]
          %v2466 = vld [vmem:[#allocation6 + $0x1a0] sm:$0xff]
          %v2467 = vld [vmem:[#allocation6 + $0x1a8] sm:$0xff]
          %v2468 = vld [vmem:[#allocation6 + $0x1b0] sm:$0xff]
          %v2469 = vld [vmem:[#allocation6 + $0x1b8] sm:$0xff]
          %v2470 = vld [vmem:[#allocation6 + $0x1c0] sm:$0xff]
          %v2471 = vld [vmem:[#allocation6 + $0x1c8] sm:$0xff]
          %v2472 = vld [vmem:[#allocation6 + $0x1d0] sm:$0xff]
          %v2473 = vld [vmem:[#allocation6 + $0x1d8] sm:$0xff]
          %v2474 = vld [vmem:[#allocation6 + $0x1e0] sm:$0xff]
          %v2475 = vld [vmem:[#allocation6 + $0x1e8] sm:$0xff]
          %v2476 = vld [vmem:[#allocation6 + $0x1f0] sm:$0xff]
          %v2477 = vld [vmem:[#allocation6 + $0x1f8] sm:$0xff]
          %v2478 = vld [vmem:[%s6] sm:$0x3]
          %v2480 = vlaneseq
          %v2481 = vshrl.u32 %v2480, 7
          %v2482 = vsub.s32 0, %v2481
          %v2483 = vrot.slane %v2478, %v2482
          %v2484 = vlaneseq
          %v2485 = vshrl.u32 %v2484, 7
          %v2486 = vsub.s32 1, %v2485
          %v2487 = vrot.slane %v2478, %v2486
          %v2554 = vunpack.c.l.b16 %v2414
          %v2555 = vunpack.c.h.b16 %v2414
          %v2556 = vunpack.c.l.b16 %v2415
          %v2557 = vunpack.c.h.b16 %v2415
          %v2558 = vunpack.c.l.b16 %v2416
          %v2559 = vunpack.c.h.b16 %v2416
          %v2560 = vunpack.c.l.b16 %v2417
          %v2561 = vunpack.c.h.b16 %v2417
          %v2562 = vunpack.c.l.b16 %v2418
          %v2563 = vunpack.c.h.b16 %v2418
          %v2564 = vunpack.c.l.b16 %v2419
          %v2565 = vunpack.c.h.b16 %v2419
          %v2566 = vunpack.c.l.b16 %v2420
          %v2567 = vunpack.c.h.b16 %v2420
          %v2568 = vunpack.c.l.b16 %v2421
          %v2569 = vunpack.c.h.b16 %v2421
          %v2570 = vunpack.c.l.b16 %v2422
          %v2571 = vunpack.c.h.b16 %v2422
          %v2572 = vunpack.c.l.b16 %v2423
          %v2573 = vunpack.c.h.b16 %v2423
          %v2574 = vunpack.c.l.b16 %v2424
          %v2575 = vunpack.c.h.b16 %v2424
          %v2576 = vunpack.c.l.b16 %v2425
          %v2577 = vunpack.c.h.b16 %v2425
          %v2578 = vunpack.c.l.b16 %v2426
          %v2579 = vunpack.c.h.b16 %v2426
          %v2580 = vunpack.c.l.b16 %v2427
          %v2581 = vunpack.c.h.b16 %v2427
          %v2582 = vunpack.c.l.b16 %v2428
          %v2583 = vunpack.c.h.b16 %v2428
          %v2584 = vunpack.c.l.b16 %v2429
          %v2585 = vunpack.c.h.b16 %v2429
          %v2586 = vunpack.c.l.b16 %v2430
          %v2587 = vunpack.c.h.b16 %v2430
          %v2588 = vunpack.c.l.b16 %v2431
          %v2589 = vunpack.c.h.b16 %v2431
          %v2590 = vunpack.c.l.b16 %v2432
          %v2591 = vunpack.c.h.b16 %v2432
          %v2592 = vunpack.c.l.b16 %v2433
          %v2593 = vunpack.c.h.b16 %v2433
          %v2594 = vunpack.c.l.b16 %v2434
          %v2595 = vunpack.c.h.b16 %v2434
          %v2596 = vunpack.c.l.b16 %v2435
          %v2597 = vunpack.c.h.b16 %v2435
          %v2598 = vunpack.c.l.b16 %v2436
          %v2599 = vunpack.c.h.b16 %v2436
          %v2600 = vunpack.c.l.b16 %v2437
          %v2601 = vunpack.c.h.b16 %v2437
          %v2602 = vunpack.c.l.b16 %v2438
          %v2603 = vunpack.c.h.b16 %v2438
          %v2604 = vunpack.c.l.b16 %v2439
          %v2605 = vunpack.c.h.b16 %v2439
          %v2606 = vunpack.c.l.b16 %v2440
          %v2607 = vunpack.c.h.b16 %v2440
          %v2608 = vunpack.c.l.b16 %v2441
          %v2609 = vunpack.c.h.b16 %v2441
          %v2610 = vunpack.c.l.b16 %v2442
          %v2611 = vunpack.c.h.b16 %v2442
          %v2612 = vunpack.c.l.b16 %v2443
          %v2613 = vunpack.c.h.b16 %v2443
          %v2614 = vunpack.c.l.b16 %v2444
          %v2615 = vunpack.c.h.b16 %v2444
          %v2616 = vunpack.c.l.b16 %v2445
          %v2617 = vunpack.c.h.b16 %v2445
          %v2618 = vunpack.c.l.b16 %v2446
          %v2619 = vunpack.c.h.b16 %v2446
          %v2620 = vunpack.c.l.b16 %v2447
          %v2621 = vunpack.c.h.b16 %v2447
          %v2622 = vunpack.c.l.b16 %v2448
          %v2623 = vunpack.c.h.b16 %v2448
          %v2624 = vunpack.c.l.b16 %v2449
          %v2625 = vunpack.c.h.b16 %v2449
          %v2626 = vunpack.c.l.b16 %v2450
          %v2627 = vunpack.c.h.b16 %v2450
          %v2628 = vunpack.c.l.b16 %v2451
          %v2629 = vunpack.c.h.b16 %v2451
          %v2630 = vunpack.c.l.b16 %v2452
          %v2631 = vunpack.c.h.b16 %v2452
          %v2632 = vunpack.c.l.b16 %v2453
          %v2633 = vunpack.c.h.b16 %v2453
          %v2634 = vunpack.c.l.b16 %v2454
          %v2635 = vunpack.c.h.b16 %v2454
          %v2636 = vunpack.c.l.b16 %v2455
          %v2637 = vunpack.c.h.b16 %v2455
          %v2638 = vunpack.c.l.b16 %v2456
          %v2639 = vunpack.c.h.b16 %v2456
          %v2640 = vunpack.c.l.b16 %v2457
          %v2641 = vunpack.c.h.b16 %v2457
          %v2642 = vunpack.c.l.b16 %v2458
          %v2643 = vunpack.c.h.b16 %v2458
          %v2644 = vunpack.c.l.b16 %v2459
          %v2645 = vunpack.c.h.b16 %v2459
          %v2646 = vunpack.c.l.b16 %v2460
          %v2647 = vunpack.c.h.b16 %v2460
          %v2648 = vunpack.c.l.b16 %v2461
          %v2649 = vunpack.c.h.b16 %v2461
          %v2650 = vunpack.c.l.b16 %v2462
          %v2651 = vunpack.c.h.b16 %v2462
          %v2652 = vunpack.c.l.b16 %v2463
          %v2653 = vunpack.c.h.b16 %v2463
          %v2654 = vunpack.c.l.b16 %v2464
          %v2655 = vunpack.c.h.b16 %v2464
          %v2656 = vunpack.c.l.b16 %v2465
          %v2657 = vunpack.c.h.b16 %v2465
          %v2658 = vunpack.c.l.b16 %v2466
          %v2659 = vunpack.c.h.b16 %v2466
          %v2660 = vunpack.c.l.b16 %v2467
          %v2661 = vunpack.c.h.b16 %v2467
          %v2662 = vunpack.c.l.b16 %v2468
          %v2663 = vunpack.c.h.b16 %v2468
          %v2664 = vunpack.c.l.b16 %v2469
          %v2665 = vunpack.c.h.b16 %v2469
          %v2666 = vunpack.c.l.b16 %v2470
          %v2667 = vunpack.c.h.b16 %v2470
          %v2668 = vunpack.c.l.b16 %v2471
          %v2669 = vunpack.c.h.b16 %v2471
          %v2670 = vunpack.c.l.b16 %v2472
          %v2671 = vunpack.c.h.b16 %v2472
          %v2672 = vunpack.c.l.b16 %v2473
          %v2673 = vunpack.c.h.b16 %v2473
          %v2674 = vunpack.c.l.b16 %v2474
          %v2675 = vunpack.c.h.b16 %v2474
          %v2676 = vunpack.c.l.b16 %v2475
          %v2677 = vunpack.c.h.b16 %v2475
          %v2678 = vunpack.c.l.b16 %v2476
          %v2679 = vunpack.c.h.b16 %v2476
          %v2680 = vunpack.c.l.b16 %v2477
          %v2681 = vunpack.c.h.b16 %v2477
          %v2682 = vpack.c.b16 %v2556, %v2554
          %v2683 = vpack.c.b16 %v2557, %v2555
          %v2684 = vpack.c.b16 %v2560, %v2558
          %v2685 = vpack.c.b16 %v2561, %v2559
          %v2686 = vpack.c.b16 %v2564, %v2562
          %v2687 = vpack.c.b16 %v2565, %v2563
          %v2688 = vpack.c.b16 %v2568, %v2566
          %v2689 = vpack.c.b16 %v2569, %v2567
          %v2690 = vpack.c.b16 %v2572, %v2570
          %v2691 = vpack.c.b16 %v2573, %v2571
          %v2692 = vpack.c.b16 %v2576, %v2574
          %v2693 = vpack.c.b16 %v2577, %v2575
          %v2694 = vpack.c.b16 %v2580, %v2578
          %v2695 = vpack.c.b16 %v2581, %v2579
          %v2696 = vpack.c.b16 %v2584, %v2582
          %v2697 = vpack.c.b16 %v2585, %v2583
          %v2698 = vpack.c.b16 %v2588, %v2586
          %v2699 = vpack.c.b16 %v2589, %v2587
          %v2700 = vpack.c.b16 %v2592, %v2590
          %v2701 = vpack.c.b16 %v2593, %v2591
          %v2702 = vpack.c.b16 %v2596, %v2594
          %v2703 = vpack.c.b16 %v2597, %v2595
          %v2704 = vpack.c.b16 %v2600, %v2598
          %v2705 = vpack.c.b16 %v2601, %v2599
          %v2706 = vpack.c.b16 %v2604, %v2602
          %v2707 = vpack.c.b16 %v2605, %v2603
          %v2708 = vpack.c.b16 %v2608, %v2606
          %v2709 = vpack.c.b16 %v2609, %v2607
          %v2710 = vpack.c.b16 %v2612, %v2610
          %v2711 = vpack.c.b16 %v2613, %v2611
          %v2712 = vpack.c.b16 %v2616, %v2614
          %v2713 = vpack.c.b16 %v2617, %v2615
          %v2714 = vpack.c.b16 %v2620, %v2618
          %v2715 = vpack.c.b16 %v2621, %v2619
          %v2716 = vpack.c.b16 %v2624, %v2622
          %v2717 = vpack.c.b16 %v2625, %v2623
          %v2718 = vpack.c.b16 %v2628, %v2626
          %v2719 = vpack.c.b16 %v2629, %v2627
          %v2720 = vpack.c.b16 %v2632, %v2630
          %v2721 = vpack.c.b16 %v2633, %v2631
          %v2722 = vpack.c.b16 %v2636, %v2634
          %v2723 = vpack.c.b16 %v2637, %v2635
          %v2724 = vpack.c.b16 %v2640, %v2638
          %v2725 = vpack.c.b16 %v2641, %v2639
          %v2726 = vpack.c.b16 %v2644, %v2642
          %v2727 = vpack.c.b16 %v2645, %v2643
          %v2728 = vpack.c.b16 %v2648, %v2646
          %v2729 = vpack.c.b16 %v2649, %v2647
          %v2730 = vpack.c.b16 %v2652, %v2650
          %v2731 = vpack.c.b16 %v2653, %v2651
          %v2732 = vpack.c.b16 %v2656, %v2654
          %v2733 = vpack.c.b16 %v2657, %v2655
          %v2734 = vpack.c.b16 %v2660, %v2658
          %v2735 = vpack.c.b16 %v2661, %v2659
          %v2736 = vpack.c.b16 %v2664, %v2662
          %v2737 = vpack.c.b16 %v2665, %v2663
          %v2738 = vpack.c.b16 %v2668, %v2666
          %v2739 = vpack.c.b16 %v2669, %v2667
          %v2740 = vpack.c.b16 %v2672, %v2670
          %v2741 = vpack.c.b16 %v2673, %v2671
          %v2742 = vpack.c.b16 %v2676, %v2674
          %v2743 = vpack.c.b16 %v2677, %v2675
          %v2744 = vpack.c.b16 %v2680, %v2678
          %v2745 = vpack.c.b16 %v2681, %v2679
          %2810 = vmatprep.subr.bf16.mxu0 %v2683
          %2811 = vmatpush1.bf16.msra.mxu0 %v2682
          %2812 = vmatprep.subr.bf16.mxu0 %v2685
          %2813 = vmatpush1.bf16.msra.mxu0 %v2684
          %2814 = vmatprep.subr.bf16.mxu0 %v2687
          %2815 = vmatpush1.bf16.msra.mxu0 %v2686
          %2816 = vmatprep.subr.bf16.mxu0 %v2689
          %2817 = vmatpush1.bf16.msra.mxu0 %v2688
          %2818 = vmatprep.subr.bf16.mxu0 %v2691
          %2819 = vmatpush1.bf16.msra.mxu0 %v2690
          %2820 = vmatprep.subr.bf16.mxu0 %v2693
          %2821 = vmatpush1.bf16.msra.mxu0 %v2692
          %2822 = vmatprep.subr.bf16.mxu0 %v2695
          %2823 = vmatpush1.bf16.msra.mxu0 %v2694
          %2824 = vmatprep.subr.bf16.mxu0 %v2697
          %2825 = vmatpush1.bf16.msra.mxu0 %v2696
          %2826 = vmatprep.subr.bf16.mxu0 %v2699
          %2827 = vmatpush1.bf16.msra.mxu0 %v2698
          %2828 = vmatprep.subr.bf16.mxu0 %v2701
          %2829 = vmatpush1.bf16.msra.mxu0 %v2700
          %2830 = vmatprep.subr.bf16.mxu0 %v2703
          %2831 = vmatpush1.bf16.msra.mxu0 %v2702
          %2832 = vmatprep.subr.bf16.mxu0 %v2705
          %2833 = vmatpush1.bf16.msra.mxu0 %v2704
          %2834 = vmatprep.subr.bf16.mxu0 %v2707
          %2835 = vmatpush1.bf16.msra.mxu0 %v2706
          %2836 = vmatprep.subr.bf16.mxu0 %v2709
          %2837 = vmatpush1.bf16.msra.mxu0 %v2708
          %2838 = vmatprep.subr.bf16.mxu0 %v2711
          %2839 = vmatpush1.bf16.msra.mxu0 %v2710
          %2840 = vmatprep.subr.bf16.mxu0 %v2713
          %2841 = vmatpush1.bf16.msra.mxu0 %v2712
          %2842 = vmatprep.mubr.bf16.mxu0 %v1648
          %2843 = vmatmul.mubr.bf16.gmra.mrb[0].mxu0 %v1647
          %v2844 = vpop.f32.mrb[0].mxu0
          %v2845 = vadd.f32 %v2483, %v2844
          %v2846 = vpop.f32.mrb[0].mxu0
          %v2847 = vadd.f32 %v2487, %v2846
          %v2848 = vpop.f32.mrb[0].mxu0
          %v2849 = vpop.f32.mrb[0].mxu0
          %2850 = vdwg.mxu0
          %2851 = vmatprep.subr.bf16.mxu0 %v2715
          %2852 = vmatpush1.bf16.msra.mxu0 %v2714
          %2853 = vmatprep.subr.bf16.mxu0 %v2717
          %2854 = vmatpush1.bf16.msra.mxu0 %v2716
          %2855 = vmatprep.subr.bf16.mxu0 %v2719
          %2856 = vmatpush1.bf16.msra.mxu0 %v2718
          %2857 = vmatprep.subr.bf16.mxu0 %v2721
          %2858 = vmatpush1.bf16.msra.mxu0 %v2720
          %2859 = vmatprep.subr.bf16.mxu0 %v2723
          %2860 = vmatpush1.bf16.msra.mxu0 %v2722
          %2861 = vmatprep.subr.bf16.mxu0 %v2725
          %2862 = vmatpush1.bf16.msra.mxu0 %v2724
          %2863 = vmatprep.subr.bf16.mxu0 %v2727
          %2864 = vmatpush1.bf16.msra.mxu0 %v2726
          %2865 = vmatprep.subr.bf16.mxu0 %v2729
          %2866 = vmatpush1.bf16.msra.mxu0 %v2728
          %2867 = vmatprep.subr.bf16.mxu0 %v2731
          %2868 = vmatpush1.bf16.msra.mxu0 %v2730
          %2869 = vmatprep.subr.bf16.mxu0 %v2733
          %2870 = vmatpush1.bf16.msra.mxu0 %v2732
          %2871 = vmatprep.subr.bf16.mxu0 %v2735
          %2872 = vmatpush1.bf16.msra.mxu0 %v2734
          %2873 = vmatprep.subr.bf16.mxu0 %v2737
          %2874 = vmatpush1.bf16.msra.mxu0 %v2736
          %2875 = vmatprep.subr.bf16.mxu0 %v2739
          %2876 = vmatpush1.bf16.msra.mxu0 %v2738
          %2877 = vmatprep.subr.bf16.mxu0 %v2741
          %2878 = vmatpush1.bf16.msra.mxu0 %v2740
          %2879 = vmatprep.subr.bf16.mxu0 %v2743
          %2880 = vmatpush1.bf16.msra.mxu0 %v2742
          %2881 = vmatprep.subr.bf16.mxu0 %v2745
          %2882 = vmatpush1.bf16.msra.mxu0 %v2744
          %2883 = vmatprep.mubr.bf16.mxu0 %v1650
          %2884 = vmatmul.mubr.bf16.gmra.mrb[0].mxu0 %v1649
          %v2885 = vpop.f32.mrb[0].mxu0
          %v2886 = vadd.f32 %v2845, %v2885
          %v2887 = vpop.f32.mrb[0].mxu0
          %v2888 = vadd.f32 %v2847, %v2887
          %v2889 = vpop.f32.mrb[0].mxu0
          %v2890 = vpop.f32.mrb[0].mxu0
          %2891 = vdwg.mxu0
          %v2892 = vmax.f32 %v2886, 0.0
          %v2893 = vmax.f32 %v2888, 0.0
          %v2894 = vpack.c.bf16 %v2892, %v2892
          %v2895 = vpack.c.bf16 %v2893, %v2893
          %v2896 = vld [vmem:[#allocation9] sm:$0xff]
          %v2897 = vld [vmem:[#allocation9 + $0x8] sm:$0xff]
          %v2898 = vld [vmem:[#allocation9 + $0x10] sm:$0xff]
          %v2899 = vld [vmem:[#allocation9 + $0x18] sm:$0xff]
          %v2900 = vld [vmem:[#allocation9 + $0x20] sm:$0xff]
          %v2901 = vld [vmem:[#allocation9 + $0x28] sm:$0xff]
          %v2902 = vld [vmem:[#allocation9 + $0x30] sm:$0xff]
          %v2903 = vld [vmem:[#allocation9 + $0x38] sm:$0xff]
          %v2904 = vld [vmem:[#allocation9 + $0x40] sm:$0xff]
          %v2905 = vld [vmem:[#allocation9 + $0x48] sm:$0xff]
          %v2906 = vld [vmem:[#allocation9 + $0x50] sm:$0xff]
          %v2907 = vld [vmem:[#allocation9 + $0x58] sm:$0xff]
          %v2908 = vld [vmem:[#allocation9 + $0x60] sm:$0xff]
          %v2909 = vld [vmem:[#allocation9 + $0x68] sm:$0xff]
          %v2910 = vld [vmem:[#allocation9 + $0x70] sm:$0xff]
          %v2911 = vld [vmem:[#allocation9 + $0x78] sm:$0xff]
          %v2912 = vld [vmem:[#allocation9 + $0x80] sm:$0xff]
          %v2913 = vld [vmem:[#allocation9 + $0x88] sm:$0xff]
          %v2914 = vld [vmem:[#allocation9 + $0x90] sm:$0xff]
          %v2915 = vld [vmem:[#allocation9 + $0x98] sm:$0xff]
          %v2916 = vld [vmem:[#allocation9 + $0xa0] sm:$0xff]
          %v2917 = vld [vmem:[#allocation9 + $0xa8] sm:$0xff]
          %v2918 = vld [vmem:[#allocation9 + $0xb0] sm:$0xff]
          %v2919 = vld [vmem:[#allocation9 + $0xb8] sm:$0xff]
          %v2920 = vld [vmem:[#allocation9 + $0xc0] sm:$0xff]
          %v2921 = vld [vmem:[#allocation9 + $0xc8] sm:$0xff]
          %v2922 = vld [vmem:[#allocation9 + $0xd0] sm:$0xff]
          %v2923 = vld [vmem:[#allocation9 + $0xd8] sm:$0xff]
          %v2924 = vld [vmem:[#allocation9 + $0xe0] sm:$0xff]
          %v2925 = vld [vmem:[#allocation9 + $0xe8] sm:$0xff]
          %v2926 = vld [vmem:[#allocation9 + $0xf0] sm:$0xff]
          %v2927 = vld [vmem:[#allocation9 + $0xf8] sm:$0xff]
          %v2928 = vld [vmem:[%s10] sm:$0x3]
          %v2930 = vlaneseq
          %v2931 = vshrl.u32 %v2930, 7
          %v2932 = vsub.s32 0, %v2931
          %v2933 = vrot.slane %v2928, %v2932
          %v2934 = vlaneseq
          %v2935 = vshrl.u32 %v2934, 7
          %v2936 = vsub.s32 1, %v2935
          %v2937 = vrot.slane %v2928, %v2936
          %v2972 = vunpack.c.l.b16 %v2896
          %v2973 = vunpack.c.h.b16 %v2896
          %v2974 = vunpack.c.l.b16 %v2897
          %v2975 = vunpack.c.h.b16 %v2897
          %v2976 = vunpack.c.l.b16 %v2898
          %v2977 = vunpack.c.h.b16 %v2898
          %v2978 = vunpack.c.l.b16 %v2899
          %v2979 = vunpack.c.h.b16 %v2899
          %v2980 = vunpack.c.l.b16 %v2900
          %v2981 = vunpack.c.h.b16 %v2900
          %v2982 = vunpack.c.l.b16 %v2901
          %v2983 = vunpack.c.h.b16 %v2901
          %v2984 = vunpack.c.l.b16 %v2902
          %v2985 = vunpack.c.h.b16 %v2902
          %v2986 = vunpack.c.l.b16 %v2903
          %v2987 = vunpack.c.h.b16 %v2903
          %v2988 = vunpack.c.l.b16 %v2904
          %v2989 = vunpack.c.h.b16 %v2904
          %v2990 = vunpack.c.l.b16 %v2905
          %v2991 = vunpack.c.h.b16 %v2905
          %v2992 = vunpack.c.l.b16 %v2906
          %v2993 = vunpack.c.h.b16 %v2906
          %v2994 = vunpack.c.l.b16 %v2907
          %v2995 = vunpack.c.h.b16 %v2907
          %v2996 = vunpack.c.l.b16 %v2908
          %v2997 = vunpack.c.h.b16 %v2908
          %v2998 = vunpack.c.l.b16 %v2909
          %v2999 = vunpack.c.h.b16 %v2909
          %v3000 = vunpack.c.l.b16 %v2910
          %v3001 = vunpack.c.h.b16 %v2910
          %v3002 = vunpack.c.l.b16 %v2911
          %v3003 = vunpack.c.h.b16 %v2911
          %v3004 = vunpack.c.l.b16 %v2912
          %v3005 = vunpack.c.h.b16 %v2912
          %v3006 = vunpack.c.l.b16 %v2913
          %v3007 = vunpack.c.h.b16 %v2913
          %v3008 = vunpack.c.l.b16 %v2914
          %v3009 = vunpack.c.h.b16 %v2914
          %v3010 = vunpack.c.l.b16 %v2915
          %v3011 = vunpack.c.h.b16 %v2915
          %v3012 = vunpack.c.l.b16 %v2916
          %v3013 = vunpack.c.h.b16 %v2916
          %v3014 = vunpack.c.l.b16 %v2917
          %v3015 = vunpack.c.h.b16 %v2917
          %v3016 = vunpack.c.l.b16 %v2918
          %v3017 = vunpack.c.h.b16 %v2918
          %v3018 = vunpack.c.l.b16 %v2919
          %v3019 = vunpack.c.h.b16 %v2919
          %v3020 = vunpack.c.l.b16 %v2920
          %v3021 = vunpack.c.h.b16 %v2920
          %v3022 = vunpack.c.l.b16 %v2921
          %v3023 = vunpack.c.h.b16 %v2921
          %v3024 = vunpack.c.l.b16 %v2922
          %v3025 = vunpack.c.h.b16 %v2922
          %v3026 = vunpack.c.l.b16 %v2923
          %v3027 = vunpack.c.h.b16 %v2923
          %v3028 = vunpack.c.l.b16 %v2924
          %v3029 = vunpack.c.h.b16 %v2924
          %v3030 = vunpack.c.l.b16 %v2925
          %v3031 = vunpack.c.h.b16 %v2925
          %v3032 = vunpack.c.l.b16 %v2926
          %v3033 = vunpack.c.h.b16 %v2926
          %v3034 = vunpack.c.l.b16 %v2927
          %v3035 = vunpack.c.h.b16 %v2927
          %v3036 = vpack.c.b16 %v2974, %v2972
          %v3037 = vpack.c.b16 %v2975, %v2973
          %v3038 = vpack.c.b16 %v2978, %v2976
          %v3039 = vpack.c.b16 %v2979, %v2977
          %v3040 = vpack.c.b16 %v2982, %v2980
          %v3041 = vpack.c.b16 %v2983, %v2981
          %v3042 = vpack.c.b16 %v2986, %v2984
          %v3043 = vpack.c.b16 %v2987, %v2985
          %v3044 = vpack.c.b16 %v2990, %v2988
          %v3045 = vpack.c.b16 %v2991, %v2989
          %v3046 = vpack.c.b16 %v2994, %v2992
          %v3047 = vpack.c.b16 %v2995, %v2993
          %v3048 = vpack.c.b16 %v2998, %v2996
          %v3049 = vpack.c.b16 %v2999, %v2997
          %v3050 = vpack.c.b16 %v3002, %v3000
          %v3051 = vpack.c.b16 %v3003, %v3001
          %v3052 = vpack.c.b16 %v3006, %v3004
          %v3053 = vpack.c.b16 %v3007, %v3005
          %v3054 = vpack.c.b16 %v3010, %v3008
          %v3055 = vpack.c.b16 %v3011, %v3009
          %v3056 = vpack.c.b16 %v3014, %v3012
          %v3057 = vpack.c.b16 %v3015, %v3013
          %v3058 = vpack.c.b16 %v3018, %v3016
          %v3059 = vpack.c.b16 %v3019, %v3017
          %v3060 = vpack.c.b16 %v3022, %v3020
          %v3061 = vpack.c.b16 %v3023, %v3021
          %v3062 = vpack.c.b16 %v3026, %v3024
          %v3063 = vpack.c.b16 %v3027, %v3025
          %v3064 = vpack.c.b16 %v3030, %v3028
          %v3065 = vpack.c.b16 %v3031, %v3029
          %v3066 = vpack.c.b16 %v3034, %v3032
          %v3067 = vpack.c.b16 %v3035, %v3033
          %3100 = vmatprep.subr.bf16.mxu0 %v3037
          %3101 = vmatpush1.bf16.msra.mxu0 %v3036
          %3102 = vmatprep.subr.bf16.mxu0 %v3039
          %3103 = vmatpush1.bf16.msra.mxu0 %v3038
          %3104 = vmatprep.subr.bf16.mxu0 %v3041
          %3105 = vmatpush1.bf16.msra.mxu0 %v3040
          %3106 = vmatprep.subr.bf16.mxu0 %v3043
          %3107 = vmatpush1.bf16.msra.mxu0 %v3042
          %3108 = vmatprep.subr.bf16.mxu0 %v3045
          %3109 = vmatpush1.bf16.msra.mxu0 %v3044
          %3110 = vmatprep.subr.bf16.mxu0 %v3047
          %3111 = vmatpush1.bf16.msra.mxu0 %v3046
          %3112 = vmatprep.subr.bf16.mxu0 %v3049
          %3113 = vmatpush1.bf16.msra.mxu0 %v3048
          %3114 = vmatprep.subr.bf16.mxu0 %v3051
          %3115 = vmatpush1.bf16.msra.mxu0 %v3050
          %3116 = vmatprep.subr.bf16.mxu0 %v3053
          %3117 = vmatpush1.bf16.msra.mxu0 %v3052
          %3118 = vmatprep.subr.bf16.mxu0 %v3055
          %3119 = vmatpush1.bf16.msra.mxu0 %v3054
          %3120 = vmatprep.subr.bf16.mxu0 %v3057
          %3121 = vmatpush1.bf16.msra.mxu0 %v3056
          %3122 = vmatprep.subr.bf16.mxu0 %v3059
          %3123 = vmatpush1.bf16.msra.mxu0 %v3058
          %3124 = vmatprep.subr.bf16.mxu0 %v3061
          %3125 = vmatpush1.bf16.msra.mxu0 %v3060
          %3126 = vmatprep.subr.bf16.mxu0 %v3063
          %3127 = vmatpush1.bf16.msra.mxu0 %v3062
          %3128 = vmatprep.subr.bf16.mxu0 %v3065
          %3129 = vmatpush1.bf16.msra.mxu0 %v3064
          %3130 = vmatprep.subr.bf16.mxu0 %v3067
          %3131 = vmatpush1.bf16.msra.mxu0 %v3066
          %3132 = vmatprep.mubr.bf16.mxu0 %v2895
          %3133 = vmatmul.mubr.bf16.gmra.mrb[0].mxu0 %v2894
          %v3134 = vpop.f32.mrb[0].mxu0
          %v3135 = vadd.f32 %v2933, %v3134
          %v3136 = vpop.f32.mrb[0].mxu0
          %v3137 = vadd.f32 %v2937, %v3136
          %v3138 = vpop.f32.mrb[0].mxu0
          %v3139 = vpop.f32.mrb[0].mxu0
          %3140 = vdwg.mxu0
          %v3141 = vmax.f32 %v3135, 0.0
          %v3142 = vmax.f32 %v3137, 0.0
          %v3143 = vpack.c.bf16 %v3141, %v3141
          %v3144 = vpack.c.bf16 %v3142, %v3142
          %v3145 = vld [vmem:[#allocation12] sm:$0xf]
          %v3146 = vld [vmem:[#allocation12 + $0x4] sm:$0xf]
          %v3147 = vld [vmem:[#allocation12 + $0x8] sm:$0xf]
          %v3148 = vld [vmem:[#allocation12 + $0xc] sm:$0xf]
          %v3149 = vld [vmem:[#allocation12 + $0x10] sm:$0xf]
          %v3150 = vld [vmem:[#allocation12 + $0x14] sm:$0xf]
          %v3151 = vld [vmem:[#allocation12 + $0x18] sm:$0xf]
          %v3152 = vld [vmem:[#allocation12 + $0x1c] sm:$0xf]
          %v3153 = vld [vmem:[#allocation12 + $0x20] sm:$0xf]
          %v3154 = vld [vmem:[#allocation12 + $0x24] sm:$0xf]
          %v3155 = vld [vmem:[#allocation12 + $0x28] sm:$0xf]
          %v3156 = vld [vmem:[#allocation12 + $0x2c] sm:$0xf]
          %v3157 = vld [vmem:[#allocation12 + $0x30] sm:$0xf]
          %v3158 = vld [vmem:[#allocation12 + $0x34] sm:$0xf]
          %v3159 = vld [vmem:[#allocation12 + $0x38] sm:$0xf]
          %v3160 = vld [vmem:[#allocation12 + $0x3c] sm:$0xf]
          %v3161 = vld [vmem:[#allocation12 + $0x40] sm:$0xf]
          %v3162 = vld [vmem:[#allocation12 + $0x44] sm:$0xf]
          %v3163 = vld [vmem:[#allocation12 + $0x48] sm:$0xf]
          %v3164 = vld [vmem:[#allocation12 + $0x4c] sm:$0xf]
          %v3165 = vld [vmem:[#allocation12 + $0x50] sm:$0xf]
          %v3166 = vld [vmem:[#allocation12 + $0x54] sm:$0xf]
          %v3167 = vld [vmem:[#allocation12 + $0x58] sm:$0xf]
          %v3168 = vld [vmem:[#allocation12 + $0x5c] sm:$0xf]
          %v3169 = vld [vmem:[#allocation12 + $0x60] sm:$0xf]
          %v3170 = vld [vmem:[#allocation12 + $0x64] sm:$0xf]
          %v3171 = vld [vmem:[#allocation12 + $0x68] sm:$0xf]
          %v3172 = vld [vmem:[#allocation12 + $0x6c] sm:$0xf]
          %v3173 = vld [vmem:[#allocation12 + $0x70] sm:$0xf]
          %v3174 = vld [vmem:[#allocation12 + $0x74] sm:$0xf]
          %v3175 = vld [vmem:[#allocation12 + $0x78] sm:$0xf]
          %v3176 = vld [vmem:[#allocation12 + $0x7c] sm:$0xf]
          %v3209 = vunpack.c.l.b16 %v3145
          %v3210 = vunpack.c.l.b16 %v3146
          %v3211 = vunpack.c.l.b16 %v3147
          %v3212 = vunpack.c.l.b16 %v3148
          %v3213 = vunpack.c.l.b16 %v3149
          %v3214 = vunpack.c.l.b16 %v3150
          %v3215 = vunpack.c.l.b16 %v3151
          %v3216 = vunpack.c.l.b16 %v3152
          %v3217 = vunpack.c.l.b16 %v3153
          %v3218 = vunpack.c.l.b16 %v3154
          %v3219 = vunpack.c.l.b16 %v3155
          %v3220 = vunpack.c.l.b16 %v3156
          %v3221 = vunpack.c.l.b16 %v3157
          %v3222 = vunpack.c.l.b16 %v3158
          %v3223 = vunpack.c.l.b16 %v3159
          %v3224 = vunpack.c.l.b16 %v3160
          %v3225 = vunpack.c.l.b16 %v3161
          %v3226 = vunpack.c.l.b16 %v3162
          %v3227 = vunpack.c.l.b16 %v3163
          %v3228 = vunpack.c.l.b16 %v3164
          %v3229 = vunpack.c.l.b16 %v3165
          %v3230 = vunpack.c.l.b16 %v3166
          %v3231 = vunpack.c.l.b16 %v3167
          %v3232 = vunpack.c.l.b16 %v3168
          %v3233 = vunpack.c.l.b16 %v3169
          %v3234 = vunpack.c.l.b16 %v3170
          %v3235 = vunpack.c.l.b16 %v3171
          %v3236 = vunpack.c.l.b16 %v3172
          %v3237 = vunpack.c.l.b16 %v3173
          %v3238 = vunpack.c.l.b16 %v3174
          %v3239 = vunpack.c.l.b16 %v3175
          %v3240 = vunpack.c.l.b16 %v3176
          %v3241 = vpack.c.b16 %v3210, %v3209
          %v3242 = vpack.c.b16 %v3212, %v3211
          %v3243 = vpack.c.b16 %v3214, %v3213
          %v3244 = vpack.c.b16 %v3216, %v3215
          %v3245 = vpack.c.b16 %v3218, %v3217
          %v3246 = vpack.c.b16 %v3220, %v3219
          %v3247 = vpack.c.b16 %v3222, %v3221
          %v3248 = vpack.c.b16 %v3224, %v3223
          %v3249 = vpack.c.b16 %v3226, %v3225
          %v3250 = vpack.c.b16 %v3228, %v3227
          %v3251 = vpack.c.b16 %v3230, %v3229
          %v3252 = vpack.c.b16 %v3232, %v3231
          %v3253 = vpack.c.b16 %v3234, %v3233
          %v3254 = vpack.c.b16 %v3236, %v3235
          %v3255 = vpack.c.b16 %v3238, %v3237
          %v3256 = vpack.c.b16 %v3240, %v3239
          %3273 = vmatprep.subr.bf16.mxu0 0
          %3274 = vmatpush1.bf16.msra.mxu0 %v3241
          %3275 = vmatprep.subr.bf16.mxu0 0
          %3276 = vmatpush1.bf16.msra.mxu0 %v3242
          %3277 = vmatprep.subr.bf16.mxu0 0
          %3278 = vmatpush1.bf16.msra.mxu0 %v3243
          %3279 = vmatprep.subr.bf16.mxu0 0
          %3280 = vmatpush1.bf16.msra.mxu0 %v3244
          %3281 = vmatprep.subr.bf16.mxu0 0
          %3282 = vmatpush1.bf16.msra.mxu0 %v3245
          %3283 = vmatprep.subr.bf16.mxu0 0
          %3284 = vmatpush1.bf16.msra.mxu0 %v3246
          %3285 = vmatprep.subr.bf16.mxu0 0
          %3286 = vmatpush1.bf16.msra.mxu0 %v3247
          %3287 = vmatprep.subr.bf16.mxu0 0
          %3288 = vmatpush1.bf16.msra.mxu0 %v3248
          %3289 = vmatprep.subr.bf16.mxu0 0
          %3290 = vmatpush1.bf16.msra.mxu0 %v3249
          %3291 = vmatprep.subr.bf16.mxu0 0
          %3292 = vmatpush1.bf16.msra.mxu0 %v3250
          %3293 = vmatprep.subr.bf16.mxu0 0
          %3294 = vmatpush1.bf16.msra.mxu0 %v3251
          %3295 = vmatprep.subr.bf16.mxu0 0
          %3296 = vmatpush1.bf16.msra.mxu0 %v3252
          %3297 = vmatprep.subr.bf16.mxu0 0
          %3298 = vmatpush1.bf16.msra.mxu0 %v3253
          %3299 = vmatprep.subr.bf16.mxu0 0
          %3300 = vmatpush1.bf16.msra.mxu0 %v3254
          %3301 = vmatprep.subr.bf16.mxu0 0
          %3302 = vmatpush1.bf16.msra.mxu0 %v3255
          %3303 = vmatprep.subr.bf16.mxu0 0
          %3304 = vmatpush1.bf16.msra.mxu0 %v3256
          %3305 = vmatprep.mubr.bf16.mxu0 %v3144
          %3306 = vmatmul.mubr.bf16.gmra.mrb[0].mxu0 %v3143
          %v3307 = vpop.f32.mrb[0].mxu0
          %v3308 = vadd.f32 0.0, %v3307
          %v3309 = vpop.f32.mrb[0].mxu0
          %v3310 = vpop.f32.mrb[0].mxu0
          %v3311 = vpop.f32.mrb[0].mxu0
          %3312 = vdwg.mxu0
          %v3345 = vunpack.c.l.b16 %v2382
          %v3346 = vunpack.c.l.b16 %v2383
          %v3347 = vunpack.c.l.b16 %v2384
          %v3348 = vunpack.c.l.b16 %v2385
          %v3349 = vunpack.c.l.b16 %v2386
          %v3350 = vunpack.c.l.b16 %v2387
          %v3351 = vunpack.c.l.b16 %v2388
          %v3352 = vunpack.c.l.b16 %v2389
          %v3353 = vunpack.c.l.b16 %v2390
          %v3354 = vunpack.c.l.b16 %v2391
          %v3355 = vunpack.c.l.b16 %v2392
          %v3356 = vunpack.c.l.b16 %v2393
          %v3357 = vunpack.c.l.b16 %v2394
          %v3358 = vunpack.c.l.b16 %v2395
          %v3359 = vunpack.c.l.b16 %v2396
          %v3360 = vunpack.c.l.b16 %v2397
          %v3361 = vunpack.c.l.b16 %v2398
          %v3362 = vunpack.c.l.b16 %v2399
          %v3363 = vunpack.c.l.b16 %v2400
          %v3364 = vunpack.c.l.b16 %v2401
          %v3365 = vunpack.c.l.b16 %v2402
          %v3366 = vunpack.c.l.b16 %v2403
          %v3367 = vunpack.c.l.b16 %v2404
          %v3368 = vunpack.c.l.b16 %v2405
          %v3369 = vunpack.c.l.b16 %v2406
          %v3370 = vunpack.c.l.b16 %v2407
          %v3371 = vunpack.c.l.b16 %v2408
          %v3372 = vunpack.c.l.b16 %v2409
          %v3373 = vunpack.c.l.b16 %v2410
          %v3374 = vunpack.c.l.b16 %v2411
          %v3375 = vunpack.c.l.b16 %v2412
          %v3376 = vunpack.c.l.b16 %v2413
          %v3377 = vpack.c.b16 %v3346, %v3345
          %v3378 = vpack.c.b16 %v3348, %v3347
          %v3379 = vpack.c.b16 %v3350, %v3349
          %v3380 = vpack.c.b16 %v3352, %v3351
          %v3381 = vpack.c.b16 %v3354, %v3353
          %v3382 = vpack.c.b16 %v3356, %v3355
          %v3383 = vpack.c.b16 %v3358, %v3357
          %v3384 = vpack.c.b16 %v3360, %v3359
          %v3385 = vpack.c.b16 %v3362, %v3361
          %v3386 = vpack.c.b16 %v3364, %v3363
          %v3387 = vpack.c.b16 %v3366, %v3365
          %v3388 = vpack.c.b16 %v3368, %v3367
          %v3389 = vpack.c.b16 %v3370, %v3369
          %v3390 = vpack.c.b16 %v3372, %v3371
          %v3391 = vpack.c.b16 %v3374, %v3373
          %v3392 = vpack.c.b16 %v3376, %v3375
          %3409 = vmatprep.subr.bf16.mxu0 0
          %3410 = vmatpush1.bf16.msra.mxu0 %v3377
          %3411 = vmatprep.subr.bf16.mxu0 0
          %3412 = vmatpush1.bf16.msra.mxu0 %v3378
          %3413 = vmatprep.subr.bf16.mxu0 0
          %3414 = vmatpush1.bf16.msra.mxu0 %v3379
          %3415 = vmatprep.subr.bf16.mxu0 0
          %3416 = vmatpush1.bf16.msra.mxu0 %v3380
          %3417 = vmatprep.subr.bf16.mxu0 0
          %3418 = vmatpush1.bf16.msra.mxu0 %v3381
          %3419 = vmatprep.subr.bf16.mxu0 0
          %3420 = vmatpush1.bf16.msra.mxu0 %v3382
          %3421 = vmatprep.subr.bf16.mxu0 0
          %3422 = vmatpush1.bf16.msra.mxu0 %v3383
          %3423 = vmatprep.subr.bf16.mxu0 0
          %3424 = vmatpush1.bf16.msra.mxu0 %v3384
          %3425 = vmatprep.subr.bf16.mxu0 0
          %3426 = vmatpush1.bf16.msra.mxu0 %v3385
          %3427 = vmatprep.subr.bf16.mxu0 0
          %3428 = vmatpush1.bf16.msra.mxu0 %v3386
          %3429 = vmatprep.subr.bf16.mxu0 0
          %3430 = vmatpush1.bf16.msra.mxu0 %v3387
          %3431 = vmatprep.subr.bf16.mxu0 0
          %3432 = vmatpush1.bf16.msra.mxu0 %v3388
          %3433 = vmatprep.subr.bf16.mxu0 0
          %3434 = vmatpush1.bf16.msra.mxu0 %v3389
          %3435 = vmatprep.subr.bf16.mxu0 0
          %3436 = vmatpush1.bf16.msra.mxu0 %v3390
          %3437 = vmatprep.subr.bf16.mxu0 0
          %3438 = vmatpush1.bf16.msra.mxu0 %v3391
          %3439 = vmatprep.subr.bf16.mxu0 0
          %3440 = vmatpush1.bf16.msra.mxu0 %v3392
          %3441 = vmatprep.mubr.bf16.mxu0 %v2381
          %3442 = vmatmul.mubr.bf16.gmra.mrb[0].mxu0 %v2380
          %v3443 = vpop.f32.mrb[0].mxu0
          %v3444 = vadd.f32 %v3308, %v3443
          %v3445 = vpop.f32.mrb[0].mxu0
          %v3446 = vpop.f32.mrb[0].mxu0
          %v3447 = vpop.f32.mrb[0].mxu0
          %3448 = vdwg.mxu0
          %v3449 = vld [vmem:[%s13] sm:$0x1]
          %v3451 = vlaneseq
          %v3452 = vshrl.u32 %v3451, 7
          %v3453 = vsub.s32 0, %v3452
          %v3454 = vrot.slane %v3449, %v3453
          %v3456 = vadd.f32 %v3444, %v3454
          %3457 = vst [vmem:[%s1037] sm:$0xff] %v3456
        $region188: #{classifier_forward.1} parent=127 // pred_fallthru
          _
        %p3458 = scmp.eq.s32.totalorder %s50, 1
        // Predicated region
        $region189: #{classifier_forward.1} parent=127 // pred_check
          %p3459 = pneg %p3458
        $region190: #{classifier_forward.1} parent=127 // pred_check_branch
          %3461 = sbr.rel (%p3459) target = $region192
        $region191: #{classifier_forward.1} parent=127 // pred_region
          %v3462 = vld [vmem:[#allocation13] sm:$0xff]
          %v3463 = vld [vmem:[#allocation13 + $0x8] sm:$0xff]
          %v3464 = vld [vmem:[#allocation13 + $0x10] sm:$0xff]
          %v3465 = vld [vmem:[#allocation13 + $0x18] sm:$0xff]
          %v3466 = vld [vmem:[#allocation13 + $0x20] sm:$0xff]
          %v3467 = vld [vmem:[#allocation13 + $0x28] sm:$0xff]
          %v3468 = vld [vmem:[#allocation13 + $0x30] sm:$0xff]
          %v3469 = vld [vmem:[#allocation13 + $0x38] sm:$0xff]
          %v3470 = vld [vmem:[#allocation13 + $0x40] sm:$0xff]
          %v3471 = vld [vmem:[#allocation13 + $0x48] sm:$0xff]
          %v3472 = vld [vmem:[#allocation13 + $0x50] sm:$0xff]
          %v3473 = vld [vmem:[#allocation13 + $0x58] sm:$0xff]
          %v3474 = vld [vmem:[#allocation13 + $0x60] sm:$0xff]
          %v3475 = vld [vmem:[#allocation13 + $0x68] sm:$0xff]
          %v3476 = vld [vmem:[#allocation13 + $0x70] sm:$0xff]
          %v3477 = vld [vmem:[#allocation13 + $0x78] sm:$0xff]
          %v3478 = vld [vmem:[#allocation13 + $0x80] sm:$0xff]
          %v3479 = vld [vmem:[#allocation13 + $0x88] sm:$0xff]
          %v3480 = vld [vmem:[#allocation13 + $0x90] sm:$0xff]
          %v3481 = vld [vmem:[#allocation13 + $0x98] sm:$0xff]
          %v3482 = vld [vmem:[#allocation13 + $0xa0] sm:$0xff]
          %v3483 = vld [vmem:[#allocation13 + $0xa8] sm:$0xff]
          %v3484 = vld [vmem:[#allocation13 + $0xb0] sm:$0xff]
          %v3485 = vld [vmem:[#allocation13 + $0xb8] sm:$0xff]
          %v3486 = vld [vmem:[#allocation13 + $0xc0] sm:$0xff]
          %v3487 = vld [vmem:[#allocation13 + $0xc8] sm:$0xff]
          %v3488 = vld [vmem:[#allocation13 + $0xd0] sm:$0xff]
          %v3489 = vld [vmem:[#allocation13 + $0xd8] sm:$0xff]
          %v3490 = vld [vmem:[#allocation13 + $0xe0] sm:$0xff]
          %v3491 = vld [vmem:[#allocation13 + $0xe8] sm:$0xff]
          %v3492 = vld [vmem:[#allocation13 + $0xf0] sm:$0xff]
          %v3493 = vld [vmem:[#allocation13 + $0xf8] sm:$0xff]
          %v3494 = vld [vmem:[%s15] sm:$0xf]
          %v3496 = vlaneseq
          %v3497 = vshrl.u32 %v3496, 7
          %v3498 = vsub.s32 0, %v3497
          %v3499 = vrot.slane %v3494, %v3498
          %v3500 = vlaneseq
          %v3501 = vshrl.u32 %v3500, 7
          %v3502 = vsub.s32 1, %v3501
          %v3503 = vrot.slane %v3494, %v3502
          %v3504 = vlaneseq
          %v3505 = vshrl.u32 %v3504, 7
          %v3506 = vsub.s32 2, %v3505
          %v3507 = vrot.slane %v3494, %v3506
          %v3508 = vlaneseq
          %v3509 = vshrl.u32 %v3508, 7
          %v3510 = vsub.s32 3, %v3509
          %v3511 = vrot.slane %v3494, %v3510
          %v3548 = vunpack.c.l.b16 %v3462
          %v3549 = vunpack.c.h.b16 %v3462
          %v3550 = vunpack.c.l.b16 %v3463
          %v3551 = vunpack.c.h.b16 %v3463
          %v3552 = vunpack.c.l.b16 %v3464
          %v3553 = vunpack.c.h.b16 %v3464
          %v3554 = vunpack.c.l.b16 %v3465
          %v3555 = vunpack.c.h.b16 %v3465
          %v3556 = vunpack.c.l.b16 %v3466
          %v3557 = vunpack.c.h.b16 %v3466
          %v3558 = vunpack.c.l.b16 %v3467
          %v3559 = vunpack.c.h.b16 %v3467
          %v3560 = vunpack.c.l.b16 %v3468
          %v3561 = vunpack.c.h.b16 %v3468
          %v3562 = vunpack.c.l.b16 %v3469
          %v3563 = vunpack.c.h.b16 %v3469
          %v3564 = vunpack.c.l.b16 %v3470
          %v3565 = vunpack.c.h.b16 %v3470
          %v3566 = vunpack.c.l.b16 %v3471
          %v3567 = vunpack.c.h.b16 %v3471
          %v3568 = vunpack.c.l.b16 %v3472
          %v3569 = vunpack.c.h.b16 %v3472
          %v3570 = vunpack.c.l.b16 %v3473
          %v3571 = vunpack.c.h.b16 %v3473
          %v3572 = vunpack.c.l.b16 %v3474
          %v3573 = vunpack.c.h.b16 %v3474
          %v3574 = vunpack.c.l.b16 %v3475
          %v3575 = vunpack.c.h.b16 %v3475
          %v3576 = vunpack.c.l.b16 %v3476
          %v3577 = vunpack.c.h.b16 %v3476
          %v3578 = vunpack.c.l.b16 %v3477
          %v3579 = vunpack.c.h.b16 %v3477
          %v3580 = vunpack.c.l.b16 %v3478
          %v3581 = vunpack.c.h.b16 %v3478
          %v3582 = vunpack.c.l.b16 %v3479
          %v3583 = vunpack.c.h.b16 %v3479
          %v3584 = vunpack.c.l.b16 %v3480
          %v3585 = vunpack.c.h.b16 %v3480
          %v3586 = vunpack.c.l.b16 %v3481
          %v3587 = vunpack.c.h.b16 %v3481
          %v3588 = vunpack.c.l.b16 %v3482
          %v3589 = vunpack.c.h.b16 %v3482
          %v3590 = vunpack.c.l.b16 %v3483
          %v3591 = vunpack.c.h.b16 %v3483
          %v3592 = vunpack.c.l.b16 %v3484
          %v3593 = vunpack.c.h.b16 %v3484
          %v3594 = vunpack.c.l.b16 %v3485
          %v3595 = vunpack.c.h.b16 %v3485
          %v3596 = vunpack.c.l.b16 %v3486
          %v3597 = vunpack.c.h.b16 %v3486
          %v3598 = vunpack.c.l.b16 %v3487
          %v3599 = vunpack.c.h.b16 %v3487
          %v3600 = vunpack.c.l.b16 %v3488
          %v3601 = vunpack.c.h.b16 %v3488
          %v3602 = vunpack.c.l.b16 %v3489
          %v3603 = vunpack.c.h.b16 %v3489
          %v3604 = vunpack.c.l.b16 %v3490
          %v3605 = vunpack.c.h.b16 %v3490
          %v3606 = vunpack.c.l.b16 %v3491
          %v3607 = vunpack.c.h.b16 %v3491
          %v3608 = vunpack.c.l.b16 %v3492
          %v3609 = vunpack.c.h.b16 %v3492
          %v3610 = vunpack.c.l.b16 %v3493
          %v3611 = vunpack.c.h.b16 %v3493
          %v3612 = vpack.c.b16 %v3552, %v3548
          %v3613 = vpack.c.b16 %v3553, %v3549
          %v3614 = vpack.c.b16 %v3554, %v3550
          %v3615 = vpack.c.b16 %v3555, %v3551
          %v3616 = vpack.c.b16 %v3560, %v3556
          %v3617 = vpack.c.b16 %v3561, %v3557
          %v3618 = vpack.c.b16 %v3562, %v3558
          %v3619 = vpack.c.b16 %v3563, %v3559
          %v3620 = vpack.c.b16 %v3568, %v3564
          %v3621 = vpack.c.b16 %v3569, %v3565
          %v3622 = vpack.c.b16 %v3570, %v3566
          %v3623 = vpack.c.b16 %v3571, %v3567
          %v3624 = vpack.c.b16 %v3576, %v3572
          %v3625 = vpack.c.b16 %v3577, %v3573
          %v3626 = vpack.c.b16 %v3578, %v3574
          %v3627 = vpack.c.b16 %v3579, %v3575
          %v3628 = vpack.c.b16 %v3584, %v3580
          %v3629 = vpack.c.b16 %v3585, %v3581
          %v3630 = vpack.c.b16 %v3586, %v3582
          %v3631 = vpack.c.b16 %v3587, %v3583
          %v3632 = vpack.c.b16 %v3592, %v3588
          %v3633 = vpack.c.b16 %v3593, %v3589
          %v3634 = vpack.c.b16 %v3594, %v3590
          %v3635 = vpack.c.b16 %v3595, %v3591
          %v3636 = vpack.c.b16 %v3600, %v3596
          %v3637 = vpack.c.b16 %v3601, %v3597
          %v3638 = vpack.c.b16 %v3602, %v3598
          %v3639 = vpack.c.b16 %v3603, %v3599
          %v3640 = vpack.c.b16 %v3608, %v3604
          %v3641 = vpack.c.b16 %v3609, %v3605
          %v3642 = vpack.c.b16 %v3610, %v3606
          %v3643 = vpack.c.b16 %v3611, %v3607
          %3676 = vmatprep.subr.bf16.mxu0 %v3613
          %3677 = vmatpush1.bf16.msra.mxu0 %v3612
          %3678 = vmatprep.subr.bf16.mxu0 %v3617
          %3679 = vmatpush1.bf16.msra.mxu0 %v3616
          %3680 = vmatprep.subr.bf16.mxu0 %v3621
          %3681 = vmatpush1.bf16.msra.mxu0 %v3620
          %3682 = vmatprep.subr.bf16.mxu0 %v3625
          %3683 = vmatpush1.bf16.msra.mxu0 %v3624
          %3684 = vmatprep.subr.bf16.mxu0 %v3629
          %3685 = vmatpush1.bf16.msra.mxu0 %v3628
          %3686 = vmatprep.subr.bf16.mxu0 %v3633
          %3687 = vmatpush1.bf16.msra.mxu0 %v3632
          %3688 = vmatprep.subr.bf16.mxu0 %v3637
          %3689 = vmatpush1.bf16.msra.mxu0 %v3636
          %3690 = vmatprep.subr.bf16.mxu0 %v3641
          %3691 = vmatpush1.bf16.msra.mxu0 %v3640
          %3692 = vmatprep.subr.bf16.mxu0 0
          %3693 = vmatpush1.bf16.msra.mxu0 0
          %3694 = vmatprep.subr.bf16.mxu0 0
          %3695 = vmatpush1.bf16.msra.mxu0 0
          %3696 = vmatprep.subr.bf16.mxu0 0
          %3697 = vmatpush1.bf16.msra.mxu0 0
          %3698 = vmatprep.subr.bf16.mxu0 0
          %3699 = vmatpush1.bf16.msra.mxu0 0
          %3700 = vmatprep.subr.bf16.mxu0 0
          %3701 = vmatpush1.bf16.msra.mxu0 0
          %3702 = vmatprep.subr.bf16.mxu0 0
          %3703 = vmatpush1.bf16.msra.mxu0 0
          %3704 = vmatprep.subr.bf16.mxu0 0
          %3705 = vmatpush1.bf16.msra.mxu0 0
          %3706 = vmatprep.subr.bf16.mxu0 0
          %3707 = vmatpush1.bf16.msra.mxu0 0
          %3708 = vmatprep.mubr.bf16.mxu0 0
          %3709 = vmatmul.mubr.bf16.gmra.mrb[0].mxu0 %v1040
          %v3710 = vpop.f32.mrb[0].mxu0
          %v3711 = vadd.f32 %v3499, %v3710
          %v3712 = vpop.f32.mrb[0].mxu0
          %v3713 = vadd.f32 %v3503, %v3712
          %v3714 = vpop.f32.mrb[0].mxu0
          %v3715 = vpop.f32.mrb[0].mxu0
          %3716 = vdwg.mxu0
          %3717 = vmatprep.subr.bf16.mxu0 %v3615
          %3718 = vmatpush1.bf16.msra.mxu0 %v3614
          %3719 = vmatprep.subr.bf16.mxu0 %v3619
          %3720 = vmatpush1.bf16.msra.mxu0 %v3618
          %3721 = vmatprep.subr.bf16.mxu0 %v3623
          %3722 = vmatpush1.bf16.msra.mxu0 %v3622
          %3723 = vmatprep.subr.bf16.mxu0 %v3627
          %3724 = vmatpush1.bf16.msra.mxu0 %v3626
          %3725 = vmatprep.subr.bf16.mxu0 %v3631
          %3726 = vmatpush1.bf16.msra.mxu0 %v3630
          %3727 = vmatprep.subr.bf16.mxu0 %v3635
          %3728 = vmatpush1.bf16.msra.mxu0 %v3634
          %3729 = vmatprep.subr.bf16.mxu0 %v3639
          %3730 = vmatpush1.bf16.msra.mxu0 %v3638
          %3731 = vmatprep.subr.bf16.mxu0 %v3643
          %3732 = vmatpush1.bf16.msra.mxu0 %v3642
          %3733 = vmatprep.subr.bf16.mxu0 0
          %3734 = vmatpush1.bf16.msra.mxu0 0
          %3735 = vmatprep.subr.bf16.mxu0 0
          %3736 = vmatpush1.bf16.msra.mxu0 0
          %3737 = vmatprep.subr.bf16.mxu0 0
          %3738 = vmatpush1.bf16.msra.mxu0 0
          %3739 = vmatprep.subr.bf16.mxu0 0
          %3740 = vmatpush1.bf16.msra.mxu0 0
          %3741 = vmatprep.subr.bf16.mxu0 0
          %3742 = vmatpush1.bf16.msra.mxu0 0
          %3743 = vmatprep.subr.bf16.mxu0 0
          %3744 = vmatpush1.bf16.msra.mxu0 0
          %3745 = vmatprep.subr.bf16.mxu0 0
          %3746 = vmatpush1.bf16.msra.mxu0 0
          %3747 = vmatprep.subr.bf16.mxu0 0
          %3748 = vmatpush1.bf16.msra.mxu0 0
          %3749 = vmatprep.mubr.bf16.mxu0 0
          %3750 = vmatmul.mubr.bf16.gmra.mrb[0].mxu0 %v1040
          %v3751 = vpop.f32.mrb[0].mxu0
          %v3752 = vadd.f32 %v3507, %v3751
          %v3753 = vpop.f32.mrb[0].mxu0
          %v3754 = vadd.f32 %v3511, %v3753
          %v3755 = vpop.f32.mrb[0].mxu0
          %v3756 = vpop.f32.mrb[0].mxu0
          %3757 = vdwg.mxu0
          %v3758 = vmax.f32 %v3711, 0.0
          %v3759 = vmax.f32 %v3713, 0.0
          %v3760 = vmax.f32 %v3752, 0.0
          %v3761 = vmax.f32 %v3754, 0.0
          %v3762 = vpack.c.bf16 %v3758, %v3758
          %v3763 = vpack.c.bf16 %v3759, %v3759
          %v3764 = vpack.c.bf16 %v3760, %v3760
          %v3765 = vpack.c.bf16 %v3761, %v3761
          %v3766 = vld [vmem:[#allocation15] sm:$0xf]
          %v3767 = vld [vmem:[#allocation15 + $0x4] sm:$0xf]
          %v3768 = vld [vmem:[#allocation15 + $0x8] sm:$0xf]
          %v3769 = vld [vmem:[#allocation15 + $0xc] sm:$0xf]
          %v3770 = vld [vmem:[#allocation15 + $0x10] sm:$0xf]
          %v3771 = vld [vmem:[#allocation15 + $0x14] sm:$0xf]
          %v3772 = vld [vmem:[#allocation15 + $0x18] sm:$0xf]
          %v3773 = vld [vmem:[#allocation15 + $0x1c] sm:$0xf]
          %v3774 = vld [vmem:[#allocation15 + $0x20] sm:$0xf]
          %v3775 = vld [vmem:[#allocation15 + $0x24] sm:$0xf]
          %v3776 = vld [vmem:[#allocation15 + $0x28] sm:$0xf]
          %v3777 = vld [vmem:[#allocation15 + $0x2c] sm:$0xf]
          %v3778 = vld [vmem:[#allocation15 + $0x30] sm:$0xf]
          %v3779 = vld [vmem:[#allocation15 + $0x34] sm:$0xf]
          %v3780 = vld [vmem:[#allocation15 + $0x38] sm:$0xf]
          %v3781 = vld [vmem:[#allocation15 + $0x3c] sm:$0xf]
          %v3782 = vld [vmem:[#allocation15 + $0x40] sm:$0xf]
          %v3783 = vld [vmem:[#allocation15 + $0x44] sm:$0xf]
          %v3784 = vld [vmem:[#allocation15 + $0x48] sm:$0xf]
          %v3785 = vld [vmem:[#allocation15 + $0x4c] sm:$0xf]
          %v3786 = vld [vmem:[#allocation15 + $0x50] sm:$0xf]
          %v3787 = vld [vmem:[#allocation15 + $0x54] sm:$0xf]
          %v3788 = vld [vmem:[#allocation15 + $0x58] sm:$0xf]
          %v3789 = vld [vmem:[#allocation15 + $0x5c] sm:$0xf]
          %v3790 = vld [vmem:[#allocation15 + $0x60] sm:$0xf]
          %v3791 = vld [vmem:[#allocation15 + $0x64] sm:$0xf]
          %v3792 = vld [vmem:[#allocation15 + $0x68] sm:$0xf]
          %v3793 = vld [vmem:[#allocation15 + $0x6c] sm:$0xf]
          %v3794 = vld [vmem:[#allocation15 + $0x70] sm:$0xf]
          %v3795 = vld [vmem:[#allocation15 + $0x74] sm:$0xf]
          %v3796 = vld [vmem:[#allocation15 + $0x78] sm:$0xf]
          %v3797 = vld [vmem:[#allocation15 + $0x7c] sm:$0xf]
          %v3798 = vld [vmem:[%s17] sm:$0x1]
          %v3800 = vlaneseq
          %v3801 = vshrl.u32 %v3800, 7
          %v3802 = vsub.s32 0, %v3801
          %v3803 = vrot.slane %v3798, %v3802
          %v3837 = vunpack.c.l.b16 %v3766
          %v3838 = vunpack.c.l.b16 %v3767
          %v3839 = vunpack.c.l.b16 %v3768
          %v3840 = vunpack.c.l.b16 %v3769
          %v3841 = vunpack.c.l.b16 %v3770
          %v3842 = vunpack.c.l.b16 %v3771
          %v3843 = vunpack.c.l.b16 %v3772
          %v3844 = vunpack.c.l.b16 %v3773
          %v3845 = vunpack.c.l.b16 %v3774
          %v3846 = vunpack.c.l.b16 %v3775
          %v3847 = vunpack.c.l.b16 %v3776
          %v3848 = vunpack.c.l.b16 %v3777
          %v3849 = vunpack.c.l.b16 %v3778
          %v3850 = vunpack.c.l.b16 %v3779
          %v3851 = vunpack.c.l.b16 %v3780
          %v3852 = vunpack.c.l.b16 %v3781
          %v3853 = vunpack.c.l.b16 %v3782
          %v3854 = vunpack.c.l.b16 %v3783
          %v3855 = vunpack.c.l.b16 %v3784
          %v3856 = vunpack.c.l.b16 %v3785
          %v3857 = vunpack.c.l.b16 %v3786
          %v3858 = vunpack.c.l.b16 %v3787
          %v3859 = vunpack.c.l.b16 %v3788
          %v3860 = vunpack.c.l.b16 %v3789
          %v3861 = vunpack.c.l.b16 %v3790
          %v3862 = vunpack.c.l.b16 %v3791
          %v3863 = vunpack.c.l.b16 %v3792
          %v3864 = vunpack.c.l.b16 %v3793
          %v3865 = vunpack.c.l.b16 %v3794
          %v3866 = vunpack.c.l.b16 %v3795
          %v3867 = vunpack.c.l.b16 %v3796
          %v3868 = vunpack.c.l.b16 %v3797
          %v3869 = vpack.c.b16 %v3838, %v3837
          %v3870 = vpack.c.b16 %v3840, %v3839
          %v3871 = vpack.c.b16 %v3842, %v3841
          %v3872 = vpack.c.b16 %v3844, %v3843
          %v3873 = vpack.c.b16 %v3846, %v3845
          %v3874 = vpack.c.b16 %v3848, %v3847
          %v3875 = vpack.c.b16 %v3850, %v3849
          %v3876 = vpack.c.b16 %v3852, %v3851
          %v3877 = vpack.c.b16 %v3854, %v3853
          %v3878 = vpack.c.b16 %v3856, %v3855
          %v3879 = vpack.c.b16 %v3858, %v3857
          %v3880 = vpack.c.b16 %v3860, %v3859
          %v3881 = vpack.c.b16 %v3862, %v3861
          %v3882 = vpack.c.b16 %v3864, %v3863
          %v3883 = vpack.c.b16 %v3866, %v3865
          %v3884 = vpack.c.b16 %v3868, %v3867
          %3901 = vmatprep.subr.bf16.mxu0 0
          %3902 = vmatpush1.bf16.msra.mxu0 %v3869
          %3903 = vmatprep.subr.bf16.mxu0 0
          %3904 = vmatpush1.bf16.msra.mxu0 %v3870
          %3905 = vmatprep.subr.bf16.mxu0 0
          %3906 = vmatpush1.bf16.msra.mxu0 %v3871
          %3907 = vmatprep.subr.bf16.mxu0 0
          %3908 = vmatpush1.bf16.msra.mxu0 %v3872
          %3909 = vmatprep.subr.bf16.mxu0 0
          %3910 = vmatpush1.bf16.msra.mxu0 %v3873
          %3911 = vmatprep.subr.bf16.mxu0 0
          %3912 = vmatpush1.bf16.msra.mxu0 %v3874
          %3913 = vmatprep.subr.bf16.mxu0 0
          %3914 = vmatpush1.bf16.msra.mxu0 %v3875
          %3915 = vmatprep.subr.bf16.mxu0 0
          %3916 = vmatpush1.bf16.msra.mxu0 %v3876
          %3917 = vmatprep.subr.bf16.mxu0 0
          %3918 = vmatpush1.bf16.msra.mxu0 %v3877
          %3919 = vmatprep.subr.bf16.mxu0 0
          %3920 = vmatpush1.bf16.msra.mxu0 %v3878
          %3921 = vmatprep.subr.bf16.mxu0 0
          %3922 = vmatpush1.bf16.msra.mxu0 %v3879
          %3923 = vmatprep.subr.bf16.mxu0 0
          %3924 = vmatpush1.bf16.msra.mxu0 %v3880
          %3925 = vmatprep.subr.bf16.mxu0 0
          %3926 = vmatpush1.bf16.msra.mxu0 %v3881
          %3927 = vmatprep.subr.bf16.mxu0 0
          %3928 = vmatpush1.bf16.msra.mxu0 %v3882
          %3929 = vmatprep.subr.bf16.mxu0 0
          %3930 = vmatpush1.bf16.msra.mxu0 %v3883
          %3931 = vmatprep.subr.bf16.mxu0 0
          %3932 = vmatpush1.bf16.msra.mxu0 %v3884
          %3933 = vmatprep.mubr.bf16.mxu0 %v3763
          %3934 = vmatmul.mubr.bf16.gmra.mrb[0].mxu0 %v3762
          %v3935 = vpop.f32.mrb[0].mxu0
          %v3936 = vadd.f32 %v3803, %v3935
          %v3937 = vpop.f32.mrb[0].mxu0
          %v3938 = vpop.f32.mrb[0].mxu0
          %v3939 = vpop.f32.mrb[0].mxu0
          %3940 = vdwg.mxu0
          %v3941 = vmax.f32 %v3936, 0.0
          %v3942 = vpack.c.bf16 %v3941, %v3941
          %v3943 = vld [vmem:[%s20] sm:$0xf]
          %v3944 = vld [vmem:[%s20 + $0x4] sm:$0xf]
          %v3945 = vld [vmem:[%s20 + $0x8] sm:$0xf]
          %v3946 = vld [vmem:[%s20 + $0xc] sm:$0xf]
          %v3947 = vld [vmem:[%s20 + $0x10] sm:$0xf]
          %v3948 = vld [vmem:[%s20 + $0x14] sm:$0xf]
          %v3949 = vld [vmem:[%s20 + $0x18] sm:$0xf]
          %v3950 = vld [vmem:[%s20 + $0x1c] sm:$0xf]
          %v3951 = vld [vmem:[%s20 + $0x20] sm:$0xf]
          %v3952 = vld [vmem:[%s20 + $0x24] sm:$0xf]
          %v3953 = vld [vmem:[%s20 + $0x28] sm:$0xf]
          %v3954 = vld [vmem:[%s20 + $0x2c] sm:$0xf]
          %v3955 = vld [vmem:[%s20 + $0x30] sm:$0xf]
          %v3956 = vld [vmem:[%s20 + $0x34] sm:$0xf]
          %v3957 = vld [vmem:[%s20 + $0x38] sm:$0xf]
          %v3958 = vld [vmem:[%s20 + $0x3c] sm:$0xf]
          %v3959 = vld [vmem:[%s21] sm:$0x1]
          %v3961 = vlaneseq
          %v3962 = vshrl.u32 %v3961, 7
          %v3963 = vsub.s32 0, %v3962
          %v3964 = vrot.slane %v3959, %v3963
          %v3982 = vunpack.c.l.b16 %v3943
          %v3983 = vunpack.c.l.b16 %v3944
          %v3984 = vunpack.c.l.b16 %v3945
          %v3985 = vunpack.c.l.b16 %v3946
          %v3986 = vunpack.c.l.b16 %v3947
          %v3987 = vunpack.c.l.b16 %v3948
          %v3988 = vunpack.c.l.b16 %v3949
          %v3989 = vunpack.c.l.b16 %v3950
          %v3990 = vunpack.c.l.b16 %v3951
          %v3991 = vunpack.c.l.b16 %v3952
          %v3992 = vunpack.c.l.b16 %v3953
          %v3993 = vunpack.c.l.b16 %v3954
          %v3994 = vunpack.c.l.b16 %v3955
          %v3995 = vunpack.c.l.b16 %v3956
          %v3996 = vunpack.c.l.b16 %v3957
          %v3997 = vunpack.c.l.b16 %v3958
          %v3998 = vpack.c.b16 %v3983, %v3982
          %v3999 = vpack.c.b16 %v3985, %v3984
          %v4000 = vpack.c.b16 %v3987, %v3986
          %v4001 = vpack.c.b16 %v3989, %v3988
          %v4002 = vpack.c.b16 %v3991, %v3990
          %v4003 = vpack.c.b16 %v3993, %v3992
          %v4004 = vpack.c.b16 %v3995, %v3994
          %v4005 = vpack.c.b16 %v3997, %v3996
          %4014 = vmatprep.subr.bf16.mxu0 0
          %4015 = vmatpush1.bf16.msra.mxu0 %v3998
          %4016 = vmatprep.subr.bf16.mxu0 0
          %4017 = vmatpush1.bf16.msra.mxu0 %v3999
          %4018 = vmatprep.subr.bf16.mxu0 0
          %4019 = vmatpush1.bf16.msra.mxu0 %v4000
          %4020 = vmatprep.subr.bf16.mxu0 0
          %4021 = vmatpush1.bf16.msra.mxu0 %v4001
          %4022 = vmatprep.subr.bf16.mxu0 0
          %4023 = vmatpush1.bf16.msra.mxu0 %v4002
          %4024 = vmatprep.subr.bf16.mxu0 0
          %4025 = vmatpush1.bf16.msra.mxu0 %v4003
          %4026 = vmatprep.subr.bf16.mxu0 0
          %4027 = vmatpush1.bf16.msra.mxu0 %v4004
          %4028 = vmatprep.subr.bf16.mxu0 0
          %4029 = vmatpush1.bf16.msra.mxu0 %v4005
          %4030 = vmatprep.subr.bf16.mxu0 0
          %4031 = vmatpush1.bf16.msra.mxu0 0
          %4032 = vmatprep.subr.bf16.mxu0 0
          %4033 = vmatpush1.bf16.msra.mxu0 0
          %4034 = vmatprep.subr.bf16.mxu0 0
          %4035 = vmatpush1.bf16.msra.mxu0 0
          %4036 = vmatprep.subr.bf16.mxu0 0
          %4037 = vmatpush1.bf16.msra.mxu0 0
          %4038 = vmatprep.subr.bf16.mxu0 0
          %4039 = vmatpush1.bf16.msra.mxu0 0
          %4040 = vmatprep.subr.bf16.mxu0 0
          %4041 = vmatpush1.bf16.msra.mxu0 0
          %4042 = vmatprep.subr.bf16.mxu0 0
          %4043 = vmatpush1.bf16.msra.mxu0 0
          %4044 = vmatprep.subr.bf16.mxu0 0
          %4045 = vmatpush1.bf16.msra.mxu0 0
          %4046 = vmatprep.mubr.bf16.mxu0 0
          %4047 = vmatmul.mubr.bf16.gmra.mrb[0].mxu0 %v3942
          %v4048 = vpop.f32.mrb[0].mxu0
          %v4049 = vadd.f32 %v3964, %v4048
          %v4050 = vpop.f32.mrb[0].mxu0
          %v4051 = vpop.f32.mrb[0].mxu0
          %v4052 = vpop.f32.mrb[0].mxu0
          %4053 = vdwg.mxu0
          %v4054 = vmax.f32 %v4049, 0.0
          %v4055 = vpack.c.bf16 %v4054, %v4054
          %v4056 = vld [vmem:[#allocation21] sm:$0xf]
          %v4057 = vld [vmem:[#allocation21 + $0x4] sm:$0xf]
          %v4058 = vld [vmem:[#allocation21 + $0x8] sm:$0xf]
          %v4059 = vld [vmem:[#allocation21 + $0xc] sm:$0xf]
          %v4060 = vld [vmem:[#allocation21 + $0x10] sm:$0xf]
          %v4061 = vld [vmem:[#allocation21 + $0x14] sm:$0xf]
          %v4062 = vld [vmem:[#allocation21 + $0x18] sm:$0xf]
          %v4063 = vld [vmem:[#allocation21 + $0x1c] sm:$0xf]
          %v4064 = vld [vmem:[#allocation21 + $0x20] sm:$0xf]
          %v4065 = vld [vmem:[#allocation21 + $0x24] sm:$0xf]
          %v4066 = vld [vmem:[#allocation21 + $0x28] sm:$0xf]
          %v4067 = vld [vmem:[#allocation21 + $0x2c] sm:$0xf]
          %v4068 = vld [vmem:[#allocation21 + $0x30] sm:$0xf]
          %v4069 = vld [vmem:[#allocation21 + $0x34] sm:$0xf]
          %v4070 = vld [vmem:[#allocation21 + $0x38] sm:$0xf]
          %v4071 = vld [vmem:[#allocation21 + $0x3c] sm:$0xf]
          %v4072 = vld [vmem:[#allocation16] sm:$0xf]
          %v4073 = vld [vmem:[#allocation16 + $0x4] sm:$0xf]
          %v4074 = vld [vmem:[#allocation16 + $0x8] sm:$0xf]
          %v4075 = vld [vmem:[#allocation16 + $0xc] sm:$0xf]
          %v4076 = vld [vmem:[#allocation16 + $0x10] sm:$0xf]
          %v4077 = vld [vmem:[#allocation16 + $0x14] sm:$0xf]
          %v4078 = vld [vmem:[#allocation16 + $0x18] sm:$0xf]
          %v4079 = vld [vmem:[#allocation16 + $0x1c] sm:$0xf]
          %v4080 = vld [vmem:[#allocation16 + $0x20] sm:$0xf]
          %v4081 = vld [vmem:[#allocation16 + $0x24] sm:$0xf]
          %v4082 = vld [vmem:[#allocation16 + $0x28] sm:$0xf]
          %v4083 = vld [vmem:[#allocation16 + $0x2c] sm:$0xf]
          %v4084 = vld [vmem:[#allocation16 + $0x30] sm:$0xf]
          %v4085 = vld [vmem:[#allocation16 + $0x34] sm:$0xf]
          %v4086 = vld [vmem:[#allocation16 + $0x38] sm:$0xf]
          %v4087 = vld [vmem:[#allocation16 + $0x3c] sm:$0xf]
          %v4088 = vld [vmem:[#allocation16 + $0x40] sm:$0xf]
          %v4089 = vld [vmem:[#allocation16 + $0x44] sm:$0xf]
          %v4090 = vld [vmem:[#allocation16 + $0x48] sm:$0xf]
          %v4091 = vld [vmem:[#allocation16 + $0x4c] sm:$0xf]
          %v4092 = vld [vmem:[#allocation16 + $0x50] sm:$0xf]
          %v4093 = vld [vmem:[#allocation16 + $0x54] sm:$0xf]
          %v4094 = vld [vmem:[#allocation16 + $0x58] sm:$0xf]
          %v4095 = vld [vmem:[#allocation16 + $0x5c] sm:$0xf]
          %v4096 = vld [vmem:[#allocation16 + $0x60] sm:$0xf]
          %v4097 = vld [vmem:[#allocation16 + $0x64] sm:$0xf]
          %v4098 = vld [vmem:[#allocation16 + $0x68] sm:$0xf]
          %v4099 = vld [vmem:[#allocation16 + $0x6c] sm:$0xf]
          %v4100 = vld [vmem:[#allocation16 + $0x70] sm:$0xf]
          %v4101 = vld [vmem:[#allocation16 + $0x74] sm:$0xf]
          %v4102 = vld [vmem:[#allocation16 + $0x78] sm:$0xf]
          %v4103 = vld [vmem:[#allocation16 + $0x7c] sm:$0xf]
          %v4104 = vld [vmem:[#allocation18] sm:$0x1]
          %v4106 = vlaneseq
          %v4107 = vshrl.u32 %v4106, 7
          %v4108 = vsub.s32 0, %v4107
          %v4109 = vrot.slane %v4104, %v4108
          %v4143 = vunpack.c.l.b16 %v4072
          %v4144 = vunpack.c.l.b16 %v4073
          %v4145 = vunpack.c.l.b16 %v4074
          %v4146 = vunpack.c.l.b16 %v4075
          %v4147 = vunpack.c.l.b16 %v4076
          %v4148 = vunpack.c.l.b16 %v4077
          %v4149 = vunpack.c.l.b16 %v4078
          %v4150 = vunpack.c.l.b16 %v4079
          %v4151 = vunpack.c.l.b16 %v4080
          %v4152 = vunpack.c.l.b16 %v4081
          %v4153 = vunpack.c.l.b16 %v4082
          %v4154 = vunpack.c.l.b16 %v4083
          %v4155 = vunpack.c.l.b16 %v4084
          %v4156 = vunpack.c.l.b16 %v4085
          %v4157 = vunpack.c.l.b16 %v4086
          %v4158 = vunpack.c.l.b16 %v4087
          %v4159 = vunpack.c.l.b16 %v4088
          %v4160 = vunpack.c.l.b16 %v4089
          %v4161 = vunpack.c.l.b16 %v4090
          %v4162 = vunpack.c.l.b16 %v4091
          %v4163 = vunpack.c.l.b16 %v4092
          %v4164 = vunpack.c.l.b16 %v4093
          %v4165 = vunpack.c.l.b16 %v4094
          %v4166 = vunpack.c.l.b16 %v4095
          %v4167 = vunpack.c.l.b16 %v4096
          %v4168 = vunpack.c.l.b16 %v4097
          %v4169 = vunpack.c.l.b16 %v4098
          %v4170 = vunpack.c.l.b16 %v4099
          %v4171 = vunpack.c.l.b16 %v4100
          %v4172 = vunpack.c.l.b16 %v4101
          %v4173 = vunpack.c.l.b16 %v4102
          %v4174 = vunpack.c.l.b16 %v4103
          %v4175 = vpack.c.b16 %v4144, %v4143
          %v4176 = vpack.c.b16 %v4146, %v4145
          %v4177 = vpack.c.b16 %v4148, %v4147
          %v4178 = vpack.c.b16 %v4150, %v4149
          %v4179 = vpack.c.b16 %v4152, %v4151
          %v4180 = vpack.c.b16 %v4154, %v4153
          %v4181 = vpack.c.b16 %v4156, %v4155
          %v4182 = vpack.c.b16 %v4158, %v4157
          %v4183 = vpack.c.b16 %v4160, %v4159
          %v4184 = vpack.c.b16 %v4162, %v4161
          %v4185 = vpack.c.b16 %v4164, %v4163
          %v4186 = vpack.c.b16 %v4166, %v4165
          %v4187 = vpack.c.b16 %v4168, %v4167
          %v4188 = vpack.c.b16 %v4170, %v4169
          %v4189 = vpack.c.b16 %v4172, %v4171
          %v4190 = vpack.c.b16 %v4174, %v4173
          %4207 = vmatprep.subr.bf16.mxu0 0
          %4208 = vmatpush1.bf16.msra.mxu0 %v4175
          %4209 = vmatprep.subr.bf16.mxu0 0
          %4210 = vmatpush1.bf16.msra.mxu0 %v4176
          %4211 = vmatprep.subr.bf16.mxu0 0
          %4212 = vmatpush1.bf16.msra.mxu0 %v4177
          %4213 = vmatprep.subr.bf16.mxu0 0
          %4214 = vmatpush1.bf16.msra.mxu0 %v4178
          %4215 = vmatprep.subr.bf16.mxu0 0
          %4216 = vmatpush1.bf16.msra.mxu0 %v4179
          %4217 = vmatprep.subr.bf16.mxu0 0
          %4218 = vmatpush1.bf16.msra.mxu0 %v4180
          %4219 = vmatprep.subr.bf16.mxu0 0
          %4220 = vmatpush1.bf16.msra.mxu0 %v4181
          %4221 = vmatprep.subr.bf16.mxu0 0
          %4222 = vmatpush1.bf16.msra.mxu0 %v4182
          %4223 = vmatprep.subr.bf16.mxu0 0
          %4224 = vmatpush1.bf16.msra.mxu0 %v4183
          %4225 = vmatprep.subr.bf16.mxu0 0
          %4226 = vmatpush1.bf16.msra.mxu0 %v4184
          %4227 = vmatprep.subr.bf16.mxu0 0
          %4228 = vmatpush1.bf16.msra.mxu0 %v4185
          %4229 = vmatprep.subr.bf16.mxu0 0
          %4230 = vmatpush1.bf16.msra.mxu0 %v4186
          %4231 = vmatprep.subr.bf16.mxu0 0
          %4232 = vmatpush1.bf16.msra.mxu0 %v4187
          %4233 = vmatprep.subr.bf16.mxu0 0
          %4234 = vmatpush1.bf16.msra.mxu0 %v4188
          %4235 = vmatprep.subr.bf16.mxu0 0
          %4236 = vmatpush1.bf16.msra.mxu0 %v4189
          %4237 = vmatprep.subr.bf16.mxu0 0
          %4238 = vmatpush1.bf16.msra.mxu0 %v4190
          %4239 = vmatprep.mubr.bf16.mxu0 %v3765
          %4240 = vmatmul.mubr.bf16.gmra.mrb[0].mxu0 %v3764
          %v4241 = vpop.f32.mrb[0].mxu0
          %v4242 = vadd.f32 %v4109, %v4241
          %v4243 = vpop.f32.mrb[0].mxu0
          %v4244 = vpop.f32.mrb[0].mxu0
          %v4245 = vpop.f32.mrb[0].mxu0
          %4246 = vdwg.mxu0
          %v4247 = vmax.f32 %v4242, 0.0
          %v4248 = vpack.c.bf16 %v4247, %v4247
          %v4249 = vld [vmem:[#allocation19] sm:$0xf]
          %v4250 = vld [vmem:[#allocation19 + $0x4] sm:$0xf]
          %v4251 = vld [vmem:[#allocation19 + $0x8] sm:$0xf]
          %v4252 = vld [vmem:[#allocation19 + $0xc] sm:$0xf]
          %v4253 = vld [vmem:[#allocation19 + $0x10] sm:$0xf]
          %v4254 = vld [vmem:[#allocation19 + $0x14] sm:$0xf]
          %v4255 = vld [vmem:[#allocation19 + $0x18] sm:$0xf]
          %v4256 = vld [vmem:[#allocation19 + $0x1c] sm:$0xf]
          %v4257 = vld [vmem:[#allocation19 + $0x20] sm:$0xf]
          %v4258 = vld [vmem:[#allocation19 + $0x24] sm:$0xf]
          %v4259 = vld [vmem:[#allocation19 + $0x28] sm:$0xf]
          %v4260 = vld [vmem:[#allocation19 + $0x2c] sm:$0xf]
          %v4261 = vld [vmem:[#allocation19 + $0x30] sm:$0xf]
          %v4262 = vld [vmem:[#allocation19 + $0x34] sm:$0xf]
          %v4263 = vld [vmem:[#allocation19 + $0x38] sm:$0xf]
          %v4264 = vld [vmem:[#allocation19 + $0x3c] sm:$0xf]
          %v4265 = vld [vmem:[%s23] sm:$0x1]
          %v4267 = vlaneseq
          %v4268 = vshrl.u32 %v4267, 7
          %v4269 = vsub.s32 0, %v4268
          %v4270 = vrot.slane %v4265, %v4269
          %v4288 = vunpack.c.l.b16 %v4249
          %v4289 = vunpack.c.l.b16 %v4250
          %v4290 = vunpack.c.l.b16 %v4251
          %v4291 = vunpack.c.l.b16 %v4252
          %v4292 = vunpack.c.l.b16 %v4253
          %v4293 = vunpack.c.l.b16 %v4254
          %v4294 = vunpack.c.l.b16 %v4255
          %v4295 = vunpack.c.l.b16 %v4256
          %v4296 = vunpack.c.l.b16 %v4257
          %v4297 = vunpack.c.l.b16 %v4258
          %v4298 = vunpack.c.l.b16 %v4259
          %v4299 = vunpack.c.l.b16 %v4260
          %v4300 = vunpack.c.l.b16 %v4261
          %v4301 = vunpack.c.l.b16 %v4262
          %v4302 = vunpack.c.l.b16 %v4263
          %v4303 = vunpack.c.l.b16 %v4264
          %v4304 = vpack.c.b16 %v4289, %v4288
          %v4305 = vpack.c.b16 %v4291, %v4290
          %v4306 = vpack.c.b16 %v4293, %v4292
          %v4307 = vpack.c.b16 %v4295, %v4294
          %v4308 = vpack.c.b16 %v4297, %v4296
          %v4309 = vpack.c.b16 %v4299, %v4298
          %v4310 = vpack.c.b16 %v4301, %v4300
          %v4311 = vpack.c.b16 %v4303, %v4302
          %4320 = vmatprep.subr.bf16.mxu0 0
          %4321 = vmatpush1.bf16.msra.mxu0 %v4304
          %4322 = vmatprep.subr.bf16.mxu0 0
          %4323 = vmatpush1.bf16.msra.mxu0 %v4305
          %4324 = vmatprep.subr.bf16.mxu0 0
          %4325 = vmatpush1.bf16.msra.mxu0 %v4306
          %4326 = vmatprep.subr.bf16.mxu0 0
          %4327 = vmatpush1.bf16.msra.mxu0 %v4307
          %4328 = vmatprep.subr.bf16.mxu0 0
          %4329 = vmatpush1.bf16.msra.mxu0 %v4308
          %4330 = vmatprep.subr.bf16.mxu0 0
          %4331 = vmatpush1.bf16.msra.mxu0 %v4309
          %4332 = vmatprep.subr.bf16.mxu0 0
          %4333 = vmatpush1.bf16.msra.mxu0 %v4310
          %4334 = vmatprep.subr.bf16.mxu0 0
          %4335 = vmatpush1.bf16.msra.mxu0 %v4311
          %4336 = vmatprep.subr.bf16.mxu0 0
          %4337 = vmatpush1.bf16.msra.mxu0 0
          %4338 = vmatprep.subr.bf16.mxu0 0
          %4339 = vmatpush1.bf16.msra.mxu0 0
          %4340 = vmatprep.subr.bf16.mxu0 0
          %4341 = vmatpush1.bf16.msra.mxu0 0
          %4342 = vmatprep.subr.bf16.mxu0 0
          %4343 = vmatpush1.bf16.msra.mxu0 0
          %4344 = vmatprep.subr.bf16.mxu0 0
          %4345 = vmatpush1.bf16.msra.mxu0 0
          %4346 = vmatprep.subr.bf16.mxu0 0
          %4347 = vmatpush1.bf16.msra.mxu0 0
          %4348 = vmatprep.subr.bf16.mxu0 0
          %4349 = vmatpush1.bf16.msra.mxu0 0
          %4350 = vmatprep.subr.bf16.mxu0 0
          %4351 = vmatpush1.bf16.msra.mxu0 0
          %4352 = vmatprep.mubr.bf16.mxu0 0
          %4353 = vmatmul.mubr.bf16.gmra.mrb[0].mxu0 %v4248
          %v4354 = vpop.f32.mrb[0].mxu0
          %v4355 = vadd.f32 %v4270, %v4354
          %v4356 = vpop.f32.mrb[0].mxu0
          %v4357 = vpop.f32.mrb[0].mxu0
          %v4358 = vpop.f32.mrb[0].mxu0
          %4359 = vdwg.mxu0
          %v4360 = vmax.f32 %v4355, 0.0
          %v4361 = vpack.c.bf16 %v4360, %v4360
          %v4362 = vld [vmem:[#allocation22] sm:$0xf]
          %v4363 = vld [vmem:[#allocation22 + $0x4] sm:$0xf]
          %v4364 = vld [vmem:[#allocation22 + $0x8] sm:$0xf]
          %v4365 = vld [vmem:[#allocation22 + $0xc] sm:$0xf]
          %v4366 = vld [vmem:[#allocation22 + $0x10] sm:$0xf]
          %v4367 = vld [vmem:[#allocation22 + $0x14] sm:$0xf]
          %v4368 = vld [vmem:[#allocation22 + $0x18] sm:$0xf]
          %v4369 = vld [vmem:[#allocation22 + $0x1c] sm:$0xf]
          %v4370 = vld [vmem:[#allocation22 + $0x20] sm:$0xf]
          %v4371 = vld [vmem:[#allocation22 + $0x24] sm:$0xf]
          %v4372 = vld [vmem:[#allocation22 + $0x28] sm:$0xf]
          %v4373 = vld [vmem:[#allocation22 + $0x2c] sm:$0xf]
          %v4374 = vld [vmem:[#allocation22 + $0x30] sm:$0xf]
          %v4375 = vld [vmem:[#allocation22 + $0x34] sm:$0xf]
          %v4376 = vld [vmem:[#allocation22 + $0x38] sm:$0xf]
          %v4377 = vld [vmem:[#allocation22 + $0x3c] sm:$0xf]
          %v4394 = vunpack.c.l.b16 %v4362
          %v4395 = vunpack.c.l.b16 %v4363
          %v4396 = vunpack.c.l.b16 %v4364
          %v4397 = vunpack.c.l.b16 %v4365
          %v4398 = vunpack.c.l.b16 %v4366
          %v4399 = vunpack.c.l.b16 %v4367
          %v4400 = vunpack.c.l.b16 %v4368
          %v4401 = vunpack.c.l.b16 %v4369
          %v4402 = vunpack.c.l.b16 %v4370
          %v4403 = vunpack.c.l.b16 %v4371
          %v4404 = vunpack.c.l.b16 %v4372
          %v4405 = vunpack.c.l.b16 %v4373
          %v4406 = vunpack.c.l.b16 %v4374
          %v4407 = vunpack.c.l.b16 %v4375
          %v4408 = vunpack.c.l.b16 %v4376
          %v4409 = vunpack.c.l.b16 %v4377
          %v4410 = vpack.c.b16 %v4395, %v4394
          %v4411 = vpack.c.b16 %v4397, %v4396
          %v4412 = vpack.c.b16 %v4399, %v4398
          %v4413 = vpack.c.b16 %v4401, %v4400
          %v4414 = vpack.c.b16 %v4403, %v4402
          %v4415 = vpack.c.b16 %v4405, %v4404
          %v4416 = vpack.c.b16 %v4407, %v4406
          %v4417 = vpack.c.b16 %v4409, %v4408
          %4426 = vmatprep.subr.bf16.mxu0 0
          %4427 = vmatpush1.bf16.msra.mxu0 %v4410
          %4428 = vmatprep.subr.bf16.mxu0 0
          %4429 = vmatpush1.bf16.msra.mxu0 %v4411
          %4430 = vmatprep.subr.bf16.mxu0 0
          %4431 = vmatpush1.bf16.msra.mxu0 %v4412
          %4432 = vmatprep.subr.bf16.mxu0 0
          %4433 = vmatpush1.bf16.msra.mxu0 %v4413
          %4434 = vmatprep.subr.bf16.mxu0 0
          %4435 = vmatpush1.bf16.msra.mxu0 %v4414
          %4436 = vmatprep.subr.bf16.mxu0 0
          %4437 = vmatpush1.bf16.msra.mxu0 %v4415
          %4438 = vmatprep.subr.bf16.mxu0 0
          %4439 = vmatpush1.bf16.msra.mxu0 %v4416
          %4440 = vmatprep.subr.bf16.mxu0 0
          %4441 = vmatpush1.bf16.msra.mxu0 %v4417
          %4442 = vmatprep.subr.bf16.mxu0 0
          %4443 = vmatpush1.bf16.msra.mxu0 0
          %4444 = vmatprep.subr.bf16.mxu0 0
          %4445 = vmatpush1.bf16.msra.mxu0 0
          %4446 = vmatprep.subr.bf16.mxu0 0
          %4447 = vmatpush1.bf16.msra.mxu0 0
          %4448 = vmatprep.subr.bf16.mxu0 0
          %4449 = vmatpush1.bf16.msra.mxu0 0
          %4450 = vmatprep.subr.bf16.mxu0 0
          %4451 = vmatpush1.bf16.msra.mxu0 0
          %4452 = vmatprep.subr.bf16.mxu0 0
          %4453 = vmatpush1.bf16.msra.mxu0 0
          %4454 = vmatprep.subr.bf16.mxu0 0
          %4455 = vmatpush1.bf16.msra.mxu0 0
          %4456 = vmatprep.subr.bf16.mxu0 0
          %4457 = vmatpush1.bf16.msra.mxu0 0
          %4458 = vmatprep.mubr.bf16.mxu0 0
          %4459 = vmatmul.mubr.bf16.gmra.mrb[0].mxu0 %v4361
          %v4460 = vpop.f32.mrb[0].mxu0
          %v4461 = vadd.f32 0.0, %v4460
          %v4462 = vpop.f32.mrb[0].mxu0
          %v4463 = vpop.f32.mrb[0].mxu0
          %v4464 = vpop.f32.mrb[0].mxu0
          %4465 = vdwg.mxu0
          %v4482 = vunpack.c.l.b16 %v4056
          %v4483 = vunpack.c.l.b16 %v4057
          %v4484 = vunpack.c.l.b16 %v4058
          %v4485 = vunpack.c.l.b16 %v4059
          %v4486 = vunpack.c.l.b16 %v4060
          %v4487 = vunpack.c.l.b16 %v4061
          %v4488 = vunpack.c.l.b16 %v4062
          %v4489 = vunpack.c.l.b16 %v4063
          %v4490 = vunpack.c.l.b16 %v4064
          %v4491 = vunpack.c.l.b16 %v4065
          %v4492 = vunpack.c.l.b16 %v4066
          %v4493 = vunpack.c.l.b16 %v4067
          %v4494 = vunpack.c.l.b16 %v4068
          %v4495 = vunpack.c.l.b16 %v4069
          %v4496 = vunpack.c.l.b16 %v4070
          %v4497 = vunpack.c.l.b16 %v4071
          %v4498 = vpack.c.b16 %v4483, %v4482
          %v4499 = vpack.c.b16 %v4485, %v4484
          %v4500 = vpack.c.b16 %v4487, %v4486
          %v4501 = vpack.c.b16 %v4489, %v4488
          %v4502 = vpack.c.b16 %v4491, %v4490
          %v4503 = vpack.c.b16 %v4493, %v4492
          %v4504 = vpack.c.b16 %v4495, %v4494
          %v4505 = vpack.c.b16 %v4497, %v4496
          %4514 = vmatprep.subr.bf16.mxu0 0
          %4515 = vmatpush1.bf16.msra.mxu0 %v4498
          %4516 = vmatprep.subr.bf16.mxu0 0
          %4517 = vmatpush1.bf16.msra.mxu0 %v4499
          %4518 = vmatprep.subr.bf16.mxu0 0
          %4519 = vmatpush1.bf16.msra.mxu0 %v4500
          %4520 = vmatprep.subr.bf16.mxu0 0
          %4521 = vmatpush1.bf16.msra.mxu0 %v4501
          %4522 = vmatprep.subr.bf16.mxu0 0
          %4523 = vmatpush1.bf16.msra.mxu0 %v4502
          %4524 = vmatprep.subr.bf16.mxu0 0
          %4525 = vmatpush1.bf16.msra.mxu0 %v4503
          %4526 = vmatprep.subr.bf16.mxu0 0
          %4527 = vmatpush1.bf16.msra.mxu0 %v4504
          %4528 = vmatprep.subr.bf16.mxu0 0
          %4529 = vmatpush1.bf16.msra.mxu0 %v4505
          %4530 = vmatprep.subr.bf16.mxu0 0
          %4531 = vmatpush1.bf16.msra.mxu0 0
          %4532 = vmatprep.subr.bf16.mxu0 0
          %4533 = vmatpush1.bf16.msra.mxu0 0
          %4534 = vmatprep.subr.bf16.mxu0 0
          %4535 = vmatpush1.bf16.msra.mxu0 0
          %4536 = vmatprep.subr.bf16.mxu0 0
          %4537 = vmatpush1.bf16.msra.mxu0 0
          %4538 = vmatprep.subr.bf16.mxu0 0
          %4539 = vmatpush1.bf16.msra.mxu0 0
          %4540 = vmatprep.subr.bf16.mxu0 0
          %4541 = vmatpush1.bf16.msra.mxu0 0
          %4542 = vmatprep.subr.bf16.mxu0 0
          %4543 = vmatpush1.bf16.msra.mxu0 0
          %4544 = vmatprep.subr.bf16.mxu0 0
          %4545 = vmatpush1.bf16.msra.mxu0 0
          %4546 = vmatprep.mubr.bf16.mxu0 0
          %4547 = vmatmul.mubr.bf16.gmra.mrb[0].mxu0 %v4055
          %v4548 = vpop.f32.mrb[0].mxu0
          %v4549 = vadd.f32 %v4461, %v4548
          %v4550 = vpop.f32.mrb[0].mxu0
          %v4551 = vpop.f32.mrb[0].mxu0
          %v4552 = vpop.f32.mrb[0].mxu0
          %4553 = vdwg.mxu0
          %v4554 = vld [vmem:[%s26] sm:$0x1]
          %v4556 = vlaneseq
          %v4557 = vshrl.u32 %v4556, 7
          %v4558 = vsub.s32 0, %v4557
          %v4559 = vrot.slane %v4554, %v4558
          %v4561 = vadd.f32 %v4549, %v4559
          %4562 = vst [vmem:[%s1037] sm:$0xff] %v4561
        $region192: #{classifier_forward.1} parent=127 // pred_fallthru
          _
        %p4563 = scmp.lt.s32.totalorder %s51, 0
        %s4564 = scalar_select %p4563, %s51, 0
        %p4565 = scmp.lt.s32.totalorder %s50, 1
        %s4566 = scalar_select %p4565, %s50, 1
        %s4567 = smul.addr %s4564, 2
        %s4568 = sadd.s32 %s4566, %s4567
        %s4569 = smul.addr %s4568, 8
        %s4570 = scalar_lea.vmem %s27, %s4569
        // Predicated region
        $region193: #{classifier_forward.1} parent=127 // pred_check
          %p4571 = pneg %p650
        $region194: #{classifier_forward.1} parent=127 // pred_check_branch
          %4573 = sbr.rel (%p4571) target = $region196
        $region195: #{classifier_forward.1} parent=127 // pred_region
          _
        $region196: #{classifier_forward.1} parent=127 // pred_fallthru
          _
      $region128: #{classifier_forward.1} parent=5 // pred_fallthru
        _
      %p4574 = scmp.le.s32.totalorder 2, %s41
      // Predicated region
      $region197: #{classifier_forward.1} parent=5 // pred_check
        %p4575 = pneg %p4574
      $region198: #{classifier_forward.1} parent=5 // pred_check_branch
        %4577 = sbr.rel (%p4575) target = $region200
      $region199: #{classifier_forward.1} parent=5 // pred_region
        %s4578 = ssub.s32 %s41, 2
        // Predicated region
        $region201: #{classifier_forward.1} parent=199 // pred_check
          %p4579 = pneg %p656
        $region202: #{classifier_forward.1} parent=199 // pred_check_branch
          %4581 = sbr.rel (%p4579) target = $region204
        $region203: #{classifier_forward.1} parent=199 // pred_region
          %p4582 = scmp.lt.s32.totalorder %s53, 0
          %s4583 = scalar_select %p4582, %s53, 0
          %p4584 = scmp.lt.s32.totalorder %s52, 1
          %s4585 = scalar_select %p4584, %s52, 1
          %s4586 = smul.addr %s4583, 2
          %s4587 = sadd.s32 %s4585, %s4586
          %s4588 = smul.addr %s4587, 8
          %s4589 = scalar_lea.vmem %s27, %s4588
        $region204: #{classifier_forward.1} parent=199 // pred_fallthru
          _
      $region200: #{classifier_forward.1} parent=5 // pred_fallthru
        _
    $region6: #{classifier_forward.1} parent=1 // loop_footer
      %s45 = sadd.s32 1, %s41
    $region7: #{classifier_forward.1} parent=1 // loop_footer_branch
      %40 = sbr.rel target = $region3
    $region8: #{classifier_forward.1} parent=1 // loop_exit
      _
    %4590 = vsyncpa [#allocation3], 1
    %s4591 = scalar_lea.sflag [#allocation3], 1
    %4592 = vsyncpa %s4591, 1
    %4593 = vsyncpa [#allocation5], 1
    %4594 = vsyncpa [#allocation8], 1
    %4595 = vsyncpa [#allocation11], 1
    %4596 = vsyncpa [#allocation14], 1
    %4597 = vsyncpa [#allocation17], 1
    %4598 = vsyncpa [#allocation20], 1
    %4599 = vsyncpa [#allocation23], 1

</llo_original>
